<compile_context>
chip_gen: v7x
topology: tpu7x:2x2x1
jax: 0.10.0
libtpu: 0.0.40
codegen_flags: <defaults>
</compile_context>

<pallas_src>
import functools
import math

import numpy as np
import jax
import jax.numpy as jnp
from jax.experimental import pallas as pl
from jax.experimental.pallas import tpu as pltpu


# ------------------------------ fused kernel --------------------------------

def _make_multibert_kernel(*, nlayers, L, H, Eh, n_head, eps, scale, use_pe):
    """Whole-model kernel for one batch row; static (nlayers, L, H, Eh)."""
    D = 2 * Eh          # fused feature width (visual | audio)
    Dh = Eh // H        # per-head dim

    def kernel(*refs):
        (x_ref, pe_ref,
         qkv_w, qkv_b, out_w, out_b,
         ff1_w, ff1_b, ff2_w, ff2_b,
         ln1_g, ln1_b, ln2_g, ln2_b) = refs[:14]
        head_refs = refs[14:14 + 2 * n_head]
        o_ref = refs[14 + 2 * n_head]

        x = x_ref[0]                               # (L, D) — this batch row
        if use_pe:
            x = x + pe_ref[0:L, :]                 # PE pre-duplicated to both halves

        # Lane mask selecting the visual half (first Eh of the fused D lanes).
        lane = jax.lax.broadcasted_iota(jnp.int32, (L, D), 1)
        vmask = lane < Eh
        inv_eh = 1.0 / float(Eh)

        def layer_norm(z, g, b):
            # Per-branch LayerNorm over each Eh-lane half via masked
            # full-width reductions (no lane slicing / concatenation).
            sv = jnp.sum(jnp.where(vmask, z, 0.0), axis=-1, keepdims=True)
            sa = jnp.sum(jnp.where(vmask, 0.0, z), axis=-1, keepdims=True)
            mu = jnp.where(vmask, sv, sa) * inv_eh
            c = z - mu
            c2 = c * c
            qv = jnp.sum(jnp.where(vmask, c2, 0.0), axis=-1, keepdims=True)
            qa = jnp.sum(jnp.where(vmask, 0.0, c2), axis=-1, keepdims=True)
            var = jnp.where(vmask, qv, qa) * inv_eh
            return c * jax.lax.rsqrt(var + eps) * g + b

        # TODO(synk): TransformerEncoder class body not provided; assumed a
        # stack of standard post-LN nn.TransformerEncoderLayer blocks
        # (self-attention + ReLU FFN), dropout = identity, no final norm.
        for i in range(nlayers):
            # Fused (both branches, q/k/v) projection: (L, D) @ (D, 6*Eh).
            qkv = (jnp.dot(x, qkv_w[i], preferred_element_type=jnp.float32)
                   + qkv_b[i])
            ow = out_w[i]                          # (D, D) block-diagonal
            acc = None
            for br in range(2):                    # 0 = visual, 1 = audio
                cb = br * 3 * Eh                   # column base in qkv value
                rb = br * Eh                       # row base in fused out_w
                for h in range(H):
                    c0 = h * Dh
                    q = qkv[:, cb + c0:cb + c0 + Dh]
                    k = qkv[:, cb + Eh + c0:cb + Eh + c0 + Dh]
                    v = qkv[:, cb + 2 * Eh + c0:cb + 2 * Eh + c0 + Dh]
                    # q @ k^T without materializing the transpose.
                    s = jax.lax.dot_general(
                        q, k, (((1,), (1,)), ((), ())),
                        preferred_element_type=jnp.float32) * scale
                    m = jnp.max(s, axis=-1, keepdims=True)
                    p = jnp.exp(s - m)
                    p = p / jnp.sum(p, axis=-1, keepdims=True)   # exact softmax
                    oh = jnp.dot(p, v, preferred_element_type=jnp.float32)
                    # Fold the output projection into the head loop: no
                    # attention scratch, no masked sub-tile stores.
                    contrib = jnp.dot(oh, ow[rb + c0:rb + c0 + Dh, :],
                                      preferred_element_type=jnp.float32)
                    acc = contrib if acc is None else acc + contrib
            x = layer_norm(x + acc + out_b[i], ln1_g[i], ln1_b[i])
            # FFN (ReLU) + residual + LN2 (block-diagonal, both branches).
            hmid = jnp.maximum(
                jnp.dot(x, ff1_w[i], preferred_element_type=jnp.float32)
                + ff1_b[i], 0.0)
            hout = (jnp.dot(hmid, ff2_w[i], preferred_element_type=jnp.float32)
                    + ff2_b[i])
            x = layer_norm(x + hout, ln2_g[i], ln2_b[i])

        # Regressor head: the fused activation IS concat([visual, audio]).
        # TODO(synk): Regressor class body not provided; assumed
        # inc -> dims_list (ReLU, dropout=identity) -> out_dim, has_tanh=False.
        h = (jnp.dot(x, head_refs[0][...], preferred_element_type=jnp.float32)
             + head_refs[1][...])
        for j in range(1, n_head):
            h = jnp.maximum(h, 0.0)
            h = (jnp.dot(h, head_refs[2 * j][...],
                         preferred_element_type=jnp.float32)
                 + head_refs[2 * j + 1][...])
        o_ref[0] = h.astype(o_ref.dtype)

    return kernel


# ------------------------------ model wrapper --------------------------------

def multibert_forward(x, packed, *, nheads, nlayers, use_pe):
    """x: (L, B, D), sequence-first like the PyTorch module (batch_first=False)."""
    L, B, D = x.shape
    Eh = D // 2
    n_head = len(packed["head_w"])
    out_dim = packed["head_w"][-1].shape[-1]

    # Single tiny transpose so each grid step owns one contiguous batch row.
    xb = jnp.transpose(x, (1, 0, 2))               # (B, L, D)

    kernel = _make_multibert_kernel(
        nlayers=nlayers, L=L, H=nheads, Eh=Eh, n_head=n_head,
        eps=1e-5, scale=1.0 / math.sqrt(Eh // nheads), use_pe=use_pe)

    weight_keys = ("qkv_w", "qkv_b", "out_w", "out_b",
                   "ff1_w", "ff1_b", "ff2_w", "ff2_b",
                   "ln1_g", "ln1_b", "ln2_g", "ln2_b")
    weight_args = [packed[k] for k in weight_keys]
    head_args = []
    for w, b in zip(packed["head_w"], packed["head_b"]):
        head_args += [w, b]

    def full_spec(a):
        # Whole array resident in VMEM, constant block index => fetched once.
        return pl.BlockSpec(a.shape, lambda b, n=a.ndim: (0,) * n)

    in_specs = ([pl.BlockSpec((1, L, D), lambda b: (b, 0, 0)),
                 full_spec(packed["pe2"])]
                + [full_spec(a) for a in weight_args]
                + [full_spec(a) for a in head_args])

    out = pl.pallas_call(
        kernel,
        grid=(B,),
        out_shape=jax.ShapeDtypeStruct((B, L, out_dim), jnp.float32),
        in_specs=in_specs,
        out_specs=pl.BlockSpec((1, L, out_dim), lambda b: (b, 0, 0)),
        compiler_params=pltpu.CompilerParams(
            dimension_semantics=("parallel",)),    # both TCs on v7x megacore
    )(xb, packed["pe2"], *weight_args, *head_args)

    return jnp.transpose(out, (1, 0, 2))           # (L, B, out_dim)


# ------------------------------- parameters ----------------------------------

def get_sinusoid_encoding_table(n_position, d_hid):
    pos = np.arange(n_position, dtype=np.float64)[:, None]
    i = np.arange(d_hid, dtype=np.float64)[None, :]
    angle = pos / np.power(10000.0, 2.0 * (i // 2) / d_hid)
    table = np.zeros((n_position, d_hid), dtype=np.float32)
    table[:, 0::2] = np.sin(angle[:, 0::2])
    table[:, 1::2] = np.cos(angle[:, 1::2])
    return jnp.asarray(table)


def init_encoder_layer(key, d_model, ff_dim, scale=0.02):
    """PyTorch-layout (out_features, in_features) weights, mirroring nn modules."""
    ks = jax.random.split(key, 4)
    return {
        "in_w": jax.random.normal(ks[0], (3 * d_model, d_model), jnp.float32) * scale,
        "in_b": jnp.zeros((3 * d_model,), jnp.float32),
        "out_w": jax.random.normal(ks[1], (d_model, d_model), jnp.float32) * scale,
        "out_b": jnp.zeros((d_model,), jnp.float32),
        "ff1_w": jax.random.normal(ks[2], (ff_dim, d_model), jnp.float32) * scale,
        "ff1_b": jnp.zeros((ff_dim,), jnp.float32),
        "ff2_w": jax.random.normal(ks[3], (d_model, ff_dim), jnp.float32) * scale,
        "ff2_b": jnp.zeros((d_model,), jnp.float32),
        "ln1_g": jnp.ones((d_model,), jnp.float32),
        "ln1_b": jnp.zeros((d_model,), jnp.float32),
        "ln2_g": jnp.ones((d_model,), jnp.float32),
        "ln2_b": jnp.zeros((d_model,), jnp.float32),
    }


def init_head(key, inc_dim, dims_list, out_dim, scale=0.02):
    dims = [inc_dim] + list(dims_list) + [out_dim]
    ks = jax.random.split(key, len(dims) - 1)
    return [(jax.random.normal(ks[i], (dims[i + 1], dims[i]), jnp.float32) * scale,
             jnp.zeros((dims[i + 1],), jnp.float32))
            for i in range(len(dims) - 1)]


def init_multibert_params(key, input_dim, feedforward_dim, nlayers, seq_len,
                          head_dims, out_dim):
    half = input_dim // 2
    kv, ka, kh = jax.random.split(key, 3)
    visual = [init_encoder_layer(k, half, feedforward_dim)
              for k in jax.random.split(kv, nlayers)]
    audio = [init_encoder_layer(k, half, feedforward_dim)
             for k in jax.random.split(ka, nlayers)]
    head = init_head(kh, input_dim, head_dims, out_dim)
    return {"pe": get_sinusoid_encoding_table(seq_len, half),
            "visual": visual, "audio": audio, "head": head}


def _block_diag(a, b):
    r1, c1 = a.shape
    r2, c2 = b.shape
    out = jnp.zeros((r1 + r2, c1 + c2), a.dtype)
    out = out.at[:r1, :c1].set(a)
    out = out.at[r1:, c1:].set(b)
    return out


def pack_params(raw):
    """One-time (outside jit) packing:
      * torch (out,in) weights -> matmul (in,out) layout,
      * visual/audio per-layer weights fused BLOCK-DIAGONALLY so both
        encoder branches run as a single (L, 2*Eh) stream,
      * biases / LN params lane-concatenated [visual | audio],
      * sinusoid PE pre-duplicated onto both halves."""
    vis, aud = raw["visual"], raw["audio"]

    def stack_bd(name):
        return jnp.stack([_block_diag(v[name].T, a[name].T)
                          for v, a in zip(vis, aud)])

    def stack_cat(name):
        return jnp.stack([jnp.concatenate([v[name], a[name]]).reshape(1, -1)
                          for v, a in zip(vis, aud)])

    return {
        "pe2": jnp.concatenate([raw["pe"], raw["pe"]], axis=-1),
        "qkv_w": stack_bd("in_w"), "qkv_b": stack_cat("in_b"),
        "out_w": stack_bd("out_w"), "out_b": stack_cat("out_b"),
        "ff1_w": stack_bd("ff1_w"), "ff1_b": stack_cat("ff1_b"),
        "ff2_w": stack_bd("ff2_w"), "ff2_b": stack_cat("ff2_b"),
        "ln1_g": stack_cat("ln1_g"), "ln1_b": stack_cat("ln1_b"),
        "ln2_g": stack_cat("ln2_g"), "ln2_b": stack_cat("ln2_b"),
        "head_w": [w.T for (w, _) in raw["head"]],
        "head_b": [b.reshape(1, -1) for (_, b) in raw["head"]],
    }


# ---------------------------------- main -------------------------------------

if __name__ == "__main__":
    # Small config consistent with the module's constructor arguments.
    input_dim = 32        # -> 16 dims per (visual, audio) branch
    feedforward_dim = 64
    nheads = 2            # head_dim = 8 per branch
    nlayers = 2           # encoder layers per TransformerEncoder branch
    use_pe = True
    seq_len = 8
    head_dims = [16]
    out_dim = 1
    batch = 2

    key = jax.random.PRNGKey(0)
    kx, kp = jax.random.split(key)
    x = jax.random.normal(kx, (seq_len, batch, input_dim), jnp.float32)

    raw = init_multibert_params(kp, input_dim, feedforward_dim, nlayers,
                                seq_len, head_dims, out_dim)
    packed = pack_params(raw)   # one-time weight transpose / block-diag fusion

    fwd = jax.jit(functools.partial(multibert_forward, nheads=nheads,
                                    nlayers=nlayers, use_pe=use_pe))
    out = fwd(x, packed)
    out = jax.block_until_ready(out)

    assert out.shape == (seq_len, batch, out_dim), out.shape
    assert bool(jnp.all(jnp.isfinite(out)))
    print("KERNEL_OK")
</pallas_src>

<mosaic_0001>
module attributes {stable_mosaic.version = 11 : i64} {
  func.func @kernel(%arg0: i32, %arg1: memref<1x8x32xf32, #tpu.memory_space<vmem>>, %arg2: memref<8x32xf32, #tpu.memory_space<vmem>>, %arg3: memref<2x32x96xf32, #tpu.memory_space<vmem>>, %arg4: memref<2x1x96xf32, #tpu.memory_space<vmem>>, %arg5: memref<2x32x32xf32, #tpu.memory_space<vmem>>, %arg6: memref<2x1x32xf32, #tpu.memory_space<vmem>>, %arg7: memref<2x32x128xf32, #tpu.memory_space<vmem>>, %arg8: memref<2x1x128xf32, #tpu.memory_space<vmem>>, %arg9: memref<2x128x32xf32, #tpu.memory_space<vmem>>, %arg10: memref<2x1x32xf32, #tpu.memory_space<vmem>>, %arg11: memref<2x1x32xf32, #tpu.memory_space<vmem>>, %arg12: memref<2x1x32xf32, #tpu.memory_space<vmem>>, %arg13: memref<2x1x32xf32, #tpu.memory_space<vmem>>, %arg14: memref<2x1x32xf32, #tpu.memory_space<vmem>>, %arg15: memref<32x16xf32, #tpu.memory_space<vmem>>, %arg16: memref<1x16xf32, #tpu.memory_space<vmem>>, %arg17: memref<16x1xf32, #tpu.memory_space<vmem>>, %arg18: memref<1x1xf32, #tpu.memory_space<vmem>>, %arg19: memref<1x8x1xf32, #tpu.memory_space<vmem>>) attributes {dimension_semantics = [#tpu.dimension_semantics<parallel>], iteration_bounds = array<i64: 2>, scalar_prefetch = 0 : i64, scratch_operands = 0 : i64, tpu.core_type = #tpu.core_type<tc>, window_params = [{transform_indices = @transform_0, window_bounds = array<i64: 1, 8, 32>}, {pipeline_mode = #tpu.pipeline_mode<synchronous>, transform_indices = @transform_1, window_bounds = array<i64: 8, 32>}, {pipeline_mode = #tpu.pipeline_mode<synchronous>, transform_indices = @transform_2, window_bounds = array<i64: 2, 32, 96>}, {pipeline_mode = #tpu.pipeline_mode<synchronous>, transform_indices = @transform_3, window_bounds = array<i64: 2, 1, 96>}, {pipeline_mode = #tpu.pipeline_mode<synchronous>, transform_indices = @transform_4, window_bounds = array<i64: 2, 32, 32>}, {pipeline_mode = #tpu.pipeline_mode<synchronous>, transform_indices = @transform_5, window_bounds = array<i64: 2, 1, 32>}, {pipeline_mode = #tpu.pipeline_mode<synchronous>, transform_indices = @transform_6, window_bounds = array<i64: 2, 32, 128>}, {pipeline_mode = #tpu.pipeline_mode<synchronous>, transform_indices = @transform_7, window_bounds = array<i64: 2, 1, 128>}, {pipeline_mode = #tpu.pipeline_mode<synchronous>, transform_indices = @transform_8, window_bounds = array<i64: 2, 128, 32>}, {pipeline_mode = #tpu.pipeline_mode<synchronous>, transform_indices = @transform_9, window_bounds = array<i64: 2, 1, 32>}, {pipeline_mode = #tpu.pipeline_mode<synchronous>, transform_indices = @transform_10, window_bounds = array<i64: 2, 1, 32>}, {pipeline_mode = #tpu.pipeline_mode<synchronous>, transform_indices = @transform_11, window_bounds = array<i64: 2, 1, 32>}, {pipeline_mode = #tpu.pipeline_mode<synchronous>, transform_indices = @transform_12, window_bounds = array<i64: 2, 1, 32>}, {pipeline_mode = #tpu.pipeline_mode<synchronous>, transform_indices = @transform_13, window_bounds = array<i64: 2, 1, 32>}, {pipeline_mode = #tpu.pipeline_mode<synchronous>, transform_indices = @transform_14, window_bounds = array<i64: 32, 16>}, {pipeline_mode = #tpu.pipeline_mode<synchronous>, transform_indices = @transform_15, window_bounds = array<i64: 1, 16>}, {pipeline_mode = #tpu.pipeline_mode<synchronous>, transform_indices = @transform_16, window_bounds = array<i64: 16, 1>}, {pipeline_mode = #tpu.pipeline_mode<synchronous>, transform_indices = @transform_17, window_bounds = array<i64: 1, 1>}, {transform_indices = @transform_18, window_bounds = array<i64: 1, 8, 1>}]} {
    %c0 = arith.constant 0 : index
    %c0_0 = arith.constant 0 : index
    %c0_1 = arith.constant 0 : index
    %0 = vector.load %arg1[%c0, %c0_0, %c0_1] : memref<1x8x32xf32, #tpu.memory_space<vmem>>, vector<1x8x32xf32>
    %1 = vector.shape_cast %0 : vector<1x8x32xf32> to vector<8x32xf32>
    %c0_2 = arith.constant 0 : index
    %c0_3 = arith.constant 0 : index
    %2 = vector.load %arg2[%c0_2, %c0_3] : memref<8x32xf32, #tpu.memory_space<vmem>>, vector<8x32xf32>
    %3 = arith.addf %1, %2 : vector<8x32xf32>
    %4 = tpu.iota {dimensions = array<i32: 1>} : vector<8x32xi32>
    %c16_i32 = arith.constant 16 : i32
    %5 = vector.broadcast %c16_i32 : i32 to vector<8x32xi32>
    %6 = arith.cmpi slt, %4, %5 : vector<8x32xi32>
    %c0_4 = arith.constant 0 : index
    %c0_5 = arith.constant 0 : index
    %c0_6 = arith.constant 0 : index
    %7 = vector.load %arg3[%c0_4, %c0_5, %c0_6] : memref<2x32x96xf32, #tpu.memory_space<vmem>>, vector<1x32x96xf32>
    %8 = vector.shape_cast %7 : vector<1x32x96xf32> to vector<32x96xf32>
    %cst = arith.constant dense<0.000000e+00> : vector<8x96xf32>
    %9 = tpu.matmul %3, %8, %cst {dimension_numbers = #tpu.dot_dimension_numbers<[1], [0], [0], [1], [0, 0, 1, 1], [], []>} : vector<8x32xf32>, vector<32x96xf32>, vector<8x96xf32> -> vector<8x96xf32>
    %c0_7 = arith.constant 0 : index
    %c0_8 = arith.constant 0 : index
    %c0_9 = arith.constant 0 : index
    %10 = vector.load %arg4[%c0_7, %c0_8, %c0_9] : memref<2x1x96xf32, #tpu.memory_space<vmem>>, vector<1x1x96xf32>
    %11 = vector.shape_cast %10 : vector<1x1x96xf32> to vector<1x96xf32>
    %12 = vector.broadcast %11 : vector<1x96xf32> to vector<8x96xf32>
    %13 = arith.addf %9, %12 : vector<8x96xf32>
    %c0_10 = arith.constant 0 : index
    %c0_11 = arith.constant 0 : index
    %c0_12 = arith.constant 0 : index
    %14 = vector.load %arg5[%c0_10, %c0_11, %c0_12] : memref<2x32x32xf32, #tpu.memory_space<vmem>>, vector<1x32x32xf32>
    %15 = vector.shape_cast %14 : vector<1x32x32xf32> to vector<32x32xf32>
    %16 = vector.extract_strided_slice %13 {offsets = [0, 0], sizes = [8, 8], strides = [1, 1]} : vector<8x96xf32> to vector<8x8xf32>
    %17 = vector.extract_strided_slice %13 {offsets = [0, 16], sizes = [8, 8], strides = [1, 1]} : vector<8x96xf32> to vector<8x8xf32>
    %18 = vector.extract_strided_slice %13 {offsets = [0, 32], sizes = [8, 8], strides = [1, 1]} : vector<8x96xf32> to vector<8x8xf32>
    %cst_13 = arith.constant dense<0.000000e+00> : vector<8x8xf32>
    %19 = tpu.matmul %16, %17, %cst_13 {dimension_numbers = #tpu.dot_dimension_numbers<[1], [1], [0], [0], [0, 0, 1, 0], [], []>} : vector<8x8xf32>, vector<8x8xf32>, vector<8x8xf32> -> vector<8x8xf32>
    %cst_14 = arith.constant 0.353553385 : f32
    %20 = vector.broadcast %cst_14 : f32 to vector<8x8xf32>
    %21 = arith.mulf %19, %20 : vector<8x8xf32>
    %cst_15 = arith.constant dense<0xFF800000> : vector<8xf32>
    %22 = vector.multi_reduction <maximumf>, %21, %cst_15 [1] : vector<8x8xf32> to vector<8xf32>
    %23 = vector.shape_cast %22 : vector<8xf32> to vector<8x1xf32>
    %24 = vector.broadcast %23 : vector<8x1xf32> to vector<8x8xf32>
    %25 = arith.subf %21, %24 : vector<8x8xf32>
    %26 = math.exp %25 : vector<8x8xf32>
    %cst_16 = arith.constant dense<0.000000e+00> : vector<8xf32>
    %27 = vector.multi_reduction <add>, %26, %cst_16 [1] : vector<8x8xf32> to vector<8xf32>
    %28 = vector.shape_cast %27 : vector<8xf32> to vector<8x1xf32>
    %29 = vector.broadcast %28 : vector<8x1xf32> to vector<8x8xf32>
    %30 = arith.divf %26, %29 : vector<8x8xf32>
    %cst_17 = arith.constant dense<0.000000e+00> : vector<8x8xf32>
    %31 = tpu.matmul %30, %18, %cst_17 {dimension_numbers = #tpu.dot_dimension_numbers<[1], [0], [0], [1], [0, 0, 1, 1], [], []>} : vector<8x8xf32>, vector<8x8xf32>, vector<8x8xf32> -> vector<8x8xf32>
    %32 = vector.extract_strided_slice %15 {offsets = [0, 0], sizes = [8, 32], strides = [1, 1]} : vector<32x32xf32> to vector<8x32xf32>
    %cst_18 = arith.constant dense<0.000000e+00> : vector<8x32xf32>
    %33 = tpu.matmul %31, %32, %cst_18 {dimension_numbers = #tpu.dot_dimension_numbers<[1], [0], [0], [1], [0, 0, 1, 1], [], []>} : vector<8x8xf32>, vector<8x32xf32>, vector<8x32xf32> -> vector<8x32xf32>
    %34 = vector.extract_strided_slice %13 {offsets = [0, 8], sizes = [8, 8], strides = [1, 1]} : vector<8x96xf32> to vector<8x8xf32>
    %35 = vector.extract_strided_slice %13 {offsets = [0, 24], sizes = [8, 8], strides = [1, 1]} : vector<8x96xf32> to vector<8x8xf32>
    %36 = vector.extract_strided_slice %13 {offsets = [0, 40], sizes = [8, 8], strides = [1, 1]} : vector<8x96xf32> to vector<8x8xf32>
    %cst_19 = arith.constant dense<0.000000e+00> : vector<8x8xf32>
    %37 = tpu.matmul %34, %35, %cst_19 {dimension_numbers = #tpu.dot_dimension_numbers<[1], [1], [0], [0], [0, 0, 1, 0], [], []>} : vector<8x8xf32>, vector<8x8xf32>, vector<8x8xf32> -> vector<8x8xf32>
    %cst_20 = arith.constant 0.353553385 : f32
    %38 = vector.broadcast %cst_20 : f32 to vector<8x8xf32>
    %39 = arith.mulf %37, %38 : vector<8x8xf32>
    %cst_21 = arith.constant dense<0xFF800000> : vector<8xf32>
    %40 = vector.multi_reduction <maximumf>, %39, %cst_21 [1] : vector<8x8xf32> to vector<8xf32>
    %41 = vector.shape_cast %40 : vector<8xf32> to vector<8x1xf32>
    %42 = vector.broadcast %41 : vector<8x1xf32> to vector<8x8xf32>
    %43 = arith.subf %39, %42 : vector<8x8xf32>
    %44 = math.exp %43 : vector<8x8xf32>
    %cst_22 = arith.constant dense<0.000000e+00> : vector<8xf32>
    %45 = vector.multi_reduction <add>, %44, %cst_22 [1] : vector<8x8xf32> to vector<8xf32>
    %46 = vector.shape_cast %45 : vector<8xf32> to vector<8x1xf32>
    %47 = vector.broadcast %46 : vector<8x1xf32> to vector<8x8xf32>
    %48 = arith.divf %44, %47 : vector<8x8xf32>
    %cst_23 = arith.constant dense<0.000000e+00> : vector<8x8xf32>
    %49 = tpu.matmul %48, %36, %cst_23 {dimension_numbers = #tpu.dot_dimension_numbers<[1], [0], [0], [1], [0, 0, 1, 1], [], []>} : vector<8x8xf32>, vector<8x8xf32>, vector<8x8xf32> -> vector<8x8xf32>
    %50 = vector.extract_strided_slice %15 {offsets = [8, 0], sizes = [8, 32], strides = [1, 1]} : vector<32x32xf32> to vector<8x32xf32>
    %cst_24 = arith.constant dense<0.000000e+00> : vector<8x32xf32>
    %51 = tpu.matmul %49, %50, %cst_24 {dimension_numbers = #tpu.dot_dimension_numbers<[1], [0], [0], [1], [0, 0, 1, 1], [], []>} : vector<8x8xf32>, vector<8x32xf32>, vector<8x32xf32> -> vector<8x32xf32>
    %52 = arith.addf %33, %51 : vector<8x32xf32>
    %53 = vector.extract_strided_slice %13 {offsets = [0, 48], sizes = [8, 8], strides = [1, 1]} : vector<8x96xf32> to vector<8x8xf32>
    %54 = vector.extract_strided_slice %13 {offsets = [0, 64], sizes = [8, 8], strides = [1, 1]} : vector<8x96xf32> to vector<8x8xf32>
    %55 = vector.extract_strided_slice %13 {offsets = [0, 80], sizes = [8, 8], strides = [1, 1]} : vector<8x96xf32> to vector<8x8xf32>
    %cst_25 = arith.constant dense<0.000000e+00> : vector<8x8xf32>
    %56 = tpu.matmul %53, %54, %cst_25 {dimension_numbers = #tpu.dot_dimension_numbers<[1], [1], [0], [0], [0, 0, 1, 0], [], []>} : vector<8x8xf32>, vector<8x8xf32>, vector<8x8xf32> -> vector<8x8xf32>
    %cst_26 = arith.constant 0.353553385 : f32
    %57 = vector.broadcast %cst_26 : f32 to vector<8x8xf32>
    %58 = arith.mulf %56, %57 : vector<8x8xf32>
    %cst_27 = arith.constant dense<0xFF800000> : vector<8xf32>
    %59 = vector.multi_reduction <maximumf>, %58, %cst_27 [1] : vector<8x8xf32> to vector<8xf32>
    %60 = vector.shape_cast %59 : vector<8xf32> to vector<8x1xf32>
    %61 = vector.broadcast %60 : vector<8x1xf32> to vector<8x8xf32>
    %62 = arith.subf %58, %61 : vector<8x8xf32>
    %63 = math.exp %62 : vector<8x8xf32>
    %cst_28 = arith.constant dense<0.000000e+00> : vector<8xf32>
    %64 = vector.multi_reduction <add>, %63, %cst_28 [1] : vector<8x8xf32> to vector<8xf32>
    %65 = vector.shape_cast %64 : vector<8xf32> to vector<8x1xf32>
    %66 = vector.broadcast %65 : vector<8x1xf32> to vector<8x8xf32>
    %67 = arith.divf %63, %66 : vector<8x8xf32>
    %cst_29 = arith.constant dense<0.000000e+00> : vector<8x8xf32>
    %68 = tpu.matmul %67, %55, %cst_29 {dimension_numbers = #tpu.dot_dimension_numbers<[1], [0], [0], [1], [0, 0, 1, 1], [], []>} : vector<8x8xf32>, vector<8x8xf32>, vector<8x8xf32> -> vector<8x8xf32>
    %69 = vector.extract_strided_slice %15 {offsets = [16, 0], sizes = [8, 32], strides = [1, 1]} : vector<32x32xf32> to vector<8x32xf32>
    %cst_30 = arith.constant dense<0.000000e+00> : vector<8x32xf32>
    %70 = tpu.matmul %68, %69, %cst_30 {dimension_numbers = #tpu.dot_dimension_numbers<[1], [0], [0], [1], [0, 0, 1, 1], [], []>} : vector<8x8xf32>, vector<8x32xf32>, vector<8x32xf32> -> vector<8x32xf32>
    %71 = arith.addf %52, %70 : vector<8x32xf32>
    %72 = vector.extract_strided_slice %13 {offsets = [0, 56], sizes = [8, 8], strides = [1, 1]} : vector<8x96xf32> to vector<8x8xf32>
    %73 = vector.extract_strided_slice %13 {offsets = [0, 72], sizes = [8, 8], strides = [1, 1]} : vector<8x96xf32> to vector<8x8xf32>
    %74 = vector.extract_strided_slice %13 {offsets = [0, 88], sizes = [8, 8], strides = [1, 1]} : vector<8x96xf32> to vector<8x8xf32>
    %cst_31 = arith.constant dense<0.000000e+00> : vector<8x8xf32>
    %75 = tpu.matmul %72, %73, %cst_31 {dimension_numbers = #tpu.dot_dimension_numbers<[1], [1], [0], [0], [0, 0, 1, 0], [], []>} : vector<8x8xf32>, vector<8x8xf32>, vector<8x8xf32> -> vector<8x8xf32>
    %cst_32 = arith.constant 0.353553385 : f32
    %76 = vector.broadcast %cst_32 : f32 to vector<8x8xf32>
    %77 = arith.mulf %75, %76 : vector<8x8xf32>
    %cst_33 = arith.constant dense<0xFF800000> : vector<8xf32>
    %78 = vector.multi_reduction <maximumf>, %77, %cst_33 [1] : vector<8x8xf32> to vector<8xf32>
    %79 = vector.shape_cast %78 : vector<8xf32> to vector<8x1xf32>
    %80 = vector.broadcast %79 : vector<8x1xf32> to vector<8x8xf32>
    %81 = arith.subf %77, %80 : vector<8x8xf32>
    %82 = math.exp %81 : vector<8x8xf32>
    %cst_34 = arith.constant dense<0.000000e+00> : vector<8xf32>
    %83 = vector.multi_reduction <add>, %82, %cst_34 [1] : vector<8x8xf32> to vector<8xf32>
    %84 = vector.shape_cast %83 : vector<8xf32> to vector<8x1xf32>
    %85 = vector.broadcast %84 : vector<8x1xf32> to vector<8x8xf32>
    %86 = arith.divf %82, %85 : vector<8x8xf32>
    %cst_35 = arith.constant dense<0.000000e+00> : vector<8x8xf32>
    %87 = tpu.matmul %86, %74, %cst_35 {dimension_numbers = #tpu.dot_dimension_numbers<[1], [0], [0], [1], [0, 0, 1, 1], [], []>} : vector<8x8xf32>, vector<8x8xf32>, vector<8x8xf32> -> vector<8x8xf32>
    %88 = vector.extract_strided_slice %15 {offsets = [24, 0], sizes = [8, 32], strides = [1, 1]} : vector<32x32xf32> to vector<8x32xf32>
    %cst_36 = arith.constant dense<0.000000e+00> : vector<8x32xf32>
    %89 = tpu.matmul %87, %88, %cst_36 {dimension_numbers = #tpu.dot_dimension_numbers<[1], [0], [0], [1], [0, 0, 1, 1], [], []>} : vector<8x8xf32>, vector<8x32xf32>, vector<8x32xf32> -> vector<8x32xf32>
    %90 = arith.addf %71, %89 : vector<8x32xf32>
    %91 = arith.addf %3, %90 : vector<8x32xf32>
    %c0_37 = arith.constant 0 : index
    %c0_38 = arith.constant 0 : index
    %c0_39 = arith.constant 0 : index
    %92 = vector.load %arg6[%c0_37, %c0_38, %c0_39] : memref<2x1x32xf32, #tpu.memory_space<vmem>>, vector<1x1x32xf32>
    %93 = vector.shape_cast %92 : vector<1x1x32xf32> to vector<1x32xf32>
    %94 = vector.broadcast %93 : vector<1x32xf32> to vector<8x32xf32>
    %95 = arith.addf %91, %94 : vector<8x32xf32>
    %c0_40 = arith.constant 0 : index
    %c0_41 = arith.constant 0 : index
    %c0_42 = arith.constant 0 : index
    %96 = vector.load %arg11[%c0_40, %c0_41, %c0_42] : memref<2x1x32xf32, #tpu.memory_space<vmem>>, vector<1x1x32xf32>
    %97 = vector.shape_cast %96 : vector<1x1x32xf32> to vector<1x32xf32>
    %c0_43 = arith.constant 0 : index
    %c0_44 = arith.constant 0 : index
    %c0_45 = arith.constant 0 : index
    %98 = vector.load %arg12[%c0_43, %c0_44, %c0_45] : memref<2x1x32xf32, #tpu.memory_space<vmem>>, vector<1x1x32xf32>
    %99 = vector.shape_cast %98 : vector<1x1x32xf32> to vector<1x32xf32>
    %cst_46 = arith.constant 0.000000e+00 : f32
    %100 = vector.broadcast %cst_46 : f32 to vector<8x32xf32>
    %101 = arith.select %6, %95, %100 : vector<8x32xi1>, vector<8x32xf32>
    %cst_47 = arith.constant dense<0.000000e+00> : vector<8xf32>
    %102 = vector.multi_reduction <add>, %101, %cst_47 [1] : vector<8x32xf32> to vector<8xf32>
    %103 = vector.shape_cast %102 : vector<8xf32> to vector<8x1xf32>
    %cst_48 = arith.constant 0.000000e+00 : f32
    %104 = vector.broadcast %cst_48 : f32 to vector<8x32xf32>
    %105 = arith.select %6, %104, %95 : vector<8x32xi1>, vector<8x32xf32>
    %cst_49 = arith.constant dense<0.000000e+00> : vector<8xf32>
    %106 = vector.multi_reduction <add>, %105, %cst_49 [1] : vector<8x32xf32> to vector<8xf32>
    %107 = vector.shape_cast %106 : vector<8xf32> to vector<8x1xf32>
    %108 = vector.shape_cast %103 : vector<8x1xf32> to vector<8x1xf32>
    %109 = vector.broadcast %108 : vector<8x1xf32> to vector<8x32xf32>
    %110 = vector.shape_cast %107 : vector<8x1xf32> to vector<8x1xf32>
    %111 = vector.broadcast %110 : vector<8x1xf32> to vector<8x32xf32>
    %112 = arith.select %6, %109, %111 : vector<8x32xi1>, vector<8x32xf32>
    %cst_50 = arith.constant 6.250000e-02 : f32
    %113 = vector.broadcast %cst_50 : f32 to vector<8x32xf32>
    %114 = arith.mulf %112, %113 : vector<8x32xf32>
    %115 = arith.subf %95, %114 : vector<8x32xf32>
    %116 = arith.mulf %115, %115 : vector<8x32xf32>
    %cst_51 = arith.constant 0.000000e+00 : f32
    %117 = vector.broadcast %cst_51 : f32 to vector<8x32xf32>
    %118 = arith.select %6, %116, %117 : vector<8x32xi1>, vector<8x32xf32>
    %cst_52 = arith.constant dense<0.000000e+00> : vector<8xf32>
    %119 = vector.multi_reduction <add>, %118, %cst_52 [1] : vector<8x32xf32> to vector<8xf32>
    %120 = vector.shape_cast %119 : vector<8xf32> to vector<8x1xf32>
    %cst_53 = arith.constant 0.000000e+00 : f32
    %121 = vector.broadcast %cst_53 : f32 to vector<8x32xf32>
    %122 = arith.select %6, %121, %116 : vector<8x32xi1>, vector<8x32xf32>
    %cst_54 = arith.constant dense<0.000000e+00> : vector<8xf32>
    %123 = vector.multi_reduction <add>, %122, %cst_54 [1] : vector<8x32xf32> to vector<8xf32>
    %124 = vector.shape_cast %123 : vector<8xf32> to vector<8x1xf32>
    %125 = vector.shape_cast %120 : vector<8x1xf32> to vector<8x1xf32>
    %126 = vector.broadcast %125 : vector<8x1xf32> to vector<8x32xf32>
    %127 = vector.shape_cast %124 : vector<8x1xf32> to vector<8x1xf32>
    %128 = vector.broadcast %127 : vector<8x1xf32> to vector<8x32xf32>
    %129 = arith.select %6, %126, %128 : vector<8x32xi1>, vector<8x32xf32>
    %cst_55 = arith.constant 6.250000e-02 : f32
    %130 = vector.broadcast %cst_55 : f32 to vector<8x32xf32>
    %131 = arith.mulf %129, %130 : vector<8x32xf32>
    %cst_56 = arith.constant 9.99999974E-6 : f32
    %132 = vector.broadcast %cst_56 : f32 to vector<8x32xf32>
    %133 = arith.addf %131, %132 : vector<8x32xf32>
    %134 = math.rsqrt %133 : vector<8x32xf32>
    %135 = arith.mulf %115, %134 : vector<8x32xf32>
    %136 = vector.broadcast %97 : vector<1x32xf32> to vector<8x32xf32>
    %137 = arith.mulf %135, %136 : vector<8x32xf32>
    %138 = vector.broadcast %99 : vector<1x32xf32> to vector<8x32xf32>
    %139 = arith.addf %137, %138 : vector<8x32xf32>
    %c0_57 = arith.constant 0 : index
    %c0_58 = arith.constant 0 : index
    %c0_59 = arith.constant 0 : index
    %140 = vector.load %arg7[%c0_57, %c0_58, %c0_59] : memref<2x32x128xf32, #tpu.memory_space<vmem>>, vector<1x32x128xf32>
    %141 = vector.shape_cast %140 : vector<1x32x128xf32> to vector<32x128xf32>
    %cst_60 = arith.constant dense<0.000000e+00> : vector<8x128xf32>
    %142 = tpu.matmul %139, %141, %cst_60 {dimension_numbers = #tpu.dot_dimension_numbers<[1], [0], [0], [1], [0, 0, 1, 1], [], []>} : vector<8x32xf32>, vector<32x128xf32>, vector<8x128xf32> -> vector<8x128xf32>
    %c0_61 = arith.constant 0 : index
    %c0_62 = arith.constant 0 : index
    %c0_63 = arith.constant 0 : index
    %143 = vector.load %arg8[%c0_61, %c0_62, %c0_63] : memref<2x1x128xf32, #tpu.memory_space<vmem>>, vector<1x1x128xf32>
    %144 = vector.shape_cast %143 : vector<1x1x128xf32> to vector<1x128xf32>
    %145 = vector.broadcast %144 : vector<1x128xf32> to vector<8x128xf32>
    %146 = arith.addf %142, %145 : vector<8x128xf32>
    %cst_64 = arith.constant 0.000000e+00 : f32
    %147 = vector.broadcast %cst_64 : f32 to vector<8x128xf32>
    %148 = arith.maximumf %146, %147 : vector<8x128xf32>
    %c0_65 = arith.constant 0 : index
    %c0_66 = arith.constant 0 : index
    %c0_67 = arith.constant 0 : index
    %149 = vector.load %arg9[%c0_65, %c0_66, %c0_67] : memref<2x128x32xf32, #tpu.memory_space<vmem>>, vector<1x128x32xf32>
    %150 = vector.shape_cast %149 : vector<1x128x32xf32> to vector<128x32xf32>
    %cst_68 = arith.constant dense<0.000000e+00> : vector<8x32xf32>
    %151 = tpu.matmul %148, %150, %cst_68 {dimension_numbers = #tpu.dot_dimension_numbers<[1], [0], [0], [1], [0, 0, 1, 1], [], []>} : vector<8x128xf32>, vector<128x32xf32>, vector<8x32xf32> -> vector<8x32xf32>
    %c0_69 = arith.constant 0 : index
    %c0_70 = arith.constant 0 : index
    %c0_71 = arith.constant 0 : index
    %152 = vector.load %arg10[%c0_69, %c0_70, %c0_71] : memref<2x1x32xf32, #tpu.memory_space<vmem>>, vector<1x1x32xf32>
    %153 = vector.shape_cast %152 : vector<1x1x32xf32> to vector<1x32xf32>
    %154 = vector.broadcast %153 : vector<1x32xf32> to vector<8x32xf32>
    %155 = arith.addf %151, %154 : vector<8x32xf32>
    %156 = arith.addf %139, %155 : vector<8x32xf32>
    %c0_72 = arith.constant 0 : index
    %c0_73 = arith.constant 0 : index
    %c0_74 = arith.constant 0 : index
    %157 = vector.load %arg13[%c0_72, %c0_73, %c0_74] : memref<2x1x32xf32, #tpu.memory_space<vmem>>, vector<1x1x32xf32>
    %158 = vector.shape_cast %157 : vector<1x1x32xf32> to vector<1x32xf32>
    %c0_75 = arith.constant 0 : index
    %c0_76 = arith.constant 0 : index
    %c0_77 = arith.constant 0 : index
    %159 = vector.load %arg14[%c0_75, %c0_76, %c0_77] : memref<2x1x32xf32, #tpu.memory_space<vmem>>, vector<1x1x32xf32>
    %160 = vector.shape_cast %159 : vector<1x1x32xf32> to vector<1x32xf32>
    %cst_78 = arith.constant 0.000000e+00 : f32
    %161 = vector.broadcast %cst_78 : f32 to vector<8x32xf32>
    %162 = arith.select %6, %156, %161 : vector<8x32xi1>, vector<8x32xf32>
    %cst_79 = arith.constant dense<0.000000e+00> : vector<8xf32>
    %163 = vector.multi_reduction <add>, %162, %cst_79 [1] : vector<8x32xf32> to vector<8xf32>
    %164 = vector.shape_cast %163 : vector<8xf32> to vector<8x1xf32>
    %cst_80 = arith.constant 0.000000e+00 : f32
    %165 = vector.broadcast %cst_80 : f32 to vector<8x32xf32>
    %166 = arith.select %6, %165, %156 : vector<8x32xi1>, vector<8x32xf32>
    %cst_81 = arith.constant dense<0.000000e+00> : vector<8xf32>
    %167 = vector.multi_reduction <add>, %166, %cst_81 [1] : vector<8x32xf32> to vector<8xf32>
    %168 = vector.shape_cast %167 : vector<8xf32> to vector<8x1xf32>
    %169 = vector.shape_cast %164 : vector<8x1xf32> to vector<8x1xf32>
    %170 = vector.broadcast %169 : vector<8x1xf32> to vector<8x32xf32>
    %171 = vector.shape_cast %168 : vector<8x1xf32> to vector<8x1xf32>
    %172 = vector.broadcast %171 : vector<8x1xf32> to vector<8x32xf32>
    %173 = arith.select %6, %170, %172 : vector<8x32xi1>, vector<8x32xf32>
    %cst_82 = arith.constant 6.250000e-02 : f32
    %174 = vector.broadcast %cst_82 : f32 to vector<8x32xf32>
    %175 = arith.mulf %173, %174 : vector<8x32xf32>
    %176 = arith.subf %156, %175 : vector<8x32xf32>
    %177 = arith.mulf %176, %176 : vector<8x32xf32>
    %cst_83 = arith.constant 0.000000e+00 : f32
    %178 = vector.broadcast %cst_83 : f32 to vector<8x32xf32>
    %179 = arith.select %6, %177, %178 : vector<8x32xi1>, vector<8x32xf32>
    %cst_84 = arith.constant dense<0.000000e+00> : vector<8xf32>
    %180 = vector.multi_reduction <add>, %179, %cst_84 [1] : vector<8x32xf32> to vector<8xf32>
    %181 = vector.shape_cast %180 : vector<8xf32> to vector<8x1xf32>
    %cst_85 = arith.constant 0.000000e+00 : f32
    %182 = vector.broadcast %cst_85 : f32 to vector<8x32xf32>
    %183 = arith.select %6, %182, %177 : vector<8x32xi1>, vector<8x32xf32>
    %cst_86 = arith.constant dense<0.000000e+00> : vector<8xf32>
    %184 = vector.multi_reduction <add>, %183, %cst_86 [1] : vector<8x32xf32> to vector<8xf32>
    %185 = vector.shape_cast %184 : vector<8xf32> to vector<8x1xf32>
    %186 = vector.shape_cast %181 : vector<8x1xf32> to vector<8x1xf32>
    %187 = vector.broadcast %186 : vector<8x1xf32> to vector<8x32xf32>
    %188 = vector.shape_cast %185 : vector<8x1xf32> to vector<8x1xf32>
    %189 = vector.broadcast %188 : vector<8x1xf32> to vector<8x32xf32>
    %190 = arith.select %6, %187, %189 : vector<8x32xi1>, vector<8x32xf32>
    %cst_87 = arith.constant 6.250000e-02 : f32
    %191 = vector.broadcast %cst_87 : f32 to vector<8x32xf32>
    %192 = arith.mulf %190, %191 : vector<8x32xf32>
    %cst_88 = arith.constant 9.99999974E-6 : f32
    %193 = vector.broadcast %cst_88 : f32 to vector<8x32xf32>
    %194 = arith.addf %192, %193 : vector<8x32xf32>
    %195 = math.rsqrt %194 : vector<8x32xf32>
    %196 = arith.mulf %176, %195 : vector<8x32xf32>
    %197 = vector.broadcast %158 : vector<1x32xf32> to vector<8x32xf32>
    %198 = arith.mulf %196, %197 : vector<8x32xf32>
    %199 = vector.broadcast %160 : vector<1x32xf32> to vector<8x32xf32>
    %200 = arith.addf %198, %199 : vector<8x32xf32>
    %c1 = arith.constant 1 : index
    %c0_89 = arith.constant 0 : index
    %c0_90 = arith.constant 0 : index
    %201 = vector.load %arg3[%c1, %c0_89, %c0_90] : memref<2x32x96xf32, #tpu.memory_space<vmem>>, vector<1x32x96xf32>
    %202 = vector.shape_cast %201 : vector<1x32x96xf32> to vector<32x96xf32>
    %cst_91 = arith.constant dense<0.000000e+00> : vector<8x96xf32>
    %203 = tpu.matmul %200, %202, %cst_91 {dimension_numbers = #tpu.dot_dimension_numbers<[1], [0], [0], [1], [0, 0, 1, 1], [], []>} : vector<8x32xf32>, vector<32x96xf32>, vector<8x96xf32> -> vector<8x96xf32>
    %c1_92 = arith.constant 1 : index
    %c0_93 = arith.constant 0 : index
    %c0_94 = arith.constant 0 : index
    %204 = vector.load %arg4[%c1_92, %c0_93, %c0_94] : memref<2x1x96xf32, #tpu.memory_space<vmem>>, vector<1x1x96xf32>
    %205 = vector.shape_cast %204 : vector<1x1x96xf32> to vector<1x96xf32>
    %206 = vector.broadcast %205 : vector<1x96xf32> to vector<8x96xf32>
    %207 = arith.addf %203, %206 : vector<8x96xf32>
    %c1_95 = arith.constant 1 : index
    %c0_96 = arith.constant 0 : index
    %c0_97 = arith.constant 0 : index
    %208 = vector.load %arg5[%c1_95, %c0_96, %c0_97] : memref<2x32x32xf32, #tpu.memory_space<vmem>>, vector<1x32x32xf32>
    %209 = vector.shape_cast %208 : vector<1x32x32xf32> to vector<32x32xf32>
    %210 = vector.extract_strided_slice %207 {offsets = [0, 0], sizes = [8, 8], strides = [1, 1]} : vector<8x96xf32> to vector<8x8xf32>
    %211 = vector.extract_strided_slice %207 {offsets = [0, 16], sizes = [8, 8], strides = [1, 1]} : vector<8x96xf32> to vector<8x8xf32>
    %212 = vector.extract_strided_slice %207 {offsets = [0, 32], sizes = [8, 8], strides = [1, 1]} : vector<8x96xf32> to vector<8x8xf32>
    %cst_98 = arith.constant dense<0.000000e+00> : vector<8x8xf32>
    %213 = tpu.matmul %210, %211, %cst_98 {dimension_numbers = #tpu.dot_dimension_numbers<[1], [1], [0], [0], [0, 0, 1, 0], [], []>} : vector<8x8xf32>, vector<8x8xf32>, vector<8x8xf32> -> vector<8x8xf32>
    %cst_99 = arith.constant 0.353553385 : f32
    %214 = vector.broadcast %cst_99 : f32 to vector<8x8xf32>
    %215 = arith.mulf %213, %214 : vector<8x8xf32>
    %cst_100 = arith.constant dense<0xFF800000> : vector<8xf32>
    %216 = vector.multi_reduction <maximumf>, %215, %cst_100 [1] : vector<8x8xf32> to vector<8xf32>
    %217 = vector.shape_cast %216 : vector<8xf32> to vector<8x1xf32>
    %218 = vector.broadcast %217 : vector<8x1xf32> to vector<8x8xf32>
    %219 = arith.subf %215, %218 : vector<8x8xf32>
    %220 = math.exp %219 : vector<8x8xf32>
    %cst_101 = arith.constant dense<0.000000e+00> : vector<8xf32>
    %221 = vector.multi_reduction <add>, %220, %cst_101 [1] : vector<8x8xf32> to vector<8xf32>
    %222 = vector.shape_cast %221 : vector<8xf32> to vector<8x1xf32>
    %223 = vector.broadcast %222 : vector<8x1xf32> to vector<8x8xf32>
    %224 = arith.divf %220, %223 : vector<8x8xf32>
    %cst_102 = arith.constant dense<0.000000e+00> : vector<8x8xf32>
    %225 = tpu.matmul %224, %212, %cst_102 {dimension_numbers = #tpu.dot_dimension_numbers<[1], [0], [0], [1], [0, 0, 1, 1], [], []>} : vector<8x8xf32>, vector<8x8xf32>, vector<8x8xf32> -> vector<8x8xf32>
    %226 = vector.extract_strided_slice %209 {offsets = [0, 0], sizes = [8, 32], strides = [1, 1]} : vector<32x32xf32> to vector<8x32xf32>
    %cst_103 = arith.constant dense<0.000000e+00> : vector<8x32xf32>
    %227 = tpu.matmul %225, %226, %cst_103 {dimension_numbers = #tpu.dot_dimension_numbers<[1], [0], [0], [1], [0, 0, 1, 1], [], []>} : vector<8x8xf32>, vector<8x32xf32>, vector<8x32xf32> -> vector<8x32xf32>
    %228 = vector.extract_strided_slice %207 {offsets = [0, 8], sizes = [8, 8], strides = [1, 1]} : vector<8x96xf32> to vector<8x8xf32>
    %229 = vector.extract_strided_slice %207 {offsets = [0, 24], sizes = [8, 8], strides = [1, 1]} : vector<8x96xf32> to vector<8x8xf32>
    %230 = vector.extract_strided_slice %207 {offsets = [0, 40], sizes = [8, 8], strides = [1, 1]} : vector<8x96xf32> to vector<8x8xf32>
    %cst_104 = arith.constant dense<0.000000e+00> : vector<8x8xf32>
    %231 = tpu.matmul %228, %229, %cst_104 {dimension_numbers = #tpu.dot_dimension_numbers<[1], [1], [0], [0], [0, 0, 1, 0], [], []>} : vector<8x8xf32>, vector<8x8xf32>, vector<8x8xf32> -> vector<8x8xf32>
    %cst_105 = arith.constant 0.353553385 : f32
    %232 = vector.broadcast %cst_105 : f32 to vector<8x8xf32>
    %233 = arith.mulf %231, %232 : vector<8x8xf32>
    %cst_106 = arith.constant dense<0xFF800000> : vector<8xf32>
    %234 = vector.multi_reduction <maximumf>, %233, %cst_106 [1] : vector<8x8xf32> to vector<8xf32>
    %235 = vector.shape_cast %234 : vector<8xf32> to vector<8x1xf32>
    %236 = vector.broadcast %235 : vector<8x1xf32> to vector<8x8xf32>
    %237 = arith.subf %233, %236 : vector<8x8xf32>
    %238 = math.exp %237 : vector<8x8xf32>
    %cst_107 = arith.constant dense<0.000000e+00> : vector<8xf32>
    %239 = vector.multi_reduction <add>, %238, %cst_107 [1] : vector<8x8xf32> to vector<8xf32>
    %240 = vector.shape_cast %239 : vector<8xf32> to vector<8x1xf32>
    %241 = vector.broadcast %240 : vector<8x1xf32> to vector<8x8xf32>
    %242 = arith.divf %238, %241 : vector<8x8xf32>
    %cst_108 = arith.constant dense<0.000000e+00> : vector<8x8xf32>
    %243 = tpu.matmul %242, %230, %cst_108 {dimension_numbers = #tpu.dot_dimension_numbers<[1], [0], [0], [1], [0, 0, 1, 1], [], []>} : vector<8x8xf32>, vector<8x8xf32>, vector<8x8xf32> -> vector<8x8xf32>
    %244 = vector.extract_strided_slice %209 {offsets = [8, 0], sizes = [8, 32], strides = [1, 1]} : vector<32x32xf32> to vector<8x32xf32>
    %cst_109 = arith.constant dense<0.000000e+00> : vector<8x32xf32>
    %245 = tpu.matmul %243, %244, %cst_109 {dimension_numbers = #tpu.dot_dimension_numbers<[1], [0], [0], [1], [0, 0, 1, 1], [], []>} : vector<8x8xf32>, vector<8x32xf32>, vector<8x32xf32> -> vector<8x32xf32>
    %246 = arith.addf %227, %245 : vector<8x32xf32>
    %247 = vector.extract_strided_slice %207 {offsets = [0, 48], sizes = [8, 8], strides = [1, 1]} : vector<8x96xf32> to vector<8x8xf32>
    %248 = vector.extract_strided_slice %207 {offsets = [0, 64], sizes = [8, 8], strides = [1, 1]} : vector<8x96xf32> to vector<8x8xf32>
    %249 = vector.extract_strided_slice %207 {offsets = [0, 80], sizes = [8, 8], strides = [1, 1]} : vector<8x96xf32> to vector<8x8xf32>
    %cst_110 = arith.constant dense<0.000000e+00> : vector<8x8xf32>
    %250 = tpu.matmul %247, %248, %cst_110 {dimension_numbers = #tpu.dot_dimension_numbers<[1], [1], [0], [0], [0, 0, 1, 0], [], []>} : vector<8x8xf32>, vector<8x8xf32>, vector<8x8xf32> -> vector<8x8xf32>
    %cst_111 = arith.constant 0.353553385 : f32
    %251 = vector.broadcast %cst_111 : f32 to vector<8x8xf32>
    %252 = arith.mulf %250, %251 : vector<8x8xf32>
    %cst_112 = arith.constant dense<0xFF800000> : vector<8xf32>
    %253 = vector.multi_reduction <maximumf>, %252, %cst_112 [1] : vector<8x8xf32> to vector<8xf32>
    %254 = vector.shape_cast %253 : vector<8xf32> to vector<8x1xf32>
    %255 = vector.broadcast %254 : vector<8x1xf32> to vector<8x8xf32>
    %256 = arith.subf %252, %255 : vector<8x8xf32>
    %257 = math.exp %256 : vector<8x8xf32>
    %cst_113 = arith.constant dense<0.000000e+00> : vector<8xf32>
    %258 = vector.multi_reduction <add>, %257, %cst_113 [1] : vector<8x8xf32> to vector<8xf32>
    %259 = vector.shape_cast %258 : vector<8xf32> to vector<8x1xf32>
    %260 = vector.broadcast %259 : vector<8x1xf32> to vector<8x8xf32>
    %261 = arith.divf %257, %260 : vector<8x8xf32>
    %cst_114 = arith.constant dense<0.000000e+00> : vector<8x8xf32>
    %262 = tpu.matmul %261, %249, %cst_114 {dimension_numbers = #tpu.dot_dimension_numbers<[1], [0], [0], [1], [0, 0, 1, 1], [], []>} : vector<8x8xf32>, vector<8x8xf32>, vector<8x8xf32> -> vector<8x8xf32>
    %263 = vector.extract_strided_slice %209 {offsets = [16, 0], sizes = [8, 32], strides = [1, 1]} : vector<32x32xf32> to vector<8x32xf32>
    %cst_115 = arith.constant dense<0.000000e+00> : vector<8x32xf32>
    %264 = tpu.matmul %262, %263, %cst_115 {dimension_numbers = #tpu.dot_dimension_numbers<[1], [0], [0], [1], [0, 0, 1, 1], [], []>} : vector<8x8xf32>, vector<8x32xf32>, vector<8x32xf32> -> vector<8x32xf32>
    %265 = arith.addf %246, %264 : vector<8x32xf32>
    %266 = vector.extract_strided_slice %207 {offsets = [0, 56], sizes = [8, 8], strides = [1, 1]} : vector<8x96xf32> to vector<8x8xf32>
    %267 = vector.extract_strided_slice %207 {offsets = [0, 72], sizes = [8, 8], strides = [1, 1]} : vector<8x96xf32> to vector<8x8xf32>
    %268 = vector.extract_strided_slice %207 {offsets = [0, 88], sizes = [8, 8], strides = [1, 1]} : vector<8x96xf32> to vector<8x8xf32>
    %cst_116 = arith.constant dense<0.000000e+00> : vector<8x8xf32>
    %269 = tpu.matmul %266, %267, %cst_116 {dimension_numbers = #tpu.dot_dimension_numbers<[1], [1], [0], [0], [0, 0, 1, 0], [], []>} : vector<8x8xf32>, vector<8x8xf32>, vector<8x8xf32> -> vector<8x8xf32>
    %cst_117 = arith.constant 0.353553385 : f32
    %270 = vector.broadcast %cst_117 : f32 to vector<8x8xf32>
    %271 = arith.mulf %269, %270 : vector<8x8xf32>
    %cst_118 = arith.constant dense<0xFF800000> : vector<8xf32>
    %272 = vector.multi_reduction <maximumf>, %271, %cst_118 [1] : vector<8x8xf32> to vector<8xf32>
    %273 = vector.shape_cast %272 : vector<8xf32> to vector<8x1xf32>
    %274 = vector.broadcast %273 : vector<8x1xf32> to vector<8x8xf32>
    %275 = arith.subf %271, %274 : vector<8x8xf32>
    %276 = math.exp %275 : vector<8x8xf32>
    %cst_119 = arith.constant dense<0.000000e+00> : vector<8xf32>
    %277 = vector.multi_reduction <add>, %276, %cst_119 [1] : vector<8x8xf32> to vector<8xf32>
    %278 = vector.shape_cast %277 : vector<8xf32> to vector<8x1xf32>
    %279 = vector.broadcast %278 : vector<8x1xf32> to vector<8x8xf32>
    %280 = arith.divf %276, %279 : vector<8x8xf32>
    %cst_120 = arith.constant dense<0.000000e+00> : vector<8x8xf32>
    %281 = tpu.matmul %280, %268, %cst_120 {dimension_numbers = #tpu.dot_dimension_numbers<[1], [0], [0], [1], [0, 0, 1, 1], [], []>} : vector<8x8xf32>, vector<8x8xf32>, vector<8x8xf32> -> vector<8x8xf32>
    %282 = vector.extract_strided_slice %209 {offsets = [24, 0], sizes = [8, 32], strides = [1, 1]} : vector<32x32xf32> to vector<8x32xf32>
    %cst_121 = arith.constant dense<0.000000e+00> : vector<8x32xf32>
    %283 = tpu.matmul %281, %282, %cst_121 {dimension_numbers = #tpu.dot_dimension_numbers<[1], [0], [0], [1], [0, 0, 1, 1], [], []>} : vector<8x8xf32>, vector<8x32xf32>, vector<8x32xf32> -> vector<8x32xf32>
    %284 = arith.addf %265, %283 : vector<8x32xf32>
    %285 = arith.addf %200, %284 : vector<8x32xf32>
    %c1_122 = arith.constant 1 : index
    %c0_123 = arith.constant 0 : index
    %c0_124 = arith.constant 0 : index
    %286 = vector.load %arg6[%c1_122, %c0_123, %c0_124] : memref<2x1x32xf32, #tpu.memory_space<vmem>>, vector<1x1x32xf32>
    %287 = vector.shape_cast %286 : vector<1x1x32xf32> to vector<1x32xf32>
    %288 = vector.broadcast %287 : vector<1x32xf32> to vector<8x32xf32>
    %289 = arith.addf %285, %288 : vector<8x32xf32>
    %c1_125 = arith.constant 1 : index
    %c0_126 = arith.constant 0 : index
    %c0_127 = arith.constant 0 : index
    %290 = vector.load %arg11[%c1_125, %c0_126, %c0_127] : memref<2x1x32xf32, #tpu.memory_space<vmem>>, vector<1x1x32xf32>
    %291 = vector.shape_cast %290 : vector<1x1x32xf32> to vector<1x32xf32>
    %c1_128 = arith.constant 1 : index
    %c0_129 = arith.constant 0 : index
    %c0_130 = arith.constant 0 : index
    %292 = vector.load %arg12[%c1_128, %c0_129, %c0_130] : memref<2x1x32xf32, #tpu.memory_space<vmem>>, vector<1x1x32xf32>
    %293 = vector.shape_cast %292 : vector<1x1x32xf32> to vector<1x32xf32>
    %cst_131 = arith.constant 0.000000e+00 : f32
    %294 = vector.broadcast %cst_131 : f32 to vector<8x32xf32>
    %295 = arith.select %6, %289, %294 : vector<8x32xi1>, vector<8x32xf32>
    %cst_132 = arith.constant dense<0.000000e+00> : vector<8xf32>
    %296 = vector.multi_reduction <add>, %295, %cst_132 [1] : vector<8x32xf32> to vector<8xf32>
    %297 = vector.shape_cast %296 : vector<8xf32> to vector<8x1xf32>
    %cst_133 = arith.constant 0.000000e+00 : f32
    %298 = vector.broadcast %cst_133 : f32 to vector<8x32xf32>
    %299 = arith.select %6, %298, %289 : vector<8x32xi1>, vector<8x32xf32>
    %cst_134 = arith.constant dense<0.000000e+00> : vector<8xf32>
    %300 = vector.multi_reduction <add>, %299, %cst_134 [1] : vector<8x32xf32> to vector<8xf32>
    %301 = vector.shape_cast %300 : vector<8xf32> to vector<8x1xf32>
    %302 = vector.shape_cast %297 : vector<8x1xf32> to vector<8x1xf32>
    %303 = vector.broadcast %302 : vector<8x1xf32> to vector<8x32xf32>
    %304 = vector.shape_cast %301 : vector<8x1xf32> to vector<8x1xf32>
    %305 = vector.broadcast %304 : vector<8x1xf32> to vector<8x32xf32>
    %306 = arith.select %6, %303, %305 : vector<8x32xi1>, vector<8x32xf32>
    %cst_135 = arith.constant 6.250000e-02 : f32
    %307 = vector.broadcast %cst_135 : f32 to vector<8x32xf32>
    %308 = arith.mulf %306, %307 : vector<8x32xf32>
    %309 = arith.subf %289, %308 : vector<8x32xf32>
    %310 = arith.mulf %309, %309 : vector<8x32xf32>
    %cst_136 = arith.constant 0.000000e+00 : f32
    %311 = vector.broadcast %cst_136 : f32 to vector<8x32xf32>
    %312 = arith.select %6, %310, %311 : vector<8x32xi1>, vector<8x32xf32>
    %cst_137 = arith.constant dense<0.000000e+00> : vector<8xf32>
    %313 = vector.multi_reduction <add>, %312, %cst_137 [1] : vector<8x32xf32> to vector<8xf32>
    %314 = vector.shape_cast %313 : vector<8xf32> to vector<8x1xf32>
    %cst_138 = arith.constant 0.000000e+00 : f32
    %315 = vector.broadcast %cst_138 : f32 to vector<8x32xf32>
    %316 = arith.select %6, %315, %310 : vector<8x32xi1>, vector<8x32xf32>
    %cst_139 = arith.constant dense<0.000000e+00> : vector<8xf32>
    %317 = vector.multi_reduction <add>, %316, %cst_139 [1] : vector<8x32xf32> to vector<8xf32>
    %318 = vector.shape_cast %317 : vector<8xf32> to vector<8x1xf32>
    %319 = vector.shape_cast %314 : vector<8x1xf32> to vector<8x1xf32>
    %320 = vector.broadcast %319 : vector<8x1xf32> to vector<8x32xf32>
    %321 = vector.shape_cast %318 : vector<8x1xf32> to vector<8x1xf32>
    %322 = vector.broadcast %321 : vector<8x1xf32> to vector<8x32xf32>
    %323 = arith.select %6, %320, %322 : vector<8x32xi1>, vector<8x32xf32>
    %cst_140 = arith.constant 6.250000e-02 : f32
    %324 = vector.broadcast %cst_140 : f32 to vector<8x32xf32>
    %325 = arith.mulf %323, %324 : vector<8x32xf32>
    %cst_141 = arith.constant 9.99999974E-6 : f32
    %326 = vector.broadcast %cst_141 : f32 to vector<8x32xf32>
    %327 = arith.addf %325, %326 : vector<8x32xf32>
    %328 = math.rsqrt %327 : vector<8x32xf32>
    %329 = arith.mulf %309, %328 : vector<8x32xf32>
    %330 = vector.broadcast %291 : vector<1x32xf32> to vector<8x32xf32>
    %331 = arith.mulf %329, %330 : vector<8x32xf32>
    %332 = vector.broadcast %293 : vector<1x32xf32> to vector<8x32xf32>
    %333 = arith.addf %331, %332 : vector<8x32xf32>
    %c1_142 = arith.constant 1 : index
    %c0_143 = arith.constant 0 : index
    %c0_144 = arith.constant 0 : index
    %334 = vector.load %arg7[%c1_142, %c0_143, %c0_144] : memref<2x32x128xf32, #tpu.memory_space<vmem>>, vector<1x32x128xf32>
    %335 = vector.shape_cast %334 : vector<1x32x128xf32> to vector<32x128xf32>
    %cst_145 = arith.constant dense<0.000000e+00> : vector<8x128xf32>
    %336 = tpu.matmul %333, %335, %cst_145 {dimension_numbers = #tpu.dot_dimension_numbers<[1], [0], [0], [1], [0, 0, 1, 1], [], []>} : vector<8x32xf32>, vector<32x128xf32>, vector<8x128xf32> -> vector<8x128xf32>
    %c1_146 = arith.constant 1 : index
    %c0_147 = arith.constant 0 : index
    %c0_148 = arith.constant 0 : index
    %337 = vector.load %arg8[%c1_146, %c0_147, %c0_148] : memref<2x1x128xf32, #tpu.memory_space<vmem>>, vector<1x1x128xf32>
    %338 = vector.shape_cast %337 : vector<1x1x128xf32> to vector<1x128xf32>
    %339 = vector.broadcast %338 : vector<1x128xf32> to vector<8x128xf32>
    %340 = arith.addf %336, %339 : vector<8x128xf32>
    %cst_149 = arith.constant 0.000000e+00 : f32
    %341 = vector.broadcast %cst_149 : f32 to vector<8x128xf32>
    %342 = arith.maximumf %340, %341 : vector<8x128xf32>
    %c1_150 = arith.constant 1 : index
    %c0_151 = arith.constant 0 : index
    %c0_152 = arith.constant 0 : index
    %343 = vector.load %arg9[%c1_150, %c0_151, %c0_152] : memref<2x128x32xf32, #tpu.memory_space<vmem>>, vector<1x128x32xf32>
    %344 = vector.shape_cast %343 : vector<1x128x32xf32> to vector<128x32xf32>
    %cst_153 = arith.constant dense<0.000000e+00> : vector<8x32xf32>
    %345 = tpu.matmul %342, %344, %cst_153 {dimension_numbers = #tpu.dot_dimension_numbers<[1], [0], [0], [1], [0, 0, 1, 1], [], []>} : vector<8x128xf32>, vector<128x32xf32>, vector<8x32xf32> -> vector<8x32xf32>
    %c1_154 = arith.constant 1 : index
    %c0_155 = arith.constant 0 : index
    %c0_156 = arith.constant 0 : index
    %346 = vector.load %arg10[%c1_154, %c0_155, %c0_156] : memref<2x1x32xf32, #tpu.memory_space<vmem>>, vector<1x1x32xf32>
    %347 = vector.shape_cast %346 : vector<1x1x32xf32> to vector<1x32xf32>
    %348 = vector.broadcast %347 : vector<1x32xf32> to vector<8x32xf32>
    %349 = arith.addf %345, %348 : vector<8x32xf32>
    %350 = arith.addf %333, %349 : vector<8x32xf32>
    %c1_157 = arith.constant 1 : index
    %c0_158 = arith.constant 0 : index
    %c0_159 = arith.constant 0 : index
    %351 = vector.load %arg13[%c1_157, %c0_158, %c0_159] : memref<2x1x32xf32, #tpu.memory_space<vmem>>, vector<1x1x32xf32>
    %352 = vector.shape_cast %351 : vector<1x1x32xf32> to vector<1x32xf32>
    %c1_160 = arith.constant 1 : index
    %c0_161 = arith.constant 0 : index
    %c0_162 = arith.constant 0 : index
    %353 = vector.load %arg14[%c1_160, %c0_161, %c0_162] : memref<2x1x32xf32, #tpu.memory_space<vmem>>, vector<1x1x32xf32>
    %354 = vector.shape_cast %353 : vector<1x1x32xf32> to vector<1x32xf32>
    %cst_163 = arith.constant 0.000000e+00 : f32
    %355 = vector.broadcast %cst_163 : f32 to vector<8x32xf32>
    %356 = arith.select %6, %350, %355 : vector<8x32xi1>, vector<8x32xf32>
    %cst_164 = arith.constant dense<0.000000e+00> : vector<8xf32>
    %357 = vector.multi_reduction <add>, %356, %cst_164 [1] : vector<8x32xf32> to vector<8xf32>
    %358 = vector.shape_cast %357 : vector<8xf32> to vector<8x1xf32>
    %cst_165 = arith.constant 0.000000e+00 : f32
    %359 = vector.broadcast %cst_165 : f32 to vector<8x32xf32>
    %360 = arith.select %6, %359, %350 : vector<8x32xi1>, vector<8x32xf32>
    %cst_166 = arith.constant dense<0.000000e+00> : vector<8xf32>
    %361 = vector.multi_reduction <add>, %360, %cst_166 [1] : vector<8x32xf32> to vector<8xf32>
    %362 = vector.shape_cast %361 : vector<8xf32> to vector<8x1xf32>
    %363 = vector.shape_cast %358 : vector<8x1xf32> to vector<8x1xf32>
    %364 = vector.broadcast %363 : vector<8x1xf32> to vector<8x32xf32>
    %365 = vector.shape_cast %362 : vector<8x1xf32> to vector<8x1xf32>
    %366 = vector.broadcast %365 : vector<8x1xf32> to vector<8x32xf32>
    %367 = arith.select %6, %364, %366 : vector<8x32xi1>, vector<8x32xf32>
    %cst_167 = arith.constant 6.250000e-02 : f32
    %368 = vector.broadcast %cst_167 : f32 to vector<8x32xf32>
    %369 = arith.mulf %367, %368 : vector<8x32xf32>
    %370 = arith.subf %350, %369 : vector<8x32xf32>
    %371 = arith.mulf %370, %370 : vector<8x32xf32>
    %cst_168 = arith.constant 0.000000e+00 : f32
    %372 = vector.broadcast %cst_168 : f32 to vector<8x32xf32>
    %373 = arith.select %6, %371, %372 : vector<8x32xi1>, vector<8x32xf32>
    %cst_169 = arith.constant dense<0.000000e+00> : vector<8xf32>
    %374 = vector.multi_reduction <add>, %373, %cst_169 [1] : vector<8x32xf32> to vector<8xf32>
    %375 = vector.shape_cast %374 : vector<8xf32> to vector<8x1xf32>
    %cst_170 = arith.constant 0.000000e+00 : f32
    %376 = vector.broadcast %cst_170 : f32 to vector<8x32xf32>
    %377 = arith.select %6, %376, %371 : vector<8x32xi1>, vector<8x32xf32>
    %cst_171 = arith.constant dense<0.000000e+00> : vector<8xf32>
    %378 = vector.multi_reduction <add>, %377, %cst_171 [1] : vector<8x32xf32> to vector<8xf32>
    %379 = vector.shape_cast %378 : vector<8xf32> to vector<8x1xf32>
    %380 = vector.shape_cast %375 : vector<8x1xf32> to vector<8x1xf32>
    %381 = vector.broadcast %380 : vector<8x1xf32> to vector<8x32xf32>
    %382 = vector.shape_cast %379 : vector<8x1xf32> to vector<8x1xf32>
    %383 = vector.broadcast %382 : vector<8x1xf32> to vector<8x32xf32>
    %384 = arith.select %6, %381, %383 : vector<8x32xi1>, vector<8x32xf32>
    %cst_172 = arith.constant 6.250000e-02 : f32
    %385 = vector.broadcast %cst_172 : f32 to vector<8x32xf32>
    %386 = arith.mulf %384, %385 : vector<8x32xf32>
    %cst_173 = arith.constant 9.99999974E-6 : f32
    %387 = vector.broadcast %cst_173 : f32 to vector<8x32xf32>
    %388 = arith.addf %386, %387 : vector<8x32xf32>
    %389 = math.rsqrt %388 : vector<8x32xf32>
    %390 = arith.mulf %370, %389 : vector<8x32xf32>
    %391 = vector.broadcast %352 : vector<1x32xf32> to vector<8x32xf32>
    %392 = arith.mulf %390, %391 : vector<8x32xf32>
    %393 = vector.broadcast %354 : vector<1x32xf32> to vector<8x32xf32>
    %394 = arith.addf %392, %393 : vector<8x32xf32>
    %c0_174 = arith.constant 0 : index
    %c0_175 = arith.constant 0 : index
    %395 = vector.load %arg15[%c0_174, %c0_175] : memref<32x16xf32, #tpu.memory_space<vmem>>, vector<32x16xf32>
    %cst_176 = arith.constant dense<0.000000e+00> : vector<8x16xf32>
    %396 = tpu.matmul %394, %395, %cst_176 {dimension_numbers = #tpu.dot_dimension_numbers<[1], [0], [0], [1], [0, 0, 1, 1], [], []>} : vector<8x32xf32>, vector<32x16xf32>, vector<8x16xf32> -> vector<8x16xf32>
    %c0_177 = arith.constant 0 : index
    %c0_178 = arith.constant 0 : index
    %397 = vector.load %arg16[%c0_177, %c0_178] : memref<1x16xf32, #tpu.memory_space<vmem>>, vector<1x16xf32>
    %398 = vector.broadcast %397 : vector<1x16xf32> to vector<8x16xf32>
    %399 = arith.addf %396, %398 : vector<8x16xf32>
    %cst_179 = arith.constant 0.000000e+00 : f32
    %400 = vector.broadcast %cst_179 : f32 to vector<8x16xf32>
    %401 = arith.maximumf %399, %400 : vector<8x16xf32>
    %c0_180 = arith.constant 0 : index
    %c0_181 = arith.constant 0 : index
    %402 = vector.load %arg17[%c0_180, %c0_181] : memref<16x1xf32, #tpu.memory_space<vmem>>, vector<16x1xf32>
    %cst_182 = arith.constant dense<0.000000e+00> : vector<8x1xf32>
    %403 = tpu.matmul %401, %402, %cst_182 {dimension_numbers = #tpu.dot_dimension_numbers<[1], [0], [0], [1], [0, 0, 1, 1], [], []>} : vector<8x16xf32>, vector<16x1xf32>, vector<8x1xf32> -> vector<8x1xf32>
    %c0_183 = arith.constant 0 : index
    %c0_184 = arith.constant 0 : index
    %404 = vector.load %arg18[%c0_183, %c0_184] : memref<1x1xf32, #tpu.memory_space<vmem>>, vector<1x1xf32>
    %405 = vector.broadcast %404 : vector<1x1xf32> to vector<8x1xf32>
    %406 = arith.addf %403, %405 : vector<8x1xf32>
    %c0_185 = arith.constant 0 : index
    %c0_186 = arith.constant 0 : index
    %c0_187 = arith.constant 0 : index
    %407 = vector.load %arg19[%c0_185, %c0_186, %c0_187] : memref<1x8x1xf32, #tpu.memory_space<vmem>>, vector<1x8x1xf32>
    %408 = vector.shape_cast %407 : vector<1x8x1xf32> to vector<8x1xf32>
    %409 = vector.shape_cast %406 : vector<8x1xf32> to vector<1x8x1xf32>
    tpu.vector_store %arg19[%c0_185, %c0_186, %c0_187], %409 {strides = array<i32>} : memref<1x8x1xf32, #tpu.memory_space<vmem>>, vector<1x8x1xf32>,
    return
  }
  func.func @transform_0(%arg0: i32) -> (i32, i32, i32) {
    %c0_i32 = arith.constant 0 : i32
    %c0_i32_0 = arith.constant 0 : i32
    %c0_i32_1 = arith.constant 0 : i32
    return %arg0, %c0_i32, %c0_i32_0 : i32, i32, i32
  }
  func.func @transform_1(%arg0: i32) -> (i32, i32) {
    %c0_i32 = arith.constant 0 : i32
    %c0_i32_0 = arith.constant 0 : i32
    %c0_i32_1 = arith.constant 0 : i32
    return %c0_i32, %c0_i32_0 : i32, i32
  }
  func.func @transform_2(%arg0: i32) -> (i32, i32, i32) {
    %c0_i32 = arith.constant 0 : i32
    %c0_i32_0 = arith.constant 0 : i32
    %c0_i32_1 = arith.constant 0 : i32
    %c0_i32_2 = arith.constant 0 : i32
    return %c0_i32, %c0_i32_0, %c0_i32_1 : i32, i32, i32
  }
  func.func @transform_3(%arg0: i32) -> (i32, i32, i32) {
    %c0_i32 = arith.constant 0 : i32
    %c0_i32_0 = arith.constant 0 : i32
    %c0_i32_1 = arith.constant 0 : i32
    %c0_i32_2 = arith.constant 0 : i32
    return %c0_i32, %c0_i32_0, %c0_i32_1 : i32, i32, i32
  }
  func.func @transform_4(%arg0: i32) -> (i32, i32, i32) {
    %c0_i32 = arith.constant 0 : i32
    %c0_i32_0 = arith.constant 0 : i32
    %c0_i32_1 = arith.constant 0 : i32
    %c0_i32_2 = arith.constant 0 : i32
    return %c0_i32, %c0_i32_0, %c0_i32_1 : i32, i32, i32
  }
  func.func @transform_5(%arg0: i32) -> (i32, i32, i32) {
    %c0_i32 = arith.constant 0 : i32
    %c0_i32_0 = arith.constant 0 : i32
    %c0_i32_1 = arith.constant 0 : i32
    %c0_i32_2 = arith.constant 0 : i32
    return %c0_i32, %c0_i32_0, %c0_i32_1 : i32, i32, i32
  }
  func.func @transform_6(%arg0: i32) -> (i32, i32, i32) {
    %c0_i32 = arith.constant 0 : i32
    %c0_i32_0 = arith.constant 0 : i32
    %c0_i32_1 = arith.constant 0 : i32
    %c0_i32_2 = arith.constant 0 : i32
    return %c0_i32, %c0_i32_0, %c0_i32_1 : i32, i32, i32
  }
  func.func @transform_7(%arg0: i32) -> (i32, i32, i32) {
    %c0_i32 = arith.constant 0 : i32
    %c0_i32_0 = arith.constant 0 : i32
    %c0_i32_1 = arith.constant 0 : i32
    %c0_i32_2 = arith.constant 0 : i32
    return %c0_i32, %c0_i32_0, %c0_i32_1 : i32, i32, i32
  }
  func.func @transform_8(%arg0: i32) -> (i32, i32, i32) {
    %c0_i32 = arith.constant 0 : i32
    %c0_i32_0 = arith.constant 0 : i32
    %c0_i32_1 = arith.constant 0 : i32
    %c0_i32_2 = arith.constant 0 : i32
    return %c0_i32, %c0_i32_0, %c0_i32_1 : i32, i32, i32
  }
  func.func @transform_9(%arg0: i32) -> (i32, i32, i32) {
    %c0_i32 = arith.constant 0 : i32
    %c0_i32_0 = arith.constant 0 : i32
    %c0_i32_1 = arith.constant 0 : i32
    %c0_i32_2 = arith.constant 0 : i32
    return %c0_i32, %c0_i32_0, %c0_i32_1 : i32, i32, i32
  }
  func.func @transform_10(%arg0: i32) -> (i32, i32, i32) {
    %c0_i32 = arith.constant 0 : i32
    %c0_i32_0 = arith.constant 0 : i32
    %c0_i32_1 = arith.constant 0 : i32
    %c0_i32_2 = arith.constant 0 : i32
    return %c0_i32, %c0_i32_0, %c0_i32_1 : i32, i32, i32
  }
  func.func @transform_11(%arg0: i32) -> (i32, i32, i32) {
    %c0_i32 = arith.constant 0 : i32
    %c0_i32_0 = arith.constant 0 : i32
    %c0_i32_1 = arith.constant 0 : i32
    %c0_i32_2 = arith.constant 0 : i32
    return %c0_i32, %c0_i32_0, %c0_i32_1 : i32, i32, i32
  }
  func.func @transform_12(%arg0: i32) -> (i32, i32, i32) {
    %c0_i32 = arith.constant 0 : i32
    %c0_i32_0 = arith.constant 0 : i32
    %c0_i32_1 = arith.constant 0 : i32
    %c0_i32_2 = arith.constant 0 : i32
    return %c0_i32, %c0_i32_0, %c0_i32_1 : i32, i32, i32
  }
  func.func @transform_13(%arg0: i32) -> (i32, i32, i32) {
    %c0_i32 = arith.constant 0 : i32
    %c0_i32_0 = arith.constant 0 : i32
    %c0_i32_1 = arith.constant 0 : i32
    %c0_i32_2 = arith.constant 0 : i32
    return %c0_i32, %c0_i32_0, %c0_i32_1 : i32, i32, i32
  }
  func.func @transform_14(%arg0: i32) -> (i32, i32) {
    %c0_i32 = arith.constant 0 : i32
    %c0_i32_0 = arith.constant 0 : i32
    %c0_i32_1 = arith.constant 0 : i32
    return %c0_i32, %c0_i32_0 : i32, i32
  }
  func.func @transform_15(%arg0: i32) -> (i32, i32) {
    %c0_i32 = arith.constant 0 : i32
    %c0_i32_0 = arith.constant 0 : i32
    %c0_i32_1 = arith.constant 0 : i32
    return %c0_i32, %c0_i32_0 : i32, i32
  }
  func.func @transform_16(%arg0: i32) -> (i32, i32) {
    %c0_i32 = arith.constant 0 : i32
    %c0_i32_0 = arith.constant 0 : i32
    %c0_i32_1 = arith.constant 0 : i32
    return %c0_i32, %c0_i32_0 : i32, i32
  }
  func.func @transform_17(%arg0: i32) -> (i32, i32) {
    %c0_i32 = arith.constant 0 : i32
    %c0_i32_0 = arith.constant 0 : i32
    %c0_i32_1 = arith.constant 0 : i32
    return %c0_i32, %c0_i32_0 : i32, i32
  }
  func.func @transform_18(%arg0: i32) -> (i32, i32, i32) {
    %c0_i32 = arith.constant 0 : i32
    %c0_i32_0 = arith.constant 0 : i32
    %c0_i32_1 = arith.constant 0 : i32
    return %arg0, %c0_i32, %c0_i32_0 : i32, i32, i32
  }
}

</mosaic_0001>

<llo_original>
// kernel: multibert_forward.1
$region0: #{multibert_forward.1}
  #allocation0 [shape = 'u32[]', space=smem, size = 0x4, offset = 0x4, fixed_abs, tag = 'smem constant byte address 0x4 - core index']
  #allocation1 [shape = 'u32[144,128]{1,0:T(1,128)}', space=vmem, size = 0x12000, scoped, tag = 'internal scratch']
  #allocation2 [shape = 'f32[1,1]{1,0:T(1,128)S(1)}', space=vmem, size = 0x200, scoped, tag = 'scoped memory for multibert_forward.1']
  %s0 = inlined_call_operand.vmem [shape: f32[2,8,32], index: 0, kind: input, shape index: {}]
  %s1 = inlined_call_operand.vmem [shape: f32[8,32], index: 1, kind: input, shape index: {}]
  %s2 = inlined_call_operand.vmem [shape: f32[2,32,96], index: 2, kind: input, shape index: {}]
  %s3 = inlined_call_operand.vmem [shape: f32[2,1,96], index: 3, kind: input, shape index: {}]
  %s4 = inlined_call_operand.vmem [shape: f32[2,32,32], index: 4, kind: input, shape index: {}]
  %s5 = inlined_call_operand.vmem [shape: f32[2,1,32], index: 5, kind: input, shape index: {}]
  %s6 = inlined_call_operand.vmem [shape: f32[2,32,128], index: 6, kind: input, shape index: {}]
  %s7 = inlined_call_operand.vmem [shape: f32[2,1,128], index: 7, kind: input, shape index: {}]
  %s8 = inlined_call_operand.vmem [shape: f32[2,128,32], index: 8, kind: input, shape index: {}]
  %s9 = inlined_call_operand.vmem [shape: f32[2,1,32], index: 9, kind: input, shape index: {}]
  %s10 = inlined_call_operand.vmem [shape: f32[2,1,32], index: 10, kind: input, shape index: {}]
  %s11 = inlined_call_operand.vmem [shape: f32[2,1,32], index: 11, kind: input, shape index: {}]
  %s12 = inlined_call_operand.vmem [shape: f32[2,1,32], index: 12, kind: input, shape index: {}]
  %s13 = inlined_call_operand.vmem [shape: f32[2,1,32], index: 13, kind: input, shape index: {}]
  %s14 = inlined_call_operand.vmem [shape: f32[32,16], index: 14, kind: input, shape index: {}]
  %s15 = inlined_call_operand.vmem [shape: f32[1,16], index: 15, kind: input, shape index: {}]
  %s16 = inlined_call_operand.vmem [shape: f32[16,1], index: 16, kind: input, shape index: {}]
  %s17 = inlined_call_operand.<no memory space> [shape: f32[1,1], index: 17, kind: input, shape index: {}]
  %s18 = inlined_call_operand.vmem [shape: f32[2,8,1], index: 18, kind: output, shape index: {}]
  %s19 = sld [smem:[#allocation0]]
  $region105: #{multibert_forward.1} parent=0
    _
  %s21 = ssub.s32 1, %s19
  %s22 = scalar_select 0, %s21, %s19
  %v23 = vstv %s17
  %24 = vst [vmem:[#allocation2] sm:$0x1] %v23
  loop: start=0, step=1, limit=4
  $region2: #{multibert_forward.1} parent=0 // loop_pre_header
    _
  $region3: #{multibert_forward.1} parent=0 // loop_header
    %s26 = sphi 0, %s30
    %p27 = scmp.ge.s32.totalorder %s26, 4
    %s36 = sphi 0, %s38
    %s39 = sphi 0, %s36
    %s40 = sphi 0, %s39
    %s56 = sphi 0, %s40
    %s60 = sphi 0, %s60
    %s62 = sphi 0, %s60
    %s63 = sphi 0, %s62
    %s77 = sphi 0, %s63
    %s81 = sphi 0, %s81
    %s83 = sphi 0, %s81
    %s84 = sphi 0, %s83
    %s98 = sphi 0, %s84
    %s102 = sphi 0, %s102
    %s104 = sphi 0, %s102
    %s105 = sphi 0, %s104
    %s119 = sphi 0, %s105
    %s123 = sphi 0, %s123
    %s125 = sphi 0, %s123
    %s126 = sphi 0, %s125
    %s140 = sphi 0, %s126
    %s144 = sphi 0, %s144
    %s146 = sphi 0, %s144
    %s147 = sphi 0, %s146
    %s161 = sphi 0, %s147
    %s165 = sphi 0, %s165
    %s167 = sphi 0, %s165
    %s168 = sphi 0, %s167
    %s182 = sphi 0, %s168
    %s186 = sphi 0, %s186
    %s188 = sphi 0, %s186
    %s189 = sphi 0, %s188
    %s203 = sphi 0, %s189
    %s207 = sphi 0, %s207
    %s209 = sphi 0, %s207
    %s210 = sphi 0, %s209
    %s224 = sphi 0, %s210
    %s228 = sphi 0, %s228
    %s230 = sphi 0, %s228
    %s231 = sphi 0, %s230
    %s245 = sphi 0, %s231
    %s249 = sphi 0, %s249
    %s251 = sphi 0, %s249
    %s252 = sphi 0, %s251
    %s266 = sphi 0, %s252
    %s270 = sphi 0, %s270
    %s272 = sphi 0, %s270
    %s273 = sphi 0, %s272
    %s287 = sphi 0, %s273
    %s291 = sphi 0, %s291
    %s293 = sphi 0, %s291
    %s294 = sphi 0, %s293
    %s308 = sphi 0, %s294
    %s312 = sphi 0, %s312
    %s314 = sphi 0, %s312
    %s315 = sphi 0, %s314
    %s329 = sphi 0, %s315
    %s333 = sphi 0, %s333
    %s335 = sphi 0, %s333
    %s336 = sphi 0, %s335
    %s350 = sphi 0, %s336
    %s354 = sphi 0, %s354
    %s356 = sphi 0, %s354
    %s357 = sphi 0, %s356
    %s371 = sphi 0, %s357
    %s375 = sphi 0, %s375
    %s377 = sphi 0, %s375
    %s378 = sphi 0, %s377
    %s392 = sphi 0, %s378
    %s396 = sphi 0, %s396
    %s398 = sphi 0, %s396
    %s399 = sphi 0, %s398
    %s413 = sphi 0, %s399
    %s419 = sphi 0, %s421
    %s422 = sphi 0, %s419
    %s423 = sphi 0, %s422
    %s439 = sphi 0, %s423
  $region4: #{multibert_forward.1} parent=0 // loop_header_branch
    %29 = sbr.rel (%p27) target = $region8
  $region5: #{multibert_forward.1} parent=0 // loop_body
    %s31 = ssub.s32 %s26, 1
    %s32 = ssub.s32 %s26, 2
    %s33 = sadd.s32 %s26, 1
    %s34 = ssub.s32 %s26, %s33
    %p35 = scmp.eq.s32.totalorder %s34, 0
    %s37 = sadd.s32 %s36, 1
    %s38 = scalar_select %p35, %s36, %s37
    %p41 = pneg %p35
    %p42 = scmp.eq.s32.totalorder %s26, 1
    %p43 = por %p41, %p42
    %p44 = scmp.ne.s32.totalorder %s36, %s39
    %p45 = scmp.eq.s32.totalorder %s26, 0
    %p46 = por %p44, %p45
    %p47 = scmp.ne.s32.totalorder %s36, %s39
    %p48 = scmp.eq.s32.totalorder %s31, 1
    %p49 = por %p47, %p48
    %p50 = scmp.ne.s32.totalorder %s39, %s40
    %p51 = scmp.eq.s32.totalorder %s31, 0
    %p52 = por %p50, %p51
    %p53 = scmp.ne.s32.totalorder %s39, %s40
    %p54 = scmp.eq.s32.totalorder %s32, 1
    %p55 = por %p53, %p54
    %p57 = scmp.ne.s32.totalorder %s40, %s56
    %p58 = scmp.eq.s32.totalorder %s32, 0
    %p59 = por %p57, %p58
    %s61 = sadd.s32 %s60, 1
    %p64 = scmp.eq.s32.totalorder %s26, 1
    %p65 = scmp.ne.s32.totalorder %s60, %s62
    %p66 = scmp.eq.s32.totalorder %s26, 0
    %p67 = por %p65, %p66
    %p68 = scmp.ne.s32.totalorder %s60, %s62
    %p69 = scmp.eq.s32.totalorder %s31, 1
    %p70 = por %p68, %p69
    %p71 = scmp.ne.s32.totalorder %s62, %s63
    %p72 = scmp.eq.s32.totalorder %s31, 0
    %p73 = por %p71, %p72
    %p74 = scmp.ne.s32.totalorder %s62, %s63
    %p75 = scmp.eq.s32.totalorder %s32, 1
    %p76 = por %p74, %p75
    %p78 = scmp.ne.s32.totalorder %s63, %s77
    %p79 = scmp.eq.s32.totalorder %s32, 0
    %p80 = por %p78, %p79
    %s82 = sadd.s32 %s81, 1
    %p85 = scmp.eq.s32.totalorder %s26, 1
    %p86 = scmp.ne.s32.totalorder %s81, %s83
    %p87 = scmp.eq.s32.totalorder %s26, 0
    %p88 = por %p86, %p87
    %p89 = scmp.ne.s32.totalorder %s81, %s83
    %p90 = scmp.eq.s32.totalorder %s31, 1
    %p91 = por %p89, %p90
    %p92 = scmp.ne.s32.totalorder %s83, %s84
    %p93 = scmp.eq.s32.totalorder %s31, 0
    %p94 = por %p92, %p93
    %p95 = scmp.ne.s32.totalorder %s83, %s84
    %p96 = scmp.eq.s32.totalorder %s32, 1
    %p97 = por %p95, %p96
    %p99 = scmp.ne.s32.totalorder %s84, %s98
    %p100 = scmp.eq.s32.totalorder %s32, 0
    %p101 = por %p99, %p100
    %s103 = sadd.s32 %s102, 1
    %p106 = scmp.eq.s32.totalorder %s26, 1
    %p107 = scmp.ne.s32.totalorder %s102, %s104
    %p108 = scmp.eq.s32.totalorder %s26, 0
    %p109 = por %p107, %p108
    %p110 = scmp.ne.s32.totalorder %s102, %s104
    %p111 = scmp.eq.s32.totalorder %s31, 1
    %p112 = por %p110, %p111
    %p113 = scmp.ne.s32.totalorder %s104, %s105
    %p114 = scmp.eq.s32.totalorder %s31, 0
    %p115 = por %p113, %p114
    %p116 = scmp.ne.s32.totalorder %s104, %s105
    %p117 = scmp.eq.s32.totalorder %s32, 1
    %p118 = por %p116, %p117
    %p120 = scmp.ne.s32.totalorder %s105, %s119
    %p121 = scmp.eq.s32.totalorder %s32, 0
    %p122 = por %p120, %p121
    %s124 = sadd.s32 %s123, 1
    %p127 = scmp.eq.s32.totalorder %s26, 1
    %p128 = scmp.ne.s32.totalorder %s123, %s125
    %p129 = scmp.eq.s32.totalorder %s26, 0
    %p130 = por %p128, %p129
    %p131 = scmp.ne.s32.totalorder %s123, %s125
    %p132 = scmp.eq.s32.totalorder %s31, 1
    %p133 = por %p131, %p132
    %p134 = scmp.ne.s32.totalorder %s125, %s126
    %p135 = scmp.eq.s32.totalorder %s31, 0
    %p136 = por %p134, %p135
    %p137 = scmp.ne.s32.totalorder %s125, %s126
    %p138 = scmp.eq.s32.totalorder %s32, 1
    %p139 = por %p137, %p138
    %p141 = scmp.ne.s32.totalorder %s126, %s140
    %p142 = scmp.eq.s32.totalorder %s32, 0
    %p143 = por %p141, %p142
    %s145 = sadd.s32 %s144, 1
    %p148 = scmp.eq.s32.totalorder %s26, 1
    %p149 = scmp.ne.s32.totalorder %s144, %s146
    %p150 = scmp.eq.s32.totalorder %s26, 0
    %p151 = por %p149, %p150
    %p152 = scmp.ne.s32.totalorder %s144, %s146
    %p153 = scmp.eq.s32.totalorder %s31, 1
    %p154 = por %p152, %p153
    %p155 = scmp.ne.s32.totalorder %s146, %s147
    %p156 = scmp.eq.s32.totalorder %s31, 0
    %p157 = por %p155, %p156
    %p158 = scmp.ne.s32.totalorder %s146, %s147
    %p159 = scmp.eq.s32.totalorder %s32, 1
    %p160 = por %p158, %p159
    %p162 = scmp.ne.s32.totalorder %s147, %s161
    %p163 = scmp.eq.s32.totalorder %s32, 0
    %p164 = por %p162, %p163
    %s166 = sadd.s32 %s165, 1
    %p169 = scmp.eq.s32.totalorder %s26, 1
    %p170 = scmp.ne.s32.totalorder %s165, %s167
    %p171 = scmp.eq.s32.totalorder %s26, 0
    %p172 = por %p170, %p171
    %p173 = scmp.ne.s32.totalorder %s165, %s167
    %p174 = scmp.eq.s32.totalorder %s31, 1
    %p175 = por %p173, %p174
    %p176 = scmp.ne.s32.totalorder %s167, %s168
    %p177 = scmp.eq.s32.totalorder %s31, 0
    %p178 = por %p176, %p177
    %p179 = scmp.ne.s32.totalorder %s167, %s168
    %p180 = scmp.eq.s32.totalorder %s32, 1
    %p181 = por %p179, %p180
    %p183 = scmp.ne.s32.totalorder %s168, %s182
    %p184 = scmp.eq.s32.totalorder %s32, 0
    %p185 = por %p183, %p184
    %s187 = sadd.s32 %s186, 1
    %p190 = scmp.eq.s32.totalorder %s26, 1
    %p191 = scmp.ne.s32.totalorder %s186, %s188
    %p192 = scmp.eq.s32.totalorder %s26, 0
    %p193 = por %p191, %p192
    %p194 = scmp.ne.s32.totalorder %s186, %s188
    %p195 = scmp.eq.s32.totalorder %s31, 1
    %p196 = por %p194, %p195
    %p197 = scmp.ne.s32.totalorder %s188, %s189
    %p198 = scmp.eq.s32.totalorder %s31, 0
    %p199 = por %p197, %p198
    %p200 = scmp.ne.s32.totalorder %s188, %s189
    %p201 = scmp.eq.s32.totalorder %s32, 1
    %p202 = por %p200, %p201
    %p204 = scmp.ne.s32.totalorder %s189, %s203
    %p205 = scmp.eq.s32.totalorder %s32, 0
    %p206 = por %p204, %p205
    %s208 = sadd.s32 %s207, 1
    %p211 = scmp.eq.s32.totalorder %s26, 1
    %p212 = scmp.ne.s32.totalorder %s207, %s209
    %p213 = scmp.eq.s32.totalorder %s26, 0
    %p214 = por %p212, %p213
    %p215 = scmp.ne.s32.totalorder %s207, %s209
    %p216 = scmp.eq.s32.totalorder %s31, 1
    %p217 = por %p215, %p216
    %p218 = scmp.ne.s32.totalorder %s209, %s210
    %p219 = scmp.eq.s32.totalorder %s31, 0
    %p220 = por %p218, %p219
    %p221 = scmp.ne.s32.totalorder %s209, %s210
    %p222 = scmp.eq.s32.totalorder %s32, 1
    %p223 = por %p221, %p222
    %p225 = scmp.ne.s32.totalorder %s210, %s224
    %p226 = scmp.eq.s32.totalorder %s32, 0
    %p227 = por %p225, %p226
    %s229 = sadd.s32 %s228, 1
    %p232 = scmp.eq.s32.totalorder %s26, 1
    %p233 = scmp.ne.s32.totalorder %s228, %s230
    %p234 = scmp.eq.s32.totalorder %s26, 0
    %p235 = por %p233, %p234
    %p236 = scmp.ne.s32.totalorder %s228, %s230
    %p237 = scmp.eq.s32.totalorder %s31, 1
    %p238 = por %p236, %p237
    %p239 = scmp.ne.s32.totalorder %s230, %s231
    %p240 = scmp.eq.s32.totalorder %s31, 0
    %p241 = por %p239, %p240
    %p242 = scmp.ne.s32.totalorder %s230, %s231
    %p243 = scmp.eq.s32.totalorder %s32, 1
    %p244 = por %p242, %p243
    %p246 = scmp.ne.s32.totalorder %s231, %s245
    %p247 = scmp.eq.s32.totalorder %s32, 0
    %p248 = por %p246, %p247
    %s250 = sadd.s32 %s249, 1
    %p253 = scmp.eq.s32.totalorder %s26, 1
    %p254 = scmp.ne.s32.totalorder %s249, %s251
    %p255 = scmp.eq.s32.totalorder %s26, 0
    %p256 = por %p254, %p255
    %p257 = scmp.ne.s32.totalorder %s249, %s251
    %p258 = scmp.eq.s32.totalorder %s31, 1
    %p259 = por %p257, %p258
    %p260 = scmp.ne.s32.totalorder %s251, %s252
    %p261 = scmp.eq.s32.totalorder %s31, 0
    %p262 = por %p260, %p261
    %p263 = scmp.ne.s32.totalorder %s251, %s252
    %p264 = scmp.eq.s32.totalorder %s32, 1
    %p265 = por %p263, %p264
    %p267 = scmp.ne.s32.totalorder %s252, %s266
    %p268 = scmp.eq.s32.totalorder %s32, 0
    %p269 = por %p267, %p268
    %s271 = sadd.s32 %s270, 1
    %p274 = scmp.eq.s32.totalorder %s26, 1
    %p275 = scmp.ne.s32.totalorder %s270, %s272
    %p276 = scmp.eq.s32.totalorder %s26, 0
    %p277 = por %p275, %p276
    %p278 = scmp.ne.s32.totalorder %s270, %s272
    %p279 = scmp.eq.s32.totalorder %s31, 1
    %p280 = por %p278, %p279
    %p281 = scmp.ne.s32.totalorder %s272, %s273
    %p282 = scmp.eq.s32.totalorder %s31, 0
    %p283 = por %p281, %p282
    %p284 = scmp.ne.s32.totalorder %s272, %s273
    %p285 = scmp.eq.s32.totalorder %s32, 1
    %p286 = por %p284, %p285
    %p288 = scmp.ne.s32.totalorder %s273, %s287
    %p289 = scmp.eq.s32.totalorder %s32, 0
    %p290 = por %p288, %p289
    %s292 = sadd.s32 %s291, 1
    %p295 = scmp.eq.s32.totalorder %s26, 1
    %p296 = scmp.ne.s32.totalorder %s291, %s293
    %p297 = scmp.eq.s32.totalorder %s26, 0
    %p298 = por %p296, %p297
    %p299 = scmp.ne.s32.totalorder %s291, %s293
    %p300 = scmp.eq.s32.totalorder %s31, 1
    %p301 = por %p299, %p300
    %p302 = scmp.ne.s32.totalorder %s293, %s294
    %p303 = scmp.eq.s32.totalorder %s31, 0
    %p304 = por %p302, %p303
    %p305 = scmp.ne.s32.totalorder %s293, %s294
    %p306 = scmp.eq.s32.totalorder %s32, 1
    %p307 = por %p305, %p306
    %p309 = scmp.ne.s32.totalorder %s294, %s308
    %p310 = scmp.eq.s32.totalorder %s32, 0
    %p311 = por %p309, %p310
    %s313 = sadd.s32 %s312, 1
    %p316 = scmp.eq.s32.totalorder %s26, 1
    %p317 = scmp.ne.s32.totalorder %s312, %s314
    %p318 = scmp.eq.s32.totalorder %s26, 0
    %p319 = por %p317, %p318
    %p320 = scmp.ne.s32.totalorder %s312, %s314
    %p321 = scmp.eq.s32.totalorder %s31, 1
    %p322 = por %p320, %p321
    %p323 = scmp.ne.s32.totalorder %s314, %s315
    %p324 = scmp.eq.s32.totalorder %s31, 0
    %p325 = por %p323, %p324
    %p326 = scmp.ne.s32.totalorder %s314, %s315
    %p327 = scmp.eq.s32.totalorder %s32, 1
    %p328 = por %p326, %p327
    %p330 = scmp.ne.s32.totalorder %s315, %s329
    %p331 = scmp.eq.s32.totalorder %s32, 0
    %p332 = por %p330, %p331
    %s334 = sadd.s32 %s333, 1
    %p337 = scmp.eq.s32.totalorder %s26, 1
    %p338 = scmp.ne.s32.totalorder %s333, %s335
    %p339 = scmp.eq.s32.totalorder %s26, 0
    %p340 = por %p338, %p339
    %p341 = scmp.ne.s32.totalorder %s333, %s335
    %p342 = scmp.eq.s32.totalorder %s31, 1
    %p343 = por %p341, %p342
    %p344 = scmp.ne.s32.totalorder %s335, %s336
    %p345 = scmp.eq.s32.totalorder %s31, 0
    %p346 = por %p344, %p345
    %p347 = scmp.ne.s32.totalorder %s335, %s336
    %p348 = scmp.eq.s32.totalorder %s32, 1
    %p349 = por %p347, %p348
    %p351 = scmp.ne.s32.totalorder %s336, %s350
    %p352 = scmp.eq.s32.totalorder %s32, 0
    %p353 = por %p351, %p352
    %s355 = sadd.s32 %s354, 1
    %p358 = scmp.eq.s32.totalorder %s26, 1
    %p359 = scmp.ne.s32.totalorder %s354, %s356
    %p360 = scmp.eq.s32.totalorder %s26, 0
    %p361 = por %p359, %p360
    %p362 = scmp.ne.s32.totalorder %s354, %s356
    %p363 = scmp.eq.s32.totalorder %s31, 1
    %p364 = por %p362, %p363
    %p365 = scmp.ne.s32.totalorder %s356, %s357
    %p366 = scmp.eq.s32.totalorder %s31, 0
    %p367 = por %p365, %p366
    %p368 = scmp.ne.s32.totalorder %s356, %s357
    %p369 = scmp.eq.s32.totalorder %s32, 1
    %p370 = por %p368, %p369
    %p372 = scmp.ne.s32.totalorder %s357, %s371
    %p373 = scmp.eq.s32.totalorder %s32, 0
    %p374 = por %p372, %p373
    %s376 = sadd.s32 %s375, 1
    %p379 = scmp.eq.s32.totalorder %s26, 1
    %p380 = scmp.ne.s32.totalorder %s375, %s377
    %p381 = scmp.eq.s32.totalorder %s26, 0
    %p382 = por %p380, %p381
    %p383 = scmp.ne.s32.totalorder %s375, %s377
    %p384 = scmp.eq.s32.totalorder %s31, 1
    %p385 = por %p383, %p384
    %p386 = scmp.ne.s32.totalorder %s377, %s378
    %p387 = scmp.eq.s32.totalorder %s31, 0
    %p388 = por %p386, %p387
    %p389 = scmp.ne.s32.totalorder %s377, %s378
    %p390 = scmp.eq.s32.totalorder %s32, 1
    %p391 = por %p389, %p390
    %p393 = scmp.ne.s32.totalorder %s378, %s392
    %p394 = scmp.eq.s32.totalorder %s32, 0
    %p395 = por %p393, %p394
    %s397 = sadd.s32 %s396, 1
    %p400 = scmp.eq.s32.totalorder %s26, 1
    %p401 = scmp.ne.s32.totalorder %s396, %s398
    %p402 = scmp.eq.s32.totalorder %s26, 0
    %p403 = por %p401, %p402
    %p404 = scmp.ne.s32.totalorder %s396, %s398
    %p405 = scmp.eq.s32.totalorder %s31, 1
    %p406 = por %p404, %p405
    %p407 = scmp.ne.s32.totalorder %s398, %s399
    %p408 = scmp.eq.s32.totalorder %s31, 0
    %p409 = por %p407, %p408
    %p410 = scmp.ne.s32.totalorder %s398, %s399
    %p411 = scmp.eq.s32.totalorder %s32, 1
    %p412 = por %p410, %p411
    %p414 = scmp.ne.s32.totalorder %s399, %s413
    %p415 = scmp.eq.s32.totalorder %s32, 0
    %p416 = por %p414, %p415
    %s417 = ssub.s32 %s26, %s33
    %p418 = scmp.eq.s32.totalorder %s417, 0
    %s420 = sadd.s32 %s419, 1
    %s421 = scalar_select %p418, %s419, %s420
    %p424 = pneg %p418
    %p425 = scmp.eq.s32.totalorder %s26, 1
    %p426 = por %p424, %p425
    %p427 = scmp.ne.s32.totalorder %s419, %s422
    %p428 = scmp.eq.s32.totalorder %s26, 0
    %p429 = por %p427, %p428
    %p430 = scmp.ne.s32.totalorder %s419, %s422
    %p431 = scmp.eq.s32.totalorder %s31, 1
    %p432 = por %p430, %p431
    %p433 = scmp.ne.s32.totalorder %s422, %s423
    %p434 = scmp.eq.s32.totalorder %s31, 0
    %p435 = por %p433, %p434
    %p436 = scmp.ne.s32.totalorder %s422, %s423
    %p437 = scmp.eq.s32.totalorder %s32, 1
    %p438 = por %p436, %p437
    %p440 = scmp.ne.s32.totalorder %s423, %s439
    %p441 = scmp.eq.s32.totalorder %s32, 0
    %p442 = por %p440, %p441
    %p443 = scmp.le.s32.totalorder 1, %s26
    %p444 = scmp.lt.s32.totalorder %s26, 3
    %p445 = pnand %p443, %p444
    %p446 = pneg %p445
    // Predicated region
    $region9: #{multibert_forward.1} parent=5 // pred_check
      _
    $region10: #{multibert_forward.1} parent=5 // pred_check_branch
      %448 = sbr.rel (%p445) target = $region12
    $region11: #{multibert_forward.1} parent=5 // pred_region
      %s449 = ssub.s32 %s26, 1
      // Predicated region
      $region13: #{multibert_forward.1} parent=11 // pred_check
        %p450 = pneg %p73
      $region14: #{multibert_forward.1} parent=11 // pred_check_branch
        %452 = sbr.rel (%p450) target = $region16
      $region15: #{multibert_forward.1} parent=11 // pred_region
        _
      $region16: #{multibert_forward.1} parent=11 // pred_fallthru
        _
      // Predicated region
      $region17: #{multibert_forward.1} parent=11 // pred_check
        %p453 = pneg %p94
      $region18: #{multibert_forward.1} parent=11 // pred_check_branch
        %455 = sbr.rel (%p453) target = $region20
      $region19: #{multibert_forward.1} parent=11 // pred_region
        _
      $region20: #{multibert_forward.1} parent=11 // pred_fallthru
        _
      // Predicated region
      $region21: #{multibert_forward.1} parent=11 // pred_check
        %p456 = pneg %p115
      $region22: #{multibert_forward.1} parent=11 // pred_check_branch
        %458 = sbr.rel (%p456) target = $region24
      $region23: #{multibert_forward.1} parent=11 // pred_region
        _
      $region24: #{multibert_forward.1} parent=11 // pred_fallthru
        _
      // Predicated region
      $region25: #{multibert_forward.1} parent=11 // pred_check
        %p459 = pneg %p136
      $region26: #{multibert_forward.1} parent=11 // pred_check_branch
        %461 = sbr.rel (%p459) target = $region28
      $region27: #{multibert_forward.1} parent=11 // pred_region
        _
      $region28: #{multibert_forward.1} parent=11 // pred_fallthru
        _
      // Predicated region
      $region29: #{multibert_forward.1} parent=11 // pred_check
        %p462 = pneg %p157
      $region30: #{multibert_forward.1} parent=11 // pred_check_branch
        %464 = sbr.rel (%p462) target = $region32
      $region31: #{multibert_forward.1} parent=11 // pred_region
        _
      $region32: #{multibert_forward.1} parent=11 // pred_fallthru
        _
      // Predicated region
      $region33: #{multibert_forward.1} parent=11 // pred_check
        %p465 = pneg %p178
      $region34: #{multibert_forward.1} parent=11 // pred_check_branch
        %467 = sbr.rel (%p465) target = $region36
      $region35: #{multibert_forward.1} parent=11 // pred_region
        _
      $region36: #{multibert_forward.1} parent=11 // pred_fallthru
        _
      // Predicated region
      $region37: #{multibert_forward.1} parent=11 // pred_check
        %p468 = pneg %p199
      $region38: #{multibert_forward.1} parent=11 // pred_check_branch
        %470 = sbr.rel (%p468) target = $region40
      $region39: #{multibert_forward.1} parent=11 // pred_region
        _
      $region40: #{multibert_forward.1} parent=11 // pred_fallthru
        _
      // Predicated region
      $region41: #{multibert_forward.1} parent=11 // pred_check
        %p471 = pneg %p220
      $region42: #{multibert_forward.1} parent=11 // pred_check_branch
        %473 = sbr.rel (%p471) target = $region44
      $region43: #{multibert_forward.1} parent=11 // pred_region
        _
      $region44: #{multibert_forward.1} parent=11 // pred_fallthru
        _
      // Predicated region
      $region45: #{multibert_forward.1} parent=11 // pred_check
        %p474 = pneg %p241
      $region46: #{multibert_forward.1} parent=11 // pred_check_branch
        %476 = sbr.rel (%p474) target = $region48
      $region47: #{multibert_forward.1} parent=11 // pred_region
        _
      $region48: #{multibert_forward.1} parent=11 // pred_fallthru
        _
      // Predicated region
      $region49: #{multibert_forward.1} parent=11 // pred_check
        %p477 = pneg %p262
      $region50: #{multibert_forward.1} parent=11 // pred_check_branch
        %479 = sbr.rel (%p477) target = $region52
      $region51: #{multibert_forward.1} parent=11 // pred_region
        _
      $region52: #{multibert_forward.1} parent=11 // pred_fallthru
        _
      // Predicated region
      $region53: #{multibert_forward.1} parent=11 // pred_check
        %p480 = pneg %p283
      $region54: #{multibert_forward.1} parent=11 // pred_check_branch
        %482 = sbr.rel (%p480) target = $region56
      $region55: #{multibert_forward.1} parent=11 // pred_region
        _
      $region56: #{multibert_forward.1} parent=11 // pred_fallthru
        _
      // Predicated region
      $region57: #{multibert_forward.1} parent=11 // pred_check
        %p483 = pneg %p304
      $region58: #{multibert_forward.1} parent=11 // pred_check_branch
        %485 = sbr.rel (%p483) target = $region60
      $region59: #{multibert_forward.1} parent=11 // pred_region
        _
      $region60: #{multibert_forward.1} parent=11 // pred_fallthru
        _
      // Predicated region
      $region61: #{multibert_forward.1} parent=11 // pred_check
        %p486 = pneg %p325
      $region62: #{multibert_forward.1} parent=11 // pred_check_branch
        %488 = sbr.rel (%p486) target = $region64
      $region63: #{multibert_forward.1} parent=11 // pred_region
        _
      $region64: #{multibert_forward.1} parent=11 // pred_fallthru
        _
      // Predicated region
      $region65: #{multibert_forward.1} parent=11 // pred_check
        %p489 = pneg %p346
      $region66: #{multibert_forward.1} parent=11 // pred_check_branch
        %491 = sbr.rel (%p489) target = $region68
      $region67: #{multibert_forward.1} parent=11 // pred_region
        _
      $region68: #{multibert_forward.1} parent=11 // pred_fallthru
        _
      // Predicated region
      $region69: #{multibert_forward.1} parent=11 // pred_check
        %p492 = pneg %p367
      $region70: #{multibert_forward.1} parent=11 // pred_check_branch
        %494 = sbr.rel (%p492) target = $region72
      $region71: #{multibert_forward.1} parent=11 // pred_region
        _
      $region72: #{multibert_forward.1} parent=11 // pred_fallthru
        _
      // Predicated region
      $region73: #{multibert_forward.1} parent=11 // pred_check
        %p495 = pneg %p388
      $region74: #{multibert_forward.1} parent=11 // pred_check_branch
        %497 = sbr.rel (%p495) target = $region76
      $region75: #{multibert_forward.1} parent=11 // pred_region
        _
      $region76: #{multibert_forward.1} parent=11 // pred_fallthru
        _
      // Predicated region
      $region77: #{multibert_forward.1} parent=11 // pred_check
        %p498 = pneg %p409
      $region78: #{multibert_forward.1} parent=11 // pred_check_branch
        %500 = sbr.rel (%p498) target = $region80
      $region79: #{multibert_forward.1} parent=11 // pred_region
        _
      $region80: #{multibert_forward.1} parent=11 // pred_fallthru
        _
    $region12: #{multibert_forward.1} parent=5 // pred_fallthru
      _
    %p501 = scmp.lt.s32.totalorder %s26, 2
    // Predicated region
    $region81: #{multibert_forward.1} parent=5 // pred_check
      %p502 = pneg %p501
    $region82: #{multibert_forward.1} parent=5 // pred_check_branch
      %504 = sbr.rel (%p502) target = $region84
    $region83: #{multibert_forward.1} parent=5 // pred_region
      // Predicated region
      $region85: #{multibert_forward.1} parent=83 // pred_check
        %p505 = pneg %p46
      $region86: #{multibert_forward.1} parent=83 // pred_check_branch
        %507 = sbr.rel (%p505) target = $region88
      $region87: #{multibert_forward.1} parent=83 // pred_region
        %p508 = scmp.lt.s32.totalorder %s26, 1
        %s509 = scalar_select %p508, %s26, 1
        %s510 = smul.addr %s509, 8
        %s511 = scalar_lea.vmem %s0, %s510
      $region88: #{multibert_forward.1} parent=83 // pred_fallthru
        _
    $region84: #{multibert_forward.1} parent=5 // pred_fallthru
      _
    %p512 = scmp.le.s32.totalorder 1, %s26
    %p513 = scmp.lt.s32.totalorder %s26, 3
    %p514 = pnand %p512, %p513
    %p515 = pneg %p514
    // Predicated region
    $region89: #{multibert_forward.1} parent=5 // pred_check
      _
    $region90: #{multibert_forward.1} parent=5 // pred_check_branch
      %517 = sbr.rel (%p514) target = $region92
    $region91: #{multibert_forward.1} parent=5 // pred_region
      %s518 = ssub.s32 %s26, 1
      %p519 = scmp.lt.s32.totalorder %s31, 1
      %s520 = scalar_select %p519, %s31, 1
      %s521 = smul.addr %s520, 8
      %s522 = scalar_lea.vmem %s0, %s521
      %p523 = pneg %p52
      %p524 = pneg %p49
      %p525 = pneg %p73
      %p526 = pneg %p70
      %p527 = pneg %p94
      %p528 = pneg %p91
      %p529 = pneg %p115
      %p530 = pneg %p112
      %p531 = pneg %p136
      %p532 = pneg %p133
      %p533 = pneg %p157
      %p534 = pneg %p154
      %p535 = pneg %p178
      %p536 = pneg %p175
      %p537 = pneg %p199
      %p538 = pneg %p196
      %p539 = pneg %p220
      %p540 = pneg %p217
      %p541 = pneg %p241
      %p542 = pneg %p238
      %p543 = pneg %p262
      %p544 = pneg %p259
      %p545 = pneg %p283
      %p546 = pneg %p280
      %p547 = pneg %p304
      %p548 = pneg %p301
      %p549 = pneg %p325
      %p550 = pneg %p322
      %p551 = pneg %p346
      %p552 = pneg %p343
      %p553 = pneg %p367
      %p554 = pneg %p364
      %p555 = pneg %p388
      %p556 = pneg %p385
      %p557 = pneg %p409
      %p558 = pneg %p406
      %p559 = pneg %p435
      %p560 = pneg %p432
      %p561 = scmp.lt.s32.totalorder %s31, 1
      %s562 = scalar_select %p561, %s31, 1
      %s563 = smul.addr %s562, 8
      %s564 = scalar_lea.vmem %s18, %s563
      %p565 = scmp.lt.s32.totalorder %s31, 1
      %s566 = scalar_select %p565, %s31, 1
      %s567 = smul.addr %s566, 8
      %s568 = scalar_lea.vmem %s0, %s567
      %p569 = scmp.lt.s32.totalorder %s31, 1
      %s570 = scalar_select %p569, %s31, 1
      %s571 = smul.addr %s570, 8
      %s572 = scalar_lea.vmem %s18, %s571
      %v573 = vld [vmem:[%s568] sm:$0xff]
      %v574 = vld [vmem:[%s1] sm:$0xff]
      %v575 = vadd.f32 %v573, %v574
      %v576 = vlaneseq
      %v577 = vand.u32 %v576, 127
      %vm578 = vcmp.lt.s32.totalorder %v577, 16
      %v579 = vld [vmem:[%s2] sm:$0xff]
      %v580 = vld [vmem:[%s2 + $0x8] sm:$0xff]
      %v581 = vld [vmem:[%s2 + $0x10] sm:$0xff]
      %v582 = vld [vmem:[%s2 + $0x18] sm:$0xff]
      %v583 = vld [vmem:[%s3] sm:$0x1]
      %v585 = vlaneseq
      %v586 = vshrl.u32 %v585, 7
      %v587 = vsub.s32 0, %v586
      %v588 = vrot.slane %v583, %v587
      %vm590 = vcmask 261120
      %v592 = vsel %vm590, %v575, 0
      %594 = vmatprep.subr.mxu0 0.0
      %595 = vmatpush1.msra.mxu0 %v579
      %596 = vmatprep.subr.mxu0 0.0
      %597 = vmatpush1.msra.mxu0 %v580
      %598 = vmatprep.subr.mxu0 0.0
      %599 = vmatpush1.msra.mxu0 %v581
      %600 = vmatprep.subr.mxu0 0.0
      %601 = vmatpush1.msra.mxu0 %v582
      %602 = vmatprep.subr.mxu0 0.0
      %603 = vmatpush1.msra.mxu0 0.0
      %604 = vmatprep.subr.mxu0 0.0
      %605 = vmatpush1.msra.mxu0 0.0
      %606 = vmatprep.subr.mxu0 0.0
      %607 = vmatpush1.msra.mxu0 0.0
      %608 = vmatprep.subr.mxu0 0.0
      %609 = vmatpush1.msra.mxu0 0.0
      %610 = vmatprep.subr.mxu0 0.0
      %611 = vmatpush1.msra.mxu0 0.0
      %612 = vmatprep.subr.mxu0 0.0
      %613 = vmatpush1.msra.mxu0 0.0
      %614 = vmatprep.subr.mxu0 0.0
      %615 = vmatpush1.msra.mxu0 0.0
      %616 = vmatprep.subr.mxu0 0.0
      %617 = vmatpush1.msra.mxu0 0.0
      %618 = vmatprep.subr.mxu0 0.0
      %619 = vmatpush1.msra.mxu0 0.0
      %620 = vmatprep.subr.mxu0 0.0
      %621 = vmatpush1.msra.mxu0 0.0
      %622 = vmatprep.subr.mxu0 0.0
      %623 = vmatpush1.msra.mxu0 0.0
      %624 = vmatprep.subr.mxu0 0.0
      %625 = vmatpush1.msra.mxu0 0.0
      %626 = vmatprep.subr.mxu0 0.0
      %627 = vmatpush1.msra.mxu0 0.0
      %628 = vmatprep.subr.mxu0 0.0
      %629 = vmatpush1.msra.mxu0 0.0
      %630 = vmatprep.subr.mxu0 0.0
      %631 = vmatpush1.msra.mxu0 0.0
      %632 = vmatprep.subr.mxu0 0.0
      %633 = vmatpush1.msra.mxu0 0.0
      %634 = vmatprep.subr.mxu0 0.0
      %635 = vmatpush1.msra.mxu0 0.0
      %636 = vmatprep.subr.mxu0 0.0
      %637 = vmatpush1.msra.mxu0 0.0
      %638 = vmatprep.subr.mxu0 0.0
      %639 = vmatpush1.msra.mxu0 0.0
      %640 = vmatprep.subr.mxu0 0.0
      %641 = vmatpush1.msra.mxu0 0.0
      %642 = vmatprep.subr.mxu0 0.0
      %643 = vmatpush1.msra.mxu0 0.0
      %644 = vmatprep.subr.mxu0 0.0
      %645 = vmatpush1.msra.mxu0 0.0
      %646 = vmatprep.subr.mxu0 0.0
      %647 = vmatpush1.msra.mxu0 0.0
      %648 = vmatprep.subr.mxu0 0.0
      %649 = vmatpush1.msra.mxu0 0.0
      %650 = vmatprep.subr.mxu0 0.0
      %651 = vmatpush1.msra.mxu0 0.0
      %652 = vmatprep.subr.mxu0 0.0
      %653 = vmatpush1.msra.mxu0 0.0
      %654 = vmatprep.subr.mxu0 0.0
      %655 = vmatpush1.msra.mxu0 0.0
      %656 = vmatprep.subr.mxu0 0.0
      %657 = vmatpush1.msra.mxu0 0.0
      %658 = vmatprep.mubr.f32.mxu0 0.0
      %659 = vmatmul.mubr.f32.gmra.mrb[0].mxu0 %v592
      %v660 = vpop.f32.mrb[0].mxu0
      %v661 = vadd.f32 %v588, %v660
      %v662 = vpop.f32.mrb[0].mxu0
      %663 = vdwg.mxu0
      %v664 = vld [vmem:[%s4] sm:$0xff]
      %v665 = vld [vmem:[%s4 + $0x8] sm:$0xff]
      %v666 = vld [vmem:[%s4 + $0x10] sm:$0xff]
      %v667 = vld [vmem:[%s4 + $0x18] sm:$0xff]
      %669 = vrot.lane.b32.xlu0 %v661, 112
      %v670 = vpop.permute.xlu0 %669
      %vm671 = vcmask 64512
      %v672 = vsel %vm671, %v661, 0
      %v674 = vsel %vm671, %v670, 0
      %676 = vmatprep.subr.mxu0 0.0
      %677 = vmatpush1.xpose.msra.mxu0 %v674
      %678 = vmatprep.subr.mxu0 0.0
      %679 = vmatpush1.xpose.msra.mxu0 0.0
      %680 = vmatprep.subr.mxu0 0.0
      %681 = vmatpush1.xpose.msra.mxu0 0.0
      %682 = vmatprep.subr.mxu0 0.0
      %683 = vmatpush1.xpose.msra.mxu0 0.0
      %684 = vmatprep.subr.mxu0 0.0
      %685 = vmatpush1.xpose.msra.mxu0 0.0
      %686 = vmatprep.subr.mxu0 0.0
      %687 = vmatpush1.xpose.msra.mxu0 0.0
      %688 = vmatprep.subr.mxu0 0.0
      %689 = vmatpush1.xpose.msra.mxu0 0.0
      %690 = vmatprep.subr.mxu0 0.0
      %691 = vmatpush1.xpose.msra.mxu0 0.0
      %692 = vmatprep.subr.mxu0 0.0
      %693 = vmatpush1.xpose.msra.mxu0 0.0
      %694 = vmatprep.subr.mxu0 0.0
      %695 = vmatpush1.xpose.msra.mxu0 0.0
      %696 = vmatprep.subr.mxu0 0.0
      %697 = vmatpush1.xpose.msra.mxu0 0.0
      %698 = vmatprep.subr.mxu0 0.0
      %699 = vmatpush1.xpose.msra.mxu0 0.0
      %700 = vmatprep.subr.mxu0 0.0
      %701 = vmatpush1.xpose.msra.mxu0 0.0
      %702 = vmatprep.subr.mxu0 0.0
      %703 = vmatpush1.xpose.msra.mxu0 0.0
      %704 = vmatprep.subr.mxu0 0.0
      %705 = vmatpush1.xpose.msra.mxu0 0.0
      %706 = vmatprep.subr.mxu0 0.0
      %707 = vmatpush1.xpose.msra.mxu0 0.0
      %708 = vmatprep.subr.mxu0 0.0
      %709 = vmatpush1.xpose.msra.mxu0 0.0
      %710 = vmatprep.subr.mxu0 0.0
      %711 = vmatpush1.xpose.msra.mxu0 0.0
      %712 = vmatprep.subr.mxu0 0.0
      %713 = vmatpush1.xpose.msra.mxu0 0.0
      %714 = vmatprep.subr.mxu0 0.0
      %715 = vmatpush1.xpose.msra.mxu0 0.0
      %716 = vmatprep.subr.mxu0 0.0
      %717 = vmatpush1.xpose.msra.mxu0 0.0
      %718 = vmatprep.subr.mxu0 0.0
      %719 = vmatpush1.xpose.msra.mxu0 0.0
      %720 = vmatprep.subr.mxu0 0.0
      %721 = vmatpush1.xpose.msra.mxu0 0.0
      %722 = vmatprep.subr.mxu0 0.0
      %723 = vmatpush1.xpose.msra.mxu0 0.0
      %724 = vmatprep.subr.mxu0 0.0
      %725 = vmatpush1.xpose.msra.mxu0 0.0
      %726 = vmatprep.subr.mxu0 0.0
      %727 = vmatpush1.xpose.msra.mxu0 0.0
      %728 = vmatprep.subr.mxu0 0.0
      %729 = vmatpush1.xpose.msra.mxu0 0.0
      %730 = vmatprep.subr.mxu0 0.0
      %731 = vmatpush1.xpose.msra.mxu0 0.0
      %732 = vmatprep.subr.mxu0 0.0
      %733 = vmatpush1.xpose.msra.mxu0 0.0
      %734 = vmatprep.subr.mxu0 0.0
      %735 = vmatpush1.xpose.msra.mxu0 0.0
      %736 = vmatprep.subr.mxu0 0.0
      %737 = vmatpush1.xpose.msra.mxu0 0.0
      %738 = vmatprep.subr.mxu0 0.0
      %739 = vmatpush1.xpose.msra.mxu0 0.0
      %740 = vmatprep.mubr.f32.mxu0 0.0
      %741 = vmatmul.mubr.f32.gmra.mrb[0].mxu0 %v672
      %v742 = vpop.f32.mrb[0].mxu0
      %v743 = vadd.f32 0.0, %v742
      %v744 = vpop.f32.mrb[0].mxu0
      %745 = vdwg.mxu0
      %v746 = vmul.f32 %v743, 0.35355338
      %v747 = vsel %vm671, %v746, -inf
      %748 = vmax.xlane.f32.xlu0 %v747
      %v749 = vpop.xlane.xlu0 %748
      %v750 = vsub.f32 %v746, %v749
      %v751 = vmul.f32 %v750, 1.442695
      %v752 = vpow.pop %v751
      %v753 = vsel %vm671, %v752, 0.0
      %754 = vadd.xlane.f32.xlu0 %v753
      %v755 = vpop.xlane.xlu0 %754
      %v756 = vrcp.pop %v755
      %v757 = vmul.f32 %v752, %v756
      %758 = vrot.lane.b32.xlu0 %v661, 96
      %v759 = vpop.permute.xlu0 %758
      %v762 = vsel %vm671, %v757, 0
      %764 = vmatprep.subr.mxu0 0.0
      %765 = vmatpush1.msra.mxu0 %v759
      %766 = vmatprep.subr.mxu0 0.0
      %767 = vmatpush1.msra.mxu0 0.0
      %768 = vmatprep.subr.mxu0 0.0
      %769 = vmatpush1.msra.mxu0 0.0
      %770 = vmatprep.subr.mxu0 0.0
      %771 = vmatpush1.msra.mxu0 0.0
      %772 = vmatprep.subr.mxu0 0.0
      %773 = vmatpush1.msra.mxu0 0.0
      %774 = vmatprep.subr.mxu0 0.0
      %775 = vmatpush1.msra.mxu0 0.0
      %776 = vmatprep.subr.mxu0 0.0
      %777 = vmatpush1.msra.mxu0 0.0
      %778 = vmatprep.subr.mxu0 0.0
      %779 = vmatpush1.msra.mxu0 0.0
      %780 = vmatprep.subr.mxu0 0.0
      %781 = vmatpush1.msra.mxu0 0.0
      %782 = vmatprep.subr.mxu0 0.0
      %783 = vmatpush1.msra.mxu0 0.0
      %784 = vmatprep.subr.mxu0 0.0
      %785 = vmatpush1.msra.mxu0 0.0
      %786 = vmatprep.subr.mxu0 0.0
      %787 = vmatpush1.msra.mxu0 0.0
      %788 = vmatprep.subr.mxu0 0.0
      %789 = vmatpush1.msra.mxu0 0.0
      %790 = vmatprep.subr.mxu0 0.0
      %791 = vmatpush1.msra.mxu0 0.0
      %792 = vmatprep.subr.mxu0 0.0
      %793 = vmatpush1.msra.mxu0 0.0
      %794 = vmatprep.subr.mxu0 0.0
      %795 = vmatpush1.msra.mxu0 0.0
      %796 = vmatprep.subr.mxu0 0.0
      %797 = vmatpush1.msra.mxu0 0.0
      %798 = vmatprep.subr.mxu0 0.0
      %799 = vmatpush1.msra.mxu0 0.0
      %800 = vmatprep.subr.mxu0 0.0
      %801 = vmatpush1.msra.mxu0 0.0
      %802 = vmatprep.subr.mxu0 0.0
      %803 = vmatpush1.msra.mxu0 0.0
      %804 = vmatprep.subr.mxu0 0.0
      %805 = vmatpush1.msra.mxu0 0.0
      %806 = vmatprep.subr.mxu0 0.0
      %807 = vmatpush1.msra.mxu0 0.0
      %808 = vmatprep.subr.mxu0 0.0
      %809 = vmatpush1.msra.mxu0 0.0
      %810 = vmatprep.subr.mxu0 0.0
      %811 = vmatpush1.msra.mxu0 0.0
      %812 = vmatprep.subr.mxu0 0.0
      %813 = vmatpush1.msra.mxu0 0.0
      %814 = vmatprep.subr.mxu0 0.0
      %815 = vmatpush1.msra.mxu0 0.0
      %816 = vmatprep.subr.mxu0 0.0
      %817 = vmatpush1.msra.mxu0 0.0
      %818 = vmatprep.subr.mxu0 0.0
      %819 = vmatpush1.msra.mxu0 0.0
      %820 = vmatprep.subr.mxu0 0.0
      %821 = vmatpush1.msra.mxu0 0.0
      %822 = vmatprep.subr.mxu0 0.0
      %823 = vmatpush1.msra.mxu0 0.0
      %824 = vmatprep.subr.mxu0 0.0
      %825 = vmatpush1.msra.mxu0 0.0
      %826 = vmatprep.subr.mxu0 0.0
      %827 = vmatpush1.msra.mxu0 0.0
      %828 = vmatprep.mubr.f32.mxu0 0.0
      %829 = vmatmul.mubr.f32.gmra.mrb[0].mxu0 %v762
      %v830 = vpop.f32.mrb[0].mxu0
      %v831 = vadd.f32 0.0, %v830
      %v832 = vpop.f32.mrb[0].mxu0
      %833 = vdwg.mxu0
      %834 = vrot.lane.b32.xlu0 %v661, 120
      %v835 = vpop.permute.xlu0 %834
      %836 = vrot.lane.b32.xlu0 %v661, 104
      %v837 = vpop.permute.xlu0 %836
      %v838 = vsel %vm671, %v835, 0
      %v840 = vsel %vm671, %v837, 0
      %842 = vmatprep.subr.mxu0 0.0
      %843 = vmatpush1.xpose.msra.mxu0 %v840
      %844 = vmatprep.subr.mxu0 0.0
      %845 = vmatpush1.xpose.msra.mxu0 0.0
      %846 = vmatprep.subr.mxu0 0.0
      %847 = vmatpush1.xpose.msra.mxu0 0.0
      %848 = vmatprep.subr.mxu0 0.0
      %849 = vmatpush1.xpose.msra.mxu0 0.0
      %850 = vmatprep.subr.mxu0 0.0
      %851 = vmatpush1.xpose.msra.mxu0 0.0
      %852 = vmatprep.subr.mxu0 0.0
      %853 = vmatpush1.xpose.msra.mxu0 0.0
      %854 = vmatprep.subr.mxu0 0.0
      %855 = vmatpush1.xpose.msra.mxu0 0.0
      %856 = vmatprep.subr.mxu0 0.0
      %857 = vmatpush1.xpose.msra.mxu0 0.0
      %858 = vmatprep.subr.mxu0 0.0
      %859 = vmatpush1.xpose.msra.mxu0 0.0
      %860 = vmatprep.subr.mxu0 0.0
      %861 = vmatpush1.xpose.msra.mxu0 0.0
      %862 = vmatprep.subr.mxu0 0.0
      %863 = vmatpush1.xpose.msra.mxu0 0.0
      %864 = vmatprep.subr.mxu0 0.0
      %865 = vmatpush1.xpose.msra.mxu0 0.0
      %866 = vmatprep.subr.mxu0 0.0
      %867 = vmatpush1.xpose.msra.mxu0 0.0
      %868 = vmatprep.subr.mxu0 0.0
      %869 = vmatpush1.xpose.msra.mxu0 0.0
      %870 = vmatprep.subr.mxu0 0.0
      %871 = vmatpush1.xpose.msra.mxu0 0.0
      %872 = vmatprep.subr.mxu0 0.0
      %873 = vmatpush1.xpose.msra.mxu0 0.0
      %874 = vmatprep.subr.mxu0 0.0
      %875 = vmatpush1.xpose.msra.mxu0 0.0
      %876 = vmatprep.subr.mxu0 0.0
      %877 = vmatpush1.xpose.msra.mxu0 0.0
      %878 = vmatprep.subr.mxu0 0.0
      %879 = vmatpush1.xpose.msra.mxu0 0.0
      %880 = vmatprep.subr.mxu0 0.0
      %881 = vmatpush1.xpose.msra.mxu0 0.0
      %882 = vmatprep.subr.mxu0 0.0
      %883 = vmatpush1.xpose.msra.mxu0 0.0
      %884 = vmatprep.subr.mxu0 0.0
      %885 = vmatpush1.xpose.msra.mxu0 0.0
      %886 = vmatprep.subr.mxu0 0.0
      %887 = vmatpush1.xpose.msra.mxu0 0.0
      %888 = vmatprep.subr.mxu0 0.0
      %889 = vmatpush1.xpose.msra.mxu0 0.0
      %890 = vmatprep.subr.mxu0 0.0
      %891 = vmatpush1.xpose.msra.mxu0 0.0
      %892 = vmatprep.subr.mxu0 0.0
      %893 = vmatpush1.xpose.msra.mxu0 0.0
      %894 = vmatprep.subr.mxu0 0.0
      %895 = vmatpush1.xpose.msra.mxu0 0.0
      %896 = vmatprep.subr.mxu0 0.0
      %897 = vmatpush1.xpose.msra.mxu0 0.0
      %898 = vmatprep.subr.mxu0 0.0
      %899 = vmatpush1.xpose.msra.mxu0 0.0
      %900 = vmatprep.subr.mxu0 0.0
      %901 = vmatpush1.xpose.msra.mxu0 0.0
      %902 = vmatprep.subr.mxu0 0.0
      %903 = vmatpush1.xpose.msra.mxu0 0.0
      %904 = vmatprep.subr.mxu0 0.0
      %905 = vmatpush1.xpose.msra.mxu0 0.0
      %906 = vmatprep.mubr.f32.mxu0 0.0
      %907 = vmatmul.mubr.f32.gmra.mrb[0].mxu0 %v838
      %v908 = vpop.f32.mrb[0].mxu0
      %v909 = vadd.f32 0.0, %v908
      %v910 = vpop.f32.mrb[0].mxu0
      %911 = vdwg.mxu0
      %v912 = vmul.f32 %v909, 0.35355338
      %v913 = vsel %vm671, %v912, -inf
      %914 = vmax.xlane.f32.xlu0 %v913
      %v915 = vpop.xlane.xlu0 %914
      %v916 = vsub.f32 %v912, %v915
      %v917 = vmul.f32 %v916, 1.442695
      %v918 = vpow.pop %v917
      %v919 = vsel %vm671, %v918, 0.0
      %920 = vadd.xlane.f32.xlu0 %v919
      %v921 = vpop.xlane.xlu0 %920
      %v922 = vrcp.pop %v921
      %v923 = vmul.f32 %v918, %v922
      %924 = vrot.lane.b32.xlu0 %v661, 88
      %v925 = vpop.permute.xlu0 %924
      %v928 = vsel %vm671, %v923, 0
      %930 = vmatprep.subr.mxu0 0.0
      %931 = vmatpush1.msra.mxu0 %v925
      %932 = vmatprep.subr.mxu0 0.0
      %933 = vmatpush1.msra.mxu0 0.0
      %934 = vmatprep.subr.mxu0 0.0
      %935 = vmatpush1.msra.mxu0 0.0
      %936 = vmatprep.subr.mxu0 0.0
      %937 = vmatpush1.msra.mxu0 0.0
      %938 = vmatprep.subr.mxu0 0.0
      %939 = vmatpush1.msra.mxu0 0.0
      %940 = vmatprep.subr.mxu0 0.0
      %941 = vmatpush1.msra.mxu0 0.0
      %942 = vmatprep.subr.mxu0 0.0
      %943 = vmatpush1.msra.mxu0 0.0
      %944 = vmatprep.subr.mxu0 0.0
      %945 = vmatpush1.msra.mxu0 0.0
      %946 = vmatprep.subr.mxu0 0.0
      %947 = vmatpush1.msra.mxu0 0.0
      %948 = vmatprep.subr.mxu0 0.0
      %949 = vmatpush1.msra.mxu0 0.0
      %950 = vmatprep.subr.mxu0 0.0
      %951 = vmatpush1.msra.mxu0 0.0
      %952 = vmatprep.subr.mxu0 0.0
      %953 = vmatpush1.msra.mxu0 0.0
      %954 = vmatprep.subr.mxu0 0.0
      %955 = vmatpush1.msra.mxu0 0.0
      %956 = vmatprep.subr.mxu0 0.0
      %957 = vmatpush1.msra.mxu0 0.0
      %958 = vmatprep.subr.mxu0 0.0
      %959 = vmatpush1.msra.mxu0 0.0
      %960 = vmatprep.subr.mxu0 0.0
      %961 = vmatpush1.msra.mxu0 0.0
      %962 = vmatprep.subr.mxu0 0.0
      %963 = vmatpush1.msra.mxu0 0.0
      %964 = vmatprep.subr.mxu0 0.0
      %965 = vmatpush1.msra.mxu0 0.0
      %966 = vmatprep.subr.mxu0 0.0
      %967 = vmatpush1.msra.mxu0 0.0
      %968 = vmatprep.subr.mxu0 0.0
      %969 = vmatpush1.msra.mxu0 0.0
      %970 = vmatprep.subr.mxu0 0.0
      %971 = vmatpush1.msra.mxu0 0.0
      %972 = vmatprep.subr.mxu0 0.0
      %973 = vmatpush1.msra.mxu0 0.0
      %974 = vmatprep.subr.mxu0 0.0
      %975 = vmatpush1.msra.mxu0 0.0
      %976 = vmatprep.subr.mxu0 0.0
      %977 = vmatpush1.msra.mxu0 0.0
      %978 = vmatprep.subr.mxu0 0.0
      %979 = vmatpush1.msra.mxu0 0.0
      %980 = vmatprep.subr.mxu0 0.0
      %981 = vmatpush1.msra.mxu0 0.0
      %982 = vmatprep.subr.mxu0 0.0
      %983 = vmatpush1.msra.mxu0 0.0
      %984 = vmatprep.subr.mxu0 0.0
      %985 = vmatpush1.msra.mxu0 0.0
      %986 = vmatprep.subr.mxu0 0.0
      %987 = vmatpush1.msra.mxu0 0.0
      %988 = vmatprep.subr.mxu0 0.0
      %989 = vmatpush1.msra.mxu0 0.0
      %990 = vmatprep.subr.mxu0 0.0
      %991 = vmatpush1.msra.mxu0 0.0
      %992 = vmatprep.subr.mxu0 0.0
      %993 = vmatpush1.msra.mxu0 0.0
      %994 = vmatprep.mubr.f32.mxu0 0.0
      %995 = vmatmul.mubr.f32.gmra.mrb[0].mxu0 %v928
      %v996 = vpop.f32.mrb[0].mxu0
      %v997 = vadd.f32 0.0, %v996
      %v998 = vpop.f32.mrb[0].mxu0
      %999 = vdwg.mxu0
      %v1001 = vsel %vm671, %v997, 0
      %1003 = vmatprep.subr.mxu0 0.0
      %1004 = vmatpush1.msra.mxu0 %v665
      %1005 = vmatprep.subr.mxu0 0.0
      %1006 = vmatpush1.msra.mxu0 0.0
      %1007 = vmatprep.subr.mxu0 0.0
      %1008 = vmatpush1.msra.mxu0 0.0
      %1009 = vmatprep.subr.mxu0 0.0
      %1010 = vmatpush1.msra.mxu0 0.0
      %1011 = vmatprep.subr.mxu0 0.0
      %1012 = vmatpush1.msra.mxu0 0.0
      %1013 = vmatprep.subr.mxu0 0.0
      %1014 = vmatpush1.msra.mxu0 0.0
      %1015 = vmatprep.subr.mxu0 0.0
      %1016 = vmatpush1.msra.mxu0 0.0
      %1017 = vmatprep.subr.mxu0 0.0
      %1018 = vmatpush1.msra.mxu0 0.0
      %1019 = vmatprep.subr.mxu0 0.0
      %1020 = vmatpush1.msra.mxu0 0.0
      %1021 = vmatprep.subr.mxu0 0.0
      %1022 = vmatpush1.msra.mxu0 0.0
      %1023 = vmatprep.subr.mxu0 0.0
      %1024 = vmatpush1.msra.mxu0 0.0
      %1025 = vmatprep.subr.mxu0 0.0
      %1026 = vmatpush1.msra.mxu0 0.0
      %1027 = vmatprep.subr.mxu0 0.0
      %1028 = vmatpush1.msra.mxu0 0.0
      %1029 = vmatprep.subr.mxu0 0.0
      %1030 = vmatpush1.msra.mxu0 0.0
      %1031 = vmatprep.subr.mxu0 0.0
      %1032 = vmatpush1.msra.mxu0 0.0
      %1033 = vmatprep.subr.mxu0 0.0
      %1034 = vmatpush1.msra.mxu0 0.0
      %1035 = vmatprep.subr.mxu0 0.0
      %1036 = vmatpush1.msra.mxu0 0.0
      %1037 = vmatprep.subr.mxu0 0.0
      %1038 = vmatpush1.msra.mxu0 0.0
      %1039 = vmatprep.subr.mxu0 0.0
      %1040 = vmatpush1.msra.mxu0 0.0
      %1041 = vmatprep.subr.mxu0 0.0
      %1042 = vmatpush1.msra.mxu0 0.0
      %1043 = vmatprep.subr.mxu0 0.0
      %1044 = vmatpush1.msra.mxu0 0.0
      %1045 = vmatprep.subr.mxu0 0.0
      %1046 = vmatpush1.msra.mxu0 0.0
      %1047 = vmatprep.subr.mxu0 0.0
      %1048 = vmatpush1.msra.mxu0 0.0
      %1049 = vmatprep.subr.mxu0 0.0
      %1050 = vmatpush1.msra.mxu0 0.0
      %1051 = vmatprep.subr.mxu0 0.0
      %1052 = vmatpush1.msra.mxu0 0.0
      %1053 = vmatprep.subr.mxu0 0.0
      %1054 = vmatpush1.msra.mxu0 0.0
      %1055 = vmatprep.subr.mxu0 0.0
      %1056 = vmatpush1.msra.mxu0 0.0
      %1057 = vmatprep.subr.mxu0 0.0
      %1058 = vmatpush1.msra.mxu0 0.0
      %1059 = vmatprep.subr.mxu0 0.0
      %1060 = vmatpush1.msra.mxu0 0.0
      %1061 = vmatprep.subr.mxu0 0.0
      %1062 = vmatpush1.msra.mxu0 0.0
      %1063 = vmatprep.subr.mxu0 0.0
      %1064 = vmatpush1.msra.mxu0 0.0
      %1065 = vmatprep.subr.mxu0 0.0
      %1066 = vmatpush1.msra.mxu0 0.0
      %1067 = vmatprep.mubr.f32.mxu0 0.0
      %1068 = vmatmul.mubr.f32.gmra.mrb[0].mxu0 %v1001
      %v1069 = vpop.f32.mrb[0].mxu0
      %v1070 = vadd.f32 0.0, %v1069
      %v1071 = vpop.f32.mrb[0].mxu0
      %1072 = vdwg.mxu0
      %v1074 = vsel %vm671, %v831, 0
      %1076 = vmatprep.subr.mxu0 0.0
      %1077 = vmatpush1.msra.mxu0 %v664
      %1078 = vmatprep.subr.mxu0 0.0
      %1079 = vmatpush1.msra.mxu0 0.0
      %1080 = vmatprep.subr.mxu0 0.0
      %1081 = vmatpush1.msra.mxu0 0.0
      %1082 = vmatprep.subr.mxu0 0.0
      %1083 = vmatpush1.msra.mxu0 0.0
      %1084 = vmatprep.subr.mxu0 0.0
      %1085 = vmatpush1.msra.mxu0 0.0
      %1086 = vmatprep.subr.mxu0 0.0
      %1087 = vmatpush1.msra.mxu0 0.0
      %1088 = vmatprep.subr.mxu0 0.0
      %1089 = vmatpush1.msra.mxu0 0.0
      %1090 = vmatprep.subr.mxu0 0.0
      %1091 = vmatpush1.msra.mxu0 0.0
      %1092 = vmatprep.subr.mxu0 0.0
      %1093 = vmatpush1.msra.mxu0 0.0
      %1094 = vmatprep.subr.mxu0 0.0
      %1095 = vmatpush1.msra.mxu0 0.0
      %1096 = vmatprep.subr.mxu0 0.0
      %1097 = vmatpush1.msra.mxu0 0.0
      %1098 = vmatprep.subr.mxu0 0.0
      %1099 = vmatpush1.msra.mxu0 0.0
      %1100 = vmatprep.subr.mxu0 0.0
      %1101 = vmatpush1.msra.mxu0 0.0
      %1102 = vmatprep.subr.mxu0 0.0
      %1103 = vmatpush1.msra.mxu0 0.0
      %1104 = vmatprep.subr.mxu0 0.0
      %1105 = vmatpush1.msra.mxu0 0.0
      %1106 = vmatprep.subr.mxu0 0.0
      %1107 = vmatpush1.msra.mxu0 0.0
      %1108 = vmatprep.subr.mxu0 0.0
      %1109 = vmatpush1.msra.mxu0 0.0
      %1110 = vmatprep.subr.mxu0 0.0
      %1111 = vmatpush1.msra.mxu0 0.0
      %1112 = vmatprep.subr.mxu0 0.0
      %1113 = vmatpush1.msra.mxu0 0.0
      %1114 = vmatprep.subr.mxu0 0.0
      %1115 = vmatpush1.msra.mxu0 0.0
      %1116 = vmatprep.subr.mxu0 0.0
      %1117 = vmatpush1.msra.mxu0 0.0
      %1118 = vmatprep.subr.mxu0 0.0
      %1119 = vmatpush1.msra.mxu0 0.0
      %1120 = vmatprep.subr.mxu0 0.0
      %1121 = vmatpush1.msra.mxu0 0.0
      %1122 = vmatprep.subr.mxu0 0.0
      %1123 = vmatpush1.msra.mxu0 0.0
      %1124 = vmatprep.subr.mxu0 0.0
      %1125 = vmatpush1.msra.mxu0 0.0
      %1126 = vmatprep.subr.mxu0 0.0
      %1127 = vmatpush1.msra.mxu0 0.0
      %1128 = vmatprep.subr.mxu0 0.0
      %1129 = vmatpush1.msra.mxu0 0.0
      %1130 = vmatprep.subr.mxu0 0.0
      %1131 = vmatpush1.msra.mxu0 0.0
      %1132 = vmatprep.subr.mxu0 0.0
      %1133 = vmatpush1.msra.mxu0 0.0
      %1134 = vmatprep.subr.mxu0 0.0
      %1135 = vmatpush1.msra.mxu0 0.0
      %1136 = vmatprep.subr.mxu0 0.0
      %1137 = vmatpush1.msra.mxu0 0.0
      %1138 = vmatprep.subr.mxu0 0.0
      %1139 = vmatpush1.msra.mxu0 0.0
      %1140 = vmatprep.mubr.f32.mxu0 0.0
      %1141 = vmatmul.mubr.f32.gmra.mrb[0].mxu0 %v1074
      %v1142 = vpop.f32.mrb[0].mxu0
      %v1143 = vadd.f32 %v1070, %v1142
      %v1144 = vpop.f32.mrb[0].mxu0
      %1145 = vdwg.mxu0
      %1146 = vrot.lane.b32.xlu0 %v661, 80
      %v1147 = vpop.permute.xlu0 %1146
      %1148 = vrot.lane.b32.xlu0 %v661, 64
      %v1149 = vpop.permute.xlu0 %1148
      %v1150 = vsel %vm671, %v1147, 0
      %v1152 = vsel %vm671, %v1149, 0
      %1154 = vmatprep.subr.mxu0 0.0
      %1155 = vmatpush1.xpose.msra.mxu0 %v1152
      %1156 = vmatprep.subr.mxu0 0.0
      %1157 = vmatpush1.xpose.msra.mxu0 0.0
      %1158 = vmatprep.subr.mxu0 0.0
      %1159 = vmatpush1.xpose.msra.mxu0 0.0
      %1160 = vmatprep.subr.mxu0 0.0
      %1161 = vmatpush1.xpose.msra.mxu0 0.0
      %1162 = vmatprep.subr.mxu0 0.0
      %1163 = vmatpush1.xpose.msra.mxu0 0.0
      %1164 = vmatprep.subr.mxu0 0.0
      %1165 = vmatpush1.xpose.msra.mxu0 0.0
      %1166 = vmatprep.subr.mxu0 0.0
      %1167 = vmatpush1.xpose.msra.mxu0 0.0
      %1168 = vmatprep.subr.mxu0 0.0
      %1169 = vmatpush1.xpose.msra.mxu0 0.0
      %1170 = vmatprep.subr.mxu0 0.0
      %1171 = vmatpush1.xpose.msra.mxu0 0.0
      %1172 = vmatprep.subr.mxu0 0.0
      %1173 = vmatpush1.xpose.msra.mxu0 0.0
      %1174 = vmatprep.subr.mxu0 0.0
      %1175 = vmatpush1.xpose.msra.mxu0 0.0
      %1176 = vmatprep.subr.mxu0 0.0
      %1177 = vmatpush1.xpose.msra.mxu0 0.0
      %1178 = vmatprep.subr.mxu0 0.0
      %1179 = vmatpush1.xpose.msra.mxu0 0.0
      %1180 = vmatprep.subr.mxu0 0.0
      %1181 = vmatpush1.xpose.msra.mxu0 0.0
      %1182 = vmatprep.subr.mxu0 0.0
      %1183 = vmatpush1.xpose.msra.mxu0 0.0
      %1184 = vmatprep.subr.mxu0 0.0
      %1185 = vmatpush1.xpose.msra.mxu0 0.0
      %1186 = vmatprep.subr.mxu0 0.0
      %1187 = vmatpush1.xpose.msra.mxu0 0.0
      %1188 = vmatprep.subr.mxu0 0.0
      %1189 = vmatpush1.xpose.msra.mxu0 0.0
      %1190 = vmatprep.subr.mxu0 0.0
      %1191 = vmatpush1.xpose.msra.mxu0 0.0
      %1192 = vmatprep.subr.mxu0 0.0
      %1193 = vmatpush1.xpose.msra.mxu0 0.0
      %1194 = vmatprep.subr.mxu0 0.0
      %1195 = vmatpush1.xpose.msra.mxu0 0.0
      %1196 = vmatprep.subr.mxu0 0.0
      %1197 = vmatpush1.xpose.msra.mxu0 0.0
      %1198 = vmatprep.subr.mxu0 0.0
      %1199 = vmatpush1.xpose.msra.mxu0 0.0
      %1200 = vmatprep.subr.mxu0 0.0
      %1201 = vmatpush1.xpose.msra.mxu0 0.0
      %1202 = vmatprep.subr.mxu0 0.0
      %1203 = vmatpush1.xpose.msra.mxu0 0.0
      %1204 = vmatprep.subr.mxu0 0.0
      %1205 = vmatpush1.xpose.msra.mxu0 0.0
      %1206 = vmatprep.subr.mxu0 0.0
      %1207 = vmatpush1.xpose.msra.mxu0 0.0
      %1208 = vmatprep.subr.mxu0 0.0
      %1209 = vmatpush1.xpose.msra.mxu0 0.0
      %1210 = vmatprep.subr.mxu0 0.0
      %1211 = vmatpush1.xpose.msra.mxu0 0.0
      %1212 = vmatprep.subr.mxu0 0.0
      %1213 = vmatpush1.xpose.msra.mxu0 0.0
      %1214 = vmatprep.subr.mxu0 0.0
      %1215 = vmatpush1.xpose.msra.mxu0 0.0
      %1216 = vmatprep.subr.mxu0 0.0
      %1217 = vmatpush1.xpose.msra.mxu0 0.0
      %1218 = vmatprep.mubr.f32.mxu0 0.0
      %1219 = vmatmul.mubr.f32.gmra.mrb[0].mxu0 %v1150
      %v1220 = vpop.f32.mrb[0].mxu0
      %v1221 = vadd.f32 0.0, %v1220
      %v1222 = vpop.f32.mrb[0].mxu0
      %1223 = vdwg.mxu0
      %v1224 = vmul.f32 %v1221, 0.35355338
      %v1225 = vsel %vm671, %v1224, -inf
      %1226 = vmax.xlane.f32.xlu0 %v1225
      %v1227 = vpop.xlane.xlu0 %1226
      %v1228 = vsub.f32 %v1224, %v1227
      %v1229 = vmul.f32 %v1228, 1.442695
      %v1230 = vpow.pop %v1229
      %v1231 = vsel %vm671, %v1230, 0.0
      %1232 = vadd.xlane.f32.xlu0 %v1231
      %v1233 = vpop.xlane.xlu0 %1232
      %v1234 = vrcp.pop %v1233
      %v1235 = vmul.f32 %v1230, %v1234
      %1236 = vrot.lane.b32.xlu0 %v661, 48
      %v1237 = vpop.permute.xlu0 %1236
      %v1240 = vsel %vm671, %v1235, 0
      %1242 = vmatprep.subr.mxu0 0.0
      %1243 = vmatpush1.msra.mxu0 %v1237
      %1244 = vmatprep.subr.mxu0 0.0
      %1245 = vmatpush1.msra.mxu0 0.0
      %1246 = vmatprep.subr.mxu0 0.0
      %1247 = vmatpush1.msra.mxu0 0.0
      %1248 = vmatprep.subr.mxu0 0.0
      %1249 = vmatpush1.msra.mxu0 0.0
      %1250 = vmatprep.subr.mxu0 0.0
      %1251 = vmatpush1.msra.mxu0 0.0
      %1252 = vmatprep.subr.mxu0 0.0
      %1253 = vmatpush1.msra.mxu0 0.0
      %1254 = vmatprep.subr.mxu0 0.0
      %1255 = vmatpush1.msra.mxu0 0.0
      %1256 = vmatprep.subr.mxu0 0.0
      %1257 = vmatpush1.msra.mxu0 0.0
      %1258 = vmatprep.subr.mxu0 0.0
      %1259 = vmatpush1.msra.mxu0 0.0
      %1260 = vmatprep.subr.mxu0 0.0
      %1261 = vmatpush1.msra.mxu0 0.0
      %1262 = vmatprep.subr.mxu0 0.0
      %1263 = vmatpush1.msra.mxu0 0.0
      %1264 = vmatprep.subr.mxu0 0.0
      %1265 = vmatpush1.msra.mxu0 0.0
      %1266 = vmatprep.subr.mxu0 0.0
      %1267 = vmatpush1.msra.mxu0 0.0
      %1268 = vmatprep.subr.mxu0 0.0
      %1269 = vmatpush1.msra.mxu0 0.0
      %1270 = vmatprep.subr.mxu0 0.0
      %1271 = vmatpush1.msra.mxu0 0.0
      %1272 = vmatprep.subr.mxu0 0.0
      %1273 = vmatpush1.msra.mxu0 0.0
      %1274 = vmatprep.subr.mxu0 0.0
      %1275 = vmatpush1.msra.mxu0 0.0
      %1276 = vmatprep.subr.mxu0 0.0
      %1277 = vmatpush1.msra.mxu0 0.0
      %1278 = vmatprep.subr.mxu0 0.0
      %1279 = vmatpush1.msra.mxu0 0.0
      %1280 = vmatprep.subr.mxu0 0.0
      %1281 = vmatpush1.msra.mxu0 0.0
      %1282 = vmatprep.subr.mxu0 0.0
      %1283 = vmatpush1.msra.mxu0 0.0
      %1284 = vmatprep.subr.mxu0 0.0
      %1285 = vmatpush1.msra.mxu0 0.0
      %1286 = vmatprep.subr.mxu0 0.0
      %1287 = vmatpush1.msra.mxu0 0.0
      %1288 = vmatprep.subr.mxu0 0.0
      %1289 = vmatpush1.msra.mxu0 0.0
      %1290 = vmatprep.subr.mxu0 0.0
      %1291 = vmatpush1.msra.mxu0 0.0
      %1292 = vmatprep.subr.mxu0 0.0
      %1293 = vmatpush1.msra.mxu0 0.0
      %1294 = vmatprep.subr.mxu0 0.0
      %1295 = vmatpush1.msra.mxu0 0.0
      %1296 = vmatprep.subr.mxu0 0.0
      %1297 = vmatpush1.msra.mxu0 0.0
      %1298 = vmatprep.subr.mxu0 0.0
      %1299 = vmatpush1.msra.mxu0 0.0
      %1300 = vmatprep.subr.mxu0 0.0
      %1301 = vmatpush1.msra.mxu0 0.0
      %1302 = vmatprep.subr.mxu0 0.0
      %1303 = vmatpush1.msra.mxu0 0.0
      %1304 = vmatprep.subr.mxu0 0.0
      %1305 = vmatpush1.msra.mxu0 0.0
      %1306 = vmatprep.mubr.f32.mxu0 0.0
      %1307 = vmatmul.mubr.f32.gmra.mrb[0].mxu0 %v1240
      %v1308 = vpop.f32.mrb[0].mxu0
      %v1309 = vadd.f32 0.0, %v1308
      %v1310 = vpop.f32.mrb[0].mxu0
      %1311 = vdwg.mxu0
      %v1313 = vsel %vm671, %v1309, 0
      %1315 = vmatprep.subr.mxu0 0.0
      %1316 = vmatpush1.msra.mxu0 %v666
      %1317 = vmatprep.subr.mxu0 0.0
      %1318 = vmatpush1.msra.mxu0 0.0
      %1319 = vmatprep.subr.mxu0 0.0
      %1320 = vmatpush1.msra.mxu0 0.0
      %1321 = vmatprep.subr.mxu0 0.0
      %1322 = vmatpush1.msra.mxu0 0.0
      %1323 = vmatprep.subr.mxu0 0.0
      %1324 = vmatpush1.msra.mxu0 0.0
      %1325 = vmatprep.subr.mxu0 0.0
      %1326 = vmatpush1.msra.mxu0 0.0
      %1327 = vmatprep.subr.mxu0 0.0
      %1328 = vmatpush1.msra.mxu0 0.0
      %1329 = vmatprep.subr.mxu0 0.0
      %1330 = vmatpush1.msra.mxu0 0.0
      %1331 = vmatprep.subr.mxu0 0.0
      %1332 = vmatpush1.msra.mxu0 0.0
      %1333 = vmatprep.subr.mxu0 0.0
      %1334 = vmatpush1.msra.mxu0 0.0
      %1335 = vmatprep.subr.mxu0 0.0
      %1336 = vmatpush1.msra.mxu0 0.0
      %1337 = vmatprep.subr.mxu0 0.0
      %1338 = vmatpush1.msra.mxu0 0.0
      %1339 = vmatprep.subr.mxu0 0.0
      %1340 = vmatpush1.msra.mxu0 0.0
      %1341 = vmatprep.subr.mxu0 0.0
      %1342 = vmatpush1.msra.mxu0 0.0
      %1343 = vmatprep.subr.mxu0 0.0
      %1344 = vmatpush1.msra.mxu0 0.0
      %1345 = vmatprep.subr.mxu0 0.0
      %1346 = vmatpush1.msra.mxu0 0.0
      %1347 = vmatprep.subr.mxu0 0.0
      %1348 = vmatpush1.msra.mxu0 0.0
      %1349 = vmatprep.subr.mxu0 0.0
      %1350 = vmatpush1.msra.mxu0 0.0
      %1351 = vmatprep.subr.mxu0 0.0
      %1352 = vmatpush1.msra.mxu0 0.0
      %1353 = vmatprep.subr.mxu0 0.0
      %1354 = vmatpush1.msra.mxu0 0.0
      %1355 = vmatprep.subr.mxu0 0.0
      %1356 = vmatpush1.msra.mxu0 0.0
      %1357 = vmatprep.subr.mxu0 0.0
      %1358 = vmatpush1.msra.mxu0 0.0
      %1359 = vmatprep.subr.mxu0 0.0
      %1360 = vmatpush1.msra.mxu0 0.0
      %1361 = vmatprep.subr.mxu0 0.0
      %1362 = vmatpush1.msra.mxu0 0.0
      %1363 = vmatprep.subr.mxu0 0.0
      %1364 = vmatpush1.msra.mxu0 0.0
      %1365 = vmatprep.subr.mxu0 0.0
      %1366 = vmatpush1.msra.mxu0 0.0
      %1367 = vmatprep.subr.mxu0 0.0
      %1368 = vmatpush1.msra.mxu0 0.0
      %1369 = vmatprep.subr.mxu0 0.0
      %1370 = vmatpush1.msra.mxu0 0.0
      %1371 = vmatprep.subr.mxu0 0.0
      %1372 = vmatpush1.msra.mxu0 0.0
      %1373 = vmatprep.subr.mxu0 0.0
      %1374 = vmatpush1.msra.mxu0 0.0
      %1375 = vmatprep.subr.mxu0 0.0
      %1376 = vmatpush1.msra.mxu0 0.0
      %1377 = vmatprep.subr.mxu0 0.0
      %1378 = vmatpush1.msra.mxu0 0.0
      %1379 = vmatprep.mubr.f32.mxu0 0.0
      %1380 = vmatmul.mubr.f32.gmra.mrb[0].mxu0 %v1313
      %v1381 = vpop.f32.mrb[0].mxu0
      %v1382 = vadd.f32 0.0, %v1381
      %v1383 = vpop.f32.mrb[0].mxu0
      %1384 = vdwg.mxu0
      %v1385 = vadd.f32 %v1143, %v1382
      %1386 = vrot.lane.b32.xlu0 %v661, 72
      %v1387 = vpop.permute.xlu0 %1386
      %1388 = vrot.lane.b32.xlu0 %v661, 56
      %v1389 = vpop.permute.xlu0 %1388
      %v1390 = vsel %vm671, %v1387, 0
      %v1392 = vsel %vm671, %v1389, 0
      %1394 = vmatprep.subr.mxu0 0.0
      %1395 = vmatpush1.xpose.msra.mxu0 %v1392
      %1396 = vmatprep.subr.mxu0 0.0
      %1397 = vmatpush1.xpose.msra.mxu0 0.0
      %1398 = vmatprep.subr.mxu0 0.0
      %1399 = vmatpush1.xpose.msra.mxu0 0.0
      %1400 = vmatprep.subr.mxu0 0.0
      %1401 = vmatpush1.xpose.msra.mxu0 0.0
      %1402 = vmatprep.subr.mxu0 0.0
      %1403 = vmatpush1.xpose.msra.mxu0 0.0
      %1404 = vmatprep.subr.mxu0 0.0
      %1405 = vmatpush1.xpose.msra.mxu0 0.0
      %1406 = vmatprep.subr.mxu0 0.0
      %1407 = vmatpush1.xpose.msra.mxu0 0.0
      %1408 = vmatprep.subr.mxu0 0.0
      %1409 = vmatpush1.xpose.msra.mxu0 0.0
      %1410 = vmatprep.subr.mxu0 0.0
      %1411 = vmatpush1.xpose.msra.mxu0 0.0
      %1412 = vmatprep.subr.mxu0 0.0
      %1413 = vmatpush1.xpose.msra.mxu0 0.0
      %1414 = vmatprep.subr.mxu0 0.0
      %1415 = vmatpush1.xpose.msra.mxu0 0.0
      %1416 = vmatprep.subr.mxu0 0.0
      %1417 = vmatpush1.xpose.msra.mxu0 0.0
      %1418 = vmatprep.subr.mxu0 0.0
      %1419 = vmatpush1.xpose.msra.mxu0 0.0
      %1420 = vmatprep.subr.mxu0 0.0
      %1421 = vmatpush1.xpose.msra.mxu0 0.0
      %1422 = vmatprep.subr.mxu0 0.0
      %1423 = vmatpush1.xpose.msra.mxu0 0.0
      %1424 = vmatprep.subr.mxu0 0.0
      %1425 = vmatpush1.xpose.msra.mxu0 0.0
      %1426 = vmatprep.subr.mxu0 0.0
      %1427 = vmatpush1.xpose.msra.mxu0 0.0
      %1428 = vmatprep.subr.mxu0 0.0
      %1429 = vmatpush1.xpose.msra.mxu0 0.0
      %1430 = vmatprep.subr.mxu0 0.0
      %1431 = vmatpush1.xpose.msra.mxu0 0.0
      %1432 = vmatprep.subr.mxu0 0.0
      %1433 = vmatpush1.xpose.msra.mxu0 0.0
      %1434 = vmatprep.subr.mxu0 0.0
      %1435 = vmatpush1.xpose.msra.mxu0 0.0
      %1436 = vmatprep.subr.mxu0 0.0
      %1437 = vmatpush1.xpose.msra.mxu0 0.0
      %1438 = vmatprep.subr.mxu0 0.0
      %1439 = vmatpush1.xpose.msra.mxu0 0.0
      %1440 = vmatprep.subr.mxu0 0.0
      %1441 = vmatpush1.xpose.msra.mxu0 0.0
      %1442 = vmatprep.subr.mxu0 0.0
      %1443 = vmatpush1.xpose.msra.mxu0 0.0
      %1444 = vmatprep.subr.mxu0 0.0
      %1445 = vmatpush1.xpose.msra.mxu0 0.0
      %1446 = vmatprep.subr.mxu0 0.0
      %1447 = vmatpush1.xpose.msra.mxu0 0.0
      %1448 = vmatprep.subr.mxu0 0.0
      %1449 = vmatpush1.xpose.msra.mxu0 0.0
      %1450 = vmatprep.subr.mxu0 0.0
      %1451 = vmatpush1.xpose.msra.mxu0 0.0
      %1452 = vmatprep.subr.mxu0 0.0
      %1453 = vmatpush1.xpose.msra.mxu0 0.0
      %1454 = vmatprep.subr.mxu0 0.0
      %1455 = vmatpush1.xpose.msra.mxu0 0.0
      %1456 = vmatprep.subr.mxu0 0.0
      %1457 = vmatpush1.xpose.msra.mxu0 0.0
      %1458 = vmatprep.mubr.f32.mxu0 0.0
      %1459 = vmatmul.mubr.f32.gmra.mrb[0].mxu0 %v1390
      %v1460 = vpop.f32.mrb[0].mxu0
      %v1461 = vadd.f32 0.0, %v1460
      %v1462 = vpop.f32.mrb[0].mxu0
      %1463 = vdwg.mxu0
      %v1464 = vmul.f32 %v1461, 0.35355338
      %v1465 = vsel %vm671, %v1464, -inf
      %1466 = vmax.xlane.f32.xlu0 %v1465
      %v1467 = vpop.xlane.xlu0 %1466
      %v1468 = vsub.f32 %v1464, %v1467
      %v1469 = vmul.f32 %v1468, 1.442695
      %v1470 = vpow.pop %v1469
      %v1471 = vsel %vm671, %v1470, 0.0
      %1472 = vadd.xlane.f32.xlu0 %v1471
      %v1473 = vpop.xlane.xlu0 %1472
      %v1474 = vrcp.pop %v1473
      %v1475 = vmul.f32 %v1470, %v1474
      %1476 = vrot.lane.b32.xlu0 %v661, 40
      %v1477 = vpop.permute.xlu0 %1476
      %v1480 = vsel %vm671, %v1475, 0
      %1482 = vmatprep.subr.mxu0 0.0
      %1483 = vmatpush1.msra.mxu0 %v1477
      %1484 = vmatprep.subr.mxu0 0.0
      %1485 = vmatpush1.msra.mxu0 0.0
      %1486 = vmatprep.subr.mxu0 0.0
      %1487 = vmatpush1.msra.mxu0 0.0
      %1488 = vmatprep.subr.mxu0 0.0
      %1489 = vmatpush1.msra.mxu0 0.0
      %1490 = vmatprep.subr.mxu0 0.0
      %1491 = vmatpush1.msra.mxu0 0.0
      %1492 = vmatprep.subr.mxu0 0.0
      %1493 = vmatpush1.msra.mxu0 0.0
      %1494 = vmatprep.subr.mxu0 0.0
      %1495 = vmatpush1.msra.mxu0 0.0
      %1496 = vmatprep.subr.mxu0 0.0
      %1497 = vmatpush1.msra.mxu0 0.0
      %1498 = vmatprep.subr.mxu0 0.0
      %1499 = vmatpush1.msra.mxu0 0.0
      %1500 = vmatprep.subr.mxu0 0.0
      %1501 = vmatpush1.msra.mxu0 0.0
      %1502 = vmatprep.subr.mxu0 0.0
      %1503 = vmatpush1.msra.mxu0 0.0
      %1504 = vmatprep.subr.mxu0 0.0
      %1505 = vmatpush1.msra.mxu0 0.0
      %1506 = vmatprep.subr.mxu0 0.0
      %1507 = vmatpush1.msra.mxu0 0.0
      %1508 = vmatprep.subr.mxu0 0.0
      %1509 = vmatpush1.msra.mxu0 0.0
      %1510 = vmatprep.subr.mxu0 0.0
      %1511 = vmatpush1.msra.mxu0 0.0
      %1512 = vmatprep.subr.mxu0 0.0
      %1513 = vmatpush1.msra.mxu0 0.0
      %1514 = vmatprep.subr.mxu0 0.0
      %1515 = vmatpush1.msra.mxu0 0.0
      %1516 = vmatprep.subr.mxu0 0.0
      %1517 = vmatpush1.msra.mxu0 0.0
      %1518 = vmatprep.subr.mxu0 0.0
      %1519 = vmatpush1.msra.mxu0 0.0
      %1520 = vmatprep.subr.mxu0 0.0
      %1521 = vmatpush1.msra.mxu0 0.0
      %1522 = vmatprep.subr.mxu0 0.0
      %1523 = vmatpush1.msra.mxu0 0.0
      %1524 = vmatprep.subr.mxu0 0.0
      %1525 = vmatpush1.msra.mxu0 0.0
      %1526 = vmatprep.subr.mxu0 0.0
      %1527 = vmatpush1.msra.mxu0 0.0
      %1528 = vmatprep.subr.mxu0 0.0
      %1529 = vmatpush1.msra.mxu0 0.0
      %1530 = vmatprep.subr.mxu0 0.0
      %1531 = vmatpush1.msra.mxu0 0.0
      %1532 = vmatprep.subr.mxu0 0.0
      %1533 = vmatpush1.msra.mxu0 0.0
      %1534 = vmatprep.subr.mxu0 0.0
      %1535 = vmatpush1.msra.mxu0 0.0
      %1536 = vmatprep.subr.mxu0 0.0
      %1537 = vmatpush1.msra.mxu0 0.0
      %1538 = vmatprep.subr.mxu0 0.0
      %1539 = vmatpush1.msra.mxu0 0.0
      %1540 = vmatprep.subr.mxu0 0.0
      %1541 = vmatpush1.msra.mxu0 0.0
      %1542 = vmatprep.subr.mxu0 0.0
      %1543 = vmatpush1.msra.mxu0 0.0
      %1544 = vmatprep.subr.mxu0 0.0
      %1545 = vmatpush1.msra.mxu0 0.0
      %1546 = vmatprep.mubr.f32.mxu0 0.0
      %1547 = vmatmul.mubr.f32.gmra.mrb[0].mxu0 %v1480
      %v1548 = vpop.f32.mrb[0].mxu0
      %v1549 = vadd.f32 0.0, %v1548
      %v1550 = vpop.f32.mrb[0].mxu0
      %1551 = vdwg.mxu0
      %v1553 = vsel %vm671, %v1549, 0
      %1555 = vmatprep.subr.mxu0 0.0
      %1556 = vmatpush1.msra.mxu0 %v667
      %1557 = vmatprep.subr.mxu0 0.0
      %1558 = vmatpush1.msra.mxu0 0.0
      %1559 = vmatprep.subr.mxu0 0.0
      %1560 = vmatpush1.msra.mxu0 0.0
      %1561 = vmatprep.subr.mxu0 0.0
      %1562 = vmatpush1.msra.mxu0 0.0
      %1563 = vmatprep.subr.mxu0 0.0
      %1564 = vmatpush1.msra.mxu0 0.0
      %1565 = vmatprep.subr.mxu0 0.0
      %1566 = vmatpush1.msra.mxu0 0.0
      %1567 = vmatprep.subr.mxu0 0.0
      %1568 = vmatpush1.msra.mxu0 0.0
      %1569 = vmatprep.subr.mxu0 0.0
      %1570 = vmatpush1.msra.mxu0 0.0
      %1571 = vmatprep.subr.mxu0 0.0
      %1572 = vmatpush1.msra.mxu0 0.0
      %1573 = vmatprep.subr.mxu0 0.0
      %1574 = vmatpush1.msra.mxu0 0.0
      %1575 = vmatprep.subr.mxu0 0.0
      %1576 = vmatpush1.msra.mxu0 0.0
      %1577 = vmatprep.subr.mxu0 0.0
      %1578 = vmatpush1.msra.mxu0 0.0
      %1579 = vmatprep.subr.mxu0 0.0
      %1580 = vmatpush1.msra.mxu0 0.0
      %1581 = vmatprep.subr.mxu0 0.0
      %1582 = vmatpush1.msra.mxu0 0.0
      %1583 = vmatprep.subr.mxu0 0.0
      %1584 = vmatpush1.msra.mxu0 0.0
      %1585 = vmatprep.subr.mxu0 0.0
      %1586 = vmatpush1.msra.mxu0 0.0
      %1587 = vmatprep.subr.mxu0 0.0
      %1588 = vmatpush1.msra.mxu0 0.0
      %1589 = vmatprep.subr.mxu0 0.0
      %1590 = vmatpush1.msra.mxu0 0.0
      %1591 = vmatprep.subr.mxu0 0.0
      %1592 = vmatpush1.msra.mxu0 0.0
      %1593 = vmatprep.subr.mxu0 0.0
      %1594 = vmatpush1.msra.mxu0 0.0
      %1595 = vmatprep.subr.mxu0 0.0
      %1596 = vmatpush1.msra.mxu0 0.0
      %1597 = vmatprep.subr.mxu0 0.0
      %1598 = vmatpush1.msra.mxu0 0.0
      %1599 = vmatprep.subr.mxu0 0.0
      %1600 = vmatpush1.msra.mxu0 0.0
      %1601 = vmatprep.subr.mxu0 0.0
      %1602 = vmatpush1.msra.mxu0 0.0
      %1603 = vmatprep.subr.mxu0 0.0
      %1604 = vmatpush1.msra.mxu0 0.0
      %1605 = vmatprep.subr.mxu0 0.0
      %1606 = vmatpush1.msra.mxu0 0.0
      %1607 = vmatprep.subr.mxu0 0.0
      %1608 = vmatpush1.msra.mxu0 0.0
      %1609 = vmatprep.subr.mxu0 0.0
      %1610 = vmatpush1.msra.mxu0 0.0
      %1611 = vmatprep.subr.mxu0 0.0
      %1612 = vmatpush1.msra.mxu0 0.0
      %1613 = vmatprep.subr.mxu0 0.0
      %1614 = vmatpush1.msra.mxu0 0.0
      %1615 = vmatprep.subr.mxu0 0.0
      %1616 = vmatpush1.msra.mxu0 0.0
      %1617 = vmatprep.subr.mxu0 0.0
      %1618 = vmatpush1.msra.mxu0 0.0
      %1619 = vmatprep.mubr.f32.mxu0 0.0
      %1620 = vmatmul.mubr.f32.gmra.mrb[0].mxu0 %v1553
      %v1621 = vpop.f32.mrb[0].mxu0
      %v1622 = vadd.f32 0.0, %v1621
      %v1623 = vpop.f32.mrb[0].mxu0
      %1624 = vdwg.mxu0
      %v1625 = vadd.f32 %v1385, %v1622
      %v1626 = vadd.f32 %v575, %v1625
      %v1627 = vld [vmem:[%s5] sm:$0x1]
      %v1629 = vlaneseq
      %v1630 = vshrl.u32 %v1629, 7
      %v1631 = vsub.s32 0, %v1630
      %v1632 = vrot.slane %v1627, %v1631
      %v1634 = vadd.f32 %v1626, %v1632
      %v1635 = vld [vmem:[%s10] sm:$0x1]
      %v1636 = vld [vmem:[%s11] sm:$0x1]
      %v1637 = vsel %vm578, %v1634, 0.0
      %v1638 = vsel %vm590, %v1637, 0.0
      %1639 = vadd.xlane.f32.xlu0 %v1638
      %v1640 = vpop.xlane.xlu0 %1639
      %v1641 = vsel %vm578, 0.0, %v1634
      %v1642 = vsel %vm590, %v1641, 0.0
      %1643 = vadd.xlane.f32.xlu0 %v1642
      %v1644 = vpop.xlane.xlu0 %1643
      %v1645 = vsel %vm578, %v1640, %v1644
      %v1646 = vmul.f32 %v1645, 0.0625
      %v1647 = vsub.f32 %v1634, %v1646
      %v1648 = vmul.f32 %v1647, %v1647
      %v1649 = vsel %vm578, %v1648, 0.0
      %v1650 = vsel %vm590, %v1649, 0.0
      %1651 = vadd.xlane.f32.xlu0 %v1650
      %v1652 = vpop.xlane.xlu0 %1651
      %v1653 = vsel %vm578, 0.0, %v1648
      %v1654 = vsel %vm590, %v1653, 0.0
      %1655 = vadd.xlane.f32.xlu0 %v1654
      %v1656 = vpop.xlane.xlu0 %1655
      %v1657 = vsel %vm578, %v1652, %v1656
      %v1658 = vmul.f32 %v1657, 0.0625
      %v1659 = vadd.f32 %v1658, 1e-05
      %v1660 = vrsqrt.pop %v1659
      %v1661 = vmul.f32 %v1647, %v1660
      %v1663 = vlaneseq
      %v1664 = vshrl.u32 %v1663, 7
      %v1665 = vsub.s32 0, %v1664
      %v1666 = vrot.slane %v1635, %v1665
      %v1668 = vmul.f32 %v1661, %v1666
      %v1670 = vlaneseq
      %v1671 = vshrl.u32 %v1670, 7
      %v1672 = vsub.s32 0, %v1671
      %v1673 = vrot.slane %v1636, %v1672
      %v1675 = vadd.f32 %v1668, %v1673
      %v1676 = vld [vmem:[%s6] sm:$0xff]
      %v1677 = vld [vmem:[%s6 + $0x8] sm:$0xff]
      %v1678 = vld [vmem:[%s6 + $0x10] sm:$0xff]
      %v1679 = vld [vmem:[%s6 + $0x18] sm:$0xff]
      %v1680 = vld [vmem:[%s7] sm:$0x1]
      %v1682 = vlaneseq
      %v1683 = vshrl.u32 %v1682, 7
      %v1684 = vsub.s32 0, %v1683
      %v1685 = vrot.slane %v1680, %v1684
      %v1688 = vsel %vm590, %v1675, 0
      %1690 = vmatprep.subr.mxu0 0.0
      %1691 = vmatpush1.msra.mxu0 %v1676
      %1692 = vmatprep.subr.mxu0 0.0
      %1693 = vmatpush1.msra.mxu0 %v1677
      %1694 = vmatprep.subr.mxu0 0.0
      %1695 = vmatpush1.msra.mxu0 %v1678
      %1696 = vmatprep.subr.mxu0 0.0
      %1697 = vmatpush1.msra.mxu0 %v1679
      %1698 = vmatprep.subr.mxu0 0.0
      %1699 = vmatpush1.msra.mxu0 0.0
      %1700 = vmatprep.subr.mxu0 0.0
      %1701 = vmatpush1.msra.mxu0 0.0
      %1702 = vmatprep.subr.mxu0 0.0
      %1703 = vmatpush1.msra.mxu0 0.0
      %1704 = vmatprep.subr.mxu0 0.0
      %1705 = vmatpush1.msra.mxu0 0.0
      %1706 = vmatprep.subr.mxu0 0.0
      %1707 = vmatpush1.msra.mxu0 0.0
      %1708 = vmatprep.subr.mxu0 0.0
      %1709 = vmatpush1.msra.mxu0 0.0
      %1710 = vmatprep.subr.mxu0 0.0
      %1711 = vmatpush1.msra.mxu0 0.0
      %1712 = vmatprep.subr.mxu0 0.0
      %1713 = vmatpush1.msra.mxu0 0.0
      %1714 = vmatprep.subr.mxu0 0.0
      %1715 = vmatpush1.msra.mxu0 0.0
      %1716 = vmatprep.subr.mxu0 0.0
      %1717 = vmatpush1.msra.mxu0 0.0
      %1718 = vmatprep.subr.mxu0 0.0
      %1719 = vmatpush1.msra.mxu0 0.0
      %1720 = vmatprep.subr.mxu0 0.0
      %1721 = vmatpush1.msra.mxu0 0.0
      %1722 = vmatprep.subr.mxu0 0.0
      %1723 = vmatpush1.msra.mxu0 0.0
      %1724 = vmatprep.subr.mxu0 0.0
      %1725 = vmatpush1.msra.mxu0 0.0
      %1726 = vmatprep.subr.mxu0 0.0
      %1727 = vmatpush1.msra.mxu0 0.0
      %1728 = vmatprep.subr.mxu0 0.0
      %1729 = vmatpush1.msra.mxu0 0.0
      %1730 = vmatprep.subr.mxu0 0.0
      %1731 = vmatpush1.msra.mxu0 0.0
      %1732 = vmatprep.subr.mxu0 0.0
      %1733 = vmatpush1.msra.mxu0 0.0
      %1734 = vmatprep.subr.mxu0 0.0
      %1735 = vmatpush1.msra.mxu0 0.0
      %1736 = vmatprep.subr.mxu0 0.0
      %1737 = vmatpush1.msra.mxu0 0.0
      %1738 = vmatprep.subr.mxu0 0.0
      %1739 = vmatpush1.msra.mxu0 0.0
      %1740 = vmatprep.subr.mxu0 0.0
      %1741 = vmatpush1.msra.mxu0 0.0
      %1742 = vmatprep.subr.mxu0 0.0
      %1743 = vmatpush1.msra.mxu0 0.0
      %1744 = vmatprep.subr.mxu0 0.0
      %1745 = vmatpush1.msra.mxu0 0.0
      %1746 = vmatprep.subr.mxu0 0.0
      %1747 = vmatpush1.msra.mxu0 0.0
      %1748 = vmatprep.subr.mxu0 0.0
      %1749 = vmatpush1.msra.mxu0 0.0
      %1750 = vmatprep.subr.mxu0 0.0
      %1751 = vmatpush1.msra.mxu0 0.0
      %1752 = vmatprep.subr.mxu0 0.0
      %1753 = vmatpush1.msra.mxu0 0.0
      %1754 = vmatprep.mubr.f32.mxu0 0.0
      %1755 = vmatmul.mubr.f32.gmra.mrb[0].mxu0 %v1688
      %v1756 = vpop.f32.mrb[0].mxu0
      %v1757 = vadd.f32 %v1685, %v1756
      %v1758 = vpop.f32.mrb[0].mxu0
      %1759 = vdwg.mxu0
      %v1760 = vmax.f32 %v1757, 0.0
      %v1761 = vld [vmem:[%s8] sm:$0xff]
      %v1762 = vld [vmem:[%s8 + $0x8] sm:$0xff]
      %v1763 = vld [vmem:[%s8 + $0x10] sm:$0xff]
      %v1764 = vld [vmem:[%s8 + $0x18] sm:$0xff]
      %v1765 = vld [vmem:[%s8 + $0x20] sm:$0xff]
      %v1766 = vld [vmem:[%s8 + $0x28] sm:$0xff]
      %v1767 = vld [vmem:[%s8 + $0x30] sm:$0xff]
      %v1768 = vld [vmem:[%s8 + $0x38] sm:$0xff]
      %v1769 = vld [vmem:[%s8 + $0x40] sm:$0xff]
      %v1770 = vld [vmem:[%s8 + $0x48] sm:$0xff]
      %v1771 = vld [vmem:[%s8 + $0x50] sm:$0xff]
      %v1772 = vld [vmem:[%s8 + $0x58] sm:$0xff]
      %v1773 = vld [vmem:[%s8 + $0x60] sm:$0xff]
      %v1774 = vld [vmem:[%s8 + $0x68] sm:$0xff]
      %v1775 = vld [vmem:[%s8 + $0x70] sm:$0xff]
      %v1776 = vld [vmem:[%s8 + $0x78] sm:$0xff]
      %v1777 = vld [vmem:[%s9] sm:$0x1]
      %v1779 = vlaneseq
      %v1780 = vshrl.u32 %v1779, 7
      %v1781 = vsub.s32 0, %v1780
      %v1782 = vrot.slane %v1777, %v1781
      %1784 = vmatprep.subr.mxu0 0.0
      %1785 = vmatpush1.msra.mxu0 %v1761
      %1786 = vmatprep.subr.mxu0 0.0
      %1787 = vmatpush1.msra.mxu0 %v1762
      %1788 = vmatprep.subr.mxu0 0.0
      %1789 = vmatpush1.msra.mxu0 %v1763
      %1790 = vmatprep.subr.mxu0 0.0
      %1791 = vmatpush1.msra.mxu0 %v1764
      %1792 = vmatprep.subr.mxu0 0.0
      %1793 = vmatpush1.msra.mxu0 %v1765
      %1794 = vmatprep.subr.mxu0 0.0
      %1795 = vmatpush1.msra.mxu0 %v1766
      %1796 = vmatprep.subr.mxu0 0.0
      %1797 = vmatpush1.msra.mxu0 %v1767
      %1798 = vmatprep.subr.mxu0 0.0
      %1799 = vmatpush1.msra.mxu0 %v1768
      %1800 = vmatprep.subr.mxu0 0.0
      %1801 = vmatpush1.msra.mxu0 %v1769
      %1802 = vmatprep.subr.mxu0 0.0
      %1803 = vmatpush1.msra.mxu0 %v1770
      %1804 = vmatprep.subr.mxu0 0.0
      %1805 = vmatpush1.msra.mxu0 %v1771
      %1806 = vmatprep.subr.mxu0 0.0
      %1807 = vmatpush1.msra.mxu0 %v1772
      %1808 = vmatprep.subr.mxu0 0.0
      %1809 = vmatpush1.msra.mxu0 %v1773
      %1810 = vmatprep.subr.mxu0 0.0
      %1811 = vmatpush1.msra.mxu0 %v1774
      %1812 = vmatprep.subr.mxu0 0.0
      %1813 = vmatpush1.msra.mxu0 %v1775
      %1814 = vmatprep.subr.mxu0 0.0
      %1815 = vmatpush1.msra.mxu0 %v1776
      %1816 = vmatprep.subr.mxu0 0.0
      %1817 = vmatpush1.msra.mxu0 0.0
      %1818 = vmatprep.subr.mxu0 0.0
      %1819 = vmatpush1.msra.mxu0 0.0
      %1820 = vmatprep.subr.mxu0 0.0
      %1821 = vmatpush1.msra.mxu0 0.0
      %1822 = vmatprep.subr.mxu0 0.0
      %1823 = vmatpush1.msra.mxu0 0.0
      %1824 = vmatprep.subr.mxu0 0.0
      %1825 = vmatpush1.msra.mxu0 0.0
      %1826 = vmatprep.subr.mxu0 0.0
      %1827 = vmatpush1.msra.mxu0 0.0
      %1828 = vmatprep.subr.mxu0 0.0
      %1829 = vmatpush1.msra.mxu0 0.0
      %1830 = vmatprep.subr.mxu0 0.0
      %1831 = vmatpush1.msra.mxu0 0.0
      %1832 = vmatprep.subr.mxu0 0.0
      %1833 = vmatpush1.msra.mxu0 0.0
      %1834 = vmatprep.subr.mxu0 0.0
      %1835 = vmatpush1.msra.mxu0 0.0
      %1836 = vmatprep.subr.mxu0 0.0
      %1837 = vmatpush1.msra.mxu0 0.0
      %1838 = vmatprep.subr.mxu0 0.0
      %1839 = vmatpush1.msra.mxu0 0.0
      %1840 = vmatprep.subr.mxu0 0.0
      %1841 = vmatpush1.msra.mxu0 0.0
      %1842 = vmatprep.subr.mxu0 0.0
      %1843 = vmatpush1.msra.mxu0 0.0
      %1844 = vmatprep.subr.mxu0 0.0
      %1845 = vmatpush1.msra.mxu0 0.0
      %1846 = vmatprep.subr.mxu0 0.0
      %1847 = vmatpush1.msra.mxu0 0.0
      %1848 = vmatprep.mubr.f32.mxu0 0.0
      %1849 = vmatmul.mubr.f32.gmra.mrb[0].mxu0 %v1760
      %v1850 = vpop.f32.mrb[0].mxu0
      %v1851 = vadd.f32 %v1782, %v1850
      %v1852 = vpop.f32.mrb[0].mxu0
      %1853 = vdwg.mxu0
      %v1854 = vadd.f32 %v1675, %v1851
      %v1855 = vld [vmem:[%s12] sm:$0x1]
      %v1856 = vld [vmem:[%s13] sm:$0x1]
      %v1857 = vsel %vm578, %v1854, 0.0
      %v1858 = vsel %vm590, %v1857, 0.0
      %1859 = vadd.xlane.f32.xlu0 %v1858
      %v1860 = vpop.xlane.xlu0 %1859
      %v1861 = vsel %vm578, 0.0, %v1854
      %v1862 = vsel %vm590, %v1861, 0.0
      %1863 = vadd.xlane.f32.xlu0 %v1862
      %v1864 = vpop.xlane.xlu0 %1863
      %v1865 = vsel %vm578, %v1860, %v1864
      %v1866 = vmul.f32 %v1865, 0.0625
      %v1867 = vsub.f32 %v1854, %v1866
      %v1868 = vmul.f32 %v1867, %v1867
      %v1869 = vsel %vm578, %v1868, 0.0
      %v1870 = vsel %vm590, %v1869, 0.0
      %1871 = vadd.xlane.f32.xlu0 %v1870
      %v1872 = vpop.xlane.xlu0 %1871
      %v1873 = vsel %vm578, 0.0, %v1868
      %v1874 = vsel %vm590, %v1873, 0.0
      %1875 = vadd.xlane.f32.xlu0 %v1874
      %v1876 = vpop.xlane.xlu0 %1875
      %v1877 = vsel %vm578, %v1872, %v1876
      %v1878 = vmul.f32 %v1877, 0.0625
      %v1879 = vadd.f32 %v1878, 1e-05
      %v1880 = vrsqrt.pop %v1879
      %v1881 = vmul.f32 %v1867, %v1880
      %v1883 = vlaneseq
      %v1884 = vshrl.u32 %v1883, 7
      %v1885 = vsub.s32 0, %v1884
      %v1886 = vrot.slane %v1855, %v1885
      %v1888 = vmul.f32 %v1881, %v1886
      %v1890 = vlaneseq
      %v1891 = vshrl.u32 %v1890, 7
      %v1892 = vsub.s32 0, %v1891
      %v1893 = vrot.slane %v1856, %v1892
      %v1895 = vadd.f32 %v1888, %v1893
      %s1896 = scalar_lea.vmem %s2, 32
      %v1897 = vld [vmem:[%s1896] sm:$0xff]
      %v1898 = vld [vmem:[%s1896 + $0x8] sm:$0xff]
      %v1899 = vld [vmem:[%s1896 + $0x10] sm:$0xff]
      %v1900 = vld [vmem:[%s1896 + $0x18] sm:$0xff]
      %s1901 = scalar_lea.vmem %s3, 1
      %v1902 = vld [vmem:[%s1901] sm:$0x1]
      %v1904 = vlaneseq
      %v1905 = vshrl.u32 %v1904, 7
      %v1906 = vsub.s32 0, %v1905
      %v1907 = vrot.slane %v1902, %v1906
      %v1910 = vsel %vm590, %v1895, 0
      %1912 = vmatprep.subr.mxu0 0.0
      %1913 = vmatpush1.msra.mxu0 %v1897
      %1914 = vmatprep.subr.mxu0 0.0
      %1915 = vmatpush1.msra.mxu0 %v1898
      %1916 = vmatprep.subr.mxu0 0.0
      %1917 = vmatpush1.msra.mxu0 %v1899
      %1918 = vmatprep.subr.mxu0 0.0
      %1919 = vmatpush1.msra.mxu0 %v1900
      %1920 = vmatprep.subr.mxu0 0.0
      %1921 = vmatpush1.msra.mxu0 0.0
      %1922 = vmatprep.subr.mxu0 0.0
      %1923 = vmatpush1.msra.mxu0 0.0
      %1924 = vmatprep.subr.mxu0 0.0
      %1925 = vmatpush1.msra.mxu0 0.0
      %1926 = vmatprep.subr.mxu0 0.0
      %1927 = vmatpush1.msra.mxu0 0.0
      %1928 = vmatprep.subr.mxu0 0.0
      %1929 = vmatpush1.msra.mxu0 0.0
      %1930 = vmatprep.subr.mxu0 0.0
      %1931 = vmatpush1.msra.mxu0 0.0
      %1932 = vmatprep.subr.mxu0 0.0
      %1933 = vmatpush1.msra.mxu0 0.0
      %1934 = vmatprep.subr.mxu0 0.0
      %1935 = vmatpush1.msra.mxu0 0.0
      %1936 = vmatprep.subr.mxu0 0.0
      %1937 = vmatpush1.msra.mxu0 0.0
      %1938 = vmatprep.subr.mxu0 0.0
      %1939 = vmatpush1.msra.mxu0 0.0
      %1940 = vmatprep.subr.mxu0 0.0
      %1941 = vmatpush1.msra.mxu0 0.0
      %1942 = vmatprep.subr.mxu0 0.0
      %1943 = vmatpush1.msra.mxu0 0.0
      %1944 = vmatprep.subr.mxu0 0.0
      %1945 = vmatpush1.msra.mxu0 0.0
      %1946 = vmatprep.subr.mxu0 0.0
      %1947 = vmatpush1.msra.mxu0 0.0
      %1948 = vmatprep.subr.mxu0 0.0
      %1949 = vmatpush1.msra.mxu0 0.0
      %1950 = vmatprep.subr.mxu0 0.0
      %1951 = vmatpush1.msra.mxu0 0.0
      %1952 = vmatprep.subr.mxu0 0.0
      %1953 = vmatpush1.msra.mxu0 0.0
      %1954 = vmatprep.subr.mxu0 0.0
      %1955 = vmatpush1.msra.mxu0 0.0
      %1956 = vmatprep.subr.mxu0 0.0
      %1957 = vmatpush1.msra.mxu0 0.0
      %1958 = vmatprep.subr.mxu0 0.0
      %1959 = vmatpush1.msra.mxu0 0.0
      %1960 = vmatprep.subr.mxu0 0.0
      %1961 = vmatpush1.msra.mxu0 0.0
      %1962 = vmatprep.subr.mxu0 0.0
      %1963 = vmatpush1.msra.mxu0 0.0
      %1964 = vmatprep.subr.mxu0 0.0
      %1965 = vmatpush1.msra.mxu0 0.0
      %1966 = vmatprep.subr.mxu0 0.0
      %1967 = vmatpush1.msra.mxu0 0.0
      %1968 = vmatprep.subr.mxu0 0.0
      %1969 = vmatpush1.msra.mxu0 0.0
      %1970 = vmatprep.subr.mxu0 0.0
      %1971 = vmatpush1.msra.mxu0 0.0
      %1972 = vmatprep.subr.mxu0 0.0
      %1973 = vmatpush1.msra.mxu0 0.0
      %1974 = vmatprep.subr.mxu0 0.0
      %1975 = vmatpush1.msra.mxu0 0.0
      %1976 = vmatprep.mubr.f32.mxu0 0.0
      %1977 = vmatmul.mubr.f32.gmra.mrb[0].mxu0 %v1910
      %v1978 = vpop.f32.mrb[0].mxu0
      %v1979 = vadd.f32 %v1907, %v1978
      %v1980 = vpop.f32.mrb[0].mxu0
      %1981 = vdwg.mxu0
      %s1982 = scalar_lea.vmem %s4, 32
      %v1983 = vld [vmem:[%s1982] sm:$0xff]
      %v1984 = vld [vmem:[%s1982 + $0x8] sm:$0xff]
      %v1985 = vld [vmem:[%s1982 + $0x10] sm:$0xff]
      %v1986 = vld [vmem:[%s1982 + $0x18] sm:$0xff]
      %1988 = vrot.lane.b32.xlu0 %v1979, 112
      %v1989 = vpop.permute.xlu0 %1988
      %v1990 = vsel %vm671, %v1979, 0
      %v1992 = vsel %vm671, %v1989, 0
      %1994 = vmatprep.subr.mxu0 0.0
      %1995 = vmatpush1.xpose.msra.mxu0 %v1992
      %1996 = vmatprep.subr.mxu0 0.0
      %1997 = vmatpush1.xpose.msra.mxu0 0.0
      %1998 = vmatprep.subr.mxu0 0.0
      %1999 = vmatpush1.xpose.msra.mxu0 0.0
      %2000 = vmatprep.subr.mxu0 0.0
      %2001 = vmatpush1.xpose.msra.mxu0 0.0
      %2002 = vmatprep.subr.mxu0 0.0
      %2003 = vmatpush1.xpose.msra.mxu0 0.0
      %2004 = vmatprep.subr.mxu0 0.0
      %2005 = vmatpush1.xpose.msra.mxu0 0.0
      %2006 = vmatprep.subr.mxu0 0.0
      %2007 = vmatpush1.xpose.msra.mxu0 0.0
      %2008 = vmatprep.subr.mxu0 0.0
      %2009 = vmatpush1.xpose.msra.mxu0 0.0
      %2010 = vmatprep.subr.mxu0 0.0
      %2011 = vmatpush1.xpose.msra.mxu0 0.0
      %2012 = vmatprep.subr.mxu0 0.0
      %2013 = vmatpush1.xpose.msra.mxu0 0.0
      %2014 = vmatprep.subr.mxu0 0.0
      %2015 = vmatpush1.xpose.msra.mxu0 0.0
      %2016 = vmatprep.subr.mxu0 0.0
      %2017 = vmatpush1.xpose.msra.mxu0 0.0
      %2018 = vmatprep.subr.mxu0 0.0
      %2019 = vmatpush1.xpose.msra.mxu0 0.0
      %2020 = vmatprep.subr.mxu0 0.0
      %2021 = vmatpush1.xpose.msra.mxu0 0.0
      %2022 = vmatprep.subr.mxu0 0.0
      %2023 = vmatpush1.xpose.msra.mxu0 0.0
      %2024 = vmatprep.subr.mxu0 0.0
      %2025 = vmatpush1.xpose.msra.mxu0 0.0
      %2026 = vmatprep.subr.mxu0 0.0
      %2027 = vmatpush1.xpose.msra.mxu0 0.0
      %2028 = vmatprep.subr.mxu0 0.0
      %2029 = vmatpush1.xpose.msra.mxu0 0.0
      %2030 = vmatprep.subr.mxu0 0.0
      %2031 = vmatpush1.xpose.msra.mxu0 0.0
      %2032 = vmatprep.subr.mxu0 0.0
      %2033 = vmatpush1.xpose.msra.mxu0 0.0
      %2034 = vmatprep.subr.mxu0 0.0
      %2035 = vmatpush1.xpose.msra.mxu0 0.0
      %2036 = vmatprep.subr.mxu0 0.0
      %2037 = vmatpush1.xpose.msra.mxu0 0.0
      %2038 = vmatprep.subr.mxu0 0.0
      %2039 = vmatpush1.xpose.msra.mxu0 0.0
      %2040 = vmatprep.subr.mxu0 0.0
      %2041 = vmatpush1.xpose.msra.mxu0 0.0
      %2042 = vmatprep.subr.mxu0 0.0
      %2043 = vmatpush1.xpose.msra.mxu0 0.0
      %2044 = vmatprep.subr.mxu0 0.0
      %2045 = vmatpush1.xpose.msra.mxu0 0.0
      %2046 = vmatprep.subr.mxu0 0.0
      %2047 = vmatpush1.xpose.msra.mxu0 0.0
      %2048 = vmatprep.subr.mxu0 0.0
      %2049 = vmatpush1.xpose.msra.mxu0 0.0
      %2050 = vmatprep.subr.mxu0 0.0
      %2051 = vmatpush1.xpose.msra.mxu0 0.0
      %2052 = vmatprep.subr.mxu0 0.0
      %2053 = vmatpush1.xpose.msra.mxu0 0.0
      %2054 = vmatprep.subr.mxu0 0.0
      %2055 = vmatpush1.xpose.msra.mxu0 0.0
      %2056 = vmatprep.subr.mxu0 0.0
      %2057 = vmatpush1.xpose.msra.mxu0 0.0
      %2058 = vmatprep.mubr.f32.mxu0 0.0
      %2059 = vmatmul.mubr.f32.gmra.mrb[0].mxu0 %v1990
      %v2060 = vpop.f32.mrb[0].mxu0
      %v2061 = vadd.f32 0.0, %v2060
      %v2062 = vpop.f32.mrb[0].mxu0
      %2063 = vdwg.mxu0
      %v2064 = vmul.f32 %v2061, 0.35355338
      %v2065 = vsel %vm671, %v2064, -inf
      %2066 = vmax.xlane.f32.xlu0 %v2065
      %v2067 = vpop.xlane.xlu0 %2066
      %v2068 = vsub.f32 %v2064, %v2067
      %v2069 = vmul.f32 %v2068, 1.442695
      %v2070 = vpow.pop %v2069
      %v2071 = vsel %vm671, %v2070, 0.0
      %2072 = vadd.xlane.f32.xlu0 %v2071
      %v2073 = vpop.xlane.xlu0 %2072
      %v2074 = vrcp.pop %v2073
      %v2075 = vmul.f32 %v2070, %v2074
      %2076 = vrot.lane.b32.xlu0 %v1979, 96
      %v2077 = vpop.permute.xlu0 %2076
      %v2080 = vsel %vm671, %v2075, 0
      %2082 = vmatprep.subr.mxu0 0.0
      %2083 = vmatpush1.msra.mxu0 %v2077
      %2084 = vmatprep.subr.mxu0 0.0
      %2085 = vmatpush1.msra.mxu0 0.0
      %2086 = vmatprep.subr.mxu0 0.0
      %2087 = vmatpush1.msra.mxu0 0.0
      %2088 = vmatprep.subr.mxu0 0.0
      %2089 = vmatpush1.msra.mxu0 0.0
      %2090 = vmatprep.subr.mxu0 0.0
      %2091 = vmatpush1.msra.mxu0 0.0
      %2092 = vmatprep.subr.mxu0 0.0
      %2093 = vmatpush1.msra.mxu0 0.0
      %2094 = vmatprep.subr.mxu0 0.0
      %2095 = vmatpush1.msra.mxu0 0.0
      %2096 = vmatprep.subr.mxu0 0.0
      %2097 = vmatpush1.msra.mxu0 0.0
      %2098 = vmatprep.subr.mxu0 0.0
      %2099 = vmatpush1.msra.mxu0 0.0
      %2100 = vmatprep.subr.mxu0 0.0
      %2101 = vmatpush1.msra.mxu0 0.0
      %2102 = vmatprep.subr.mxu0 0.0
      %2103 = vmatpush1.msra.mxu0 0.0
      %2104 = vmatprep.subr.mxu0 0.0
      %2105 = vmatpush1.msra.mxu0 0.0
      %2106 = vmatprep.subr.mxu0 0.0
      %2107 = vmatpush1.msra.mxu0 0.0
      %2108 = vmatprep.subr.mxu0 0.0
      %2109 = vmatpush1.msra.mxu0 0.0
      %2110 = vmatprep.subr.mxu0 0.0
      %2111 = vmatpush1.msra.mxu0 0.0
      %2112 = vmatprep.subr.mxu0 0.0
      %2113 = vmatpush1.msra.mxu0 0.0
      %2114 = vmatprep.subr.mxu0 0.0
      %2115 = vmatpush1.msra.mxu0 0.0
      %2116 = vmatprep.subr.mxu0 0.0
      %2117 = vmatpush1.msra.mxu0 0.0
      %2118 = vmatprep.subr.mxu0 0.0
      %2119 = vmatpush1.msra.mxu0 0.0
      %2120 = vmatprep.subr.mxu0 0.0
      %2121 = vmatpush1.msra.mxu0 0.0
      %2122 = vmatprep.subr.mxu0 0.0
      %2123 = vmatpush1.msra.mxu0 0.0
      %2124 = vmatprep.subr.mxu0 0.0
      %2125 = vmatpush1.msra.mxu0 0.0
      %2126 = vmatprep.subr.mxu0 0.0
      %2127 = vmatpush1.msra.mxu0 0.0
      %2128 = vmatprep.subr.mxu0 0.0
      %2129 = vmatpush1.msra.mxu0 0.0
      %2130 = vmatprep.subr.mxu0 0.0
      %2131 = vmatpush1.msra.mxu0 0.0
      %2132 = vmatprep.subr.mxu0 0.0
      %2133 = vmatpush1.msra.mxu0 0.0
      %2134 = vmatprep.subr.mxu0 0.0
      %2135 = vmatpush1.msra.mxu0 0.0
      %2136 = vmatprep.subr.mxu0 0.0
      %2137 = vmatpush1.msra.mxu0 0.0
      %2138 = vmatprep.subr.mxu0 0.0
      %2139 = vmatpush1.msra.mxu0 0.0
      %2140 = vmatprep.subr.mxu0 0.0
      %2141 = vmatpush1.msra.mxu0 0.0
      %2142 = vmatprep.subr.mxu0 0.0
      %2143 = vmatpush1.msra.mxu0 0.0
      %2144 = vmatprep.subr.mxu0 0.0
      %2145 = vmatpush1.msra.mxu0 0.0
      %2146 = vmatprep.mubr.f32.mxu0 0.0
      %2147 = vmatmul.mubr.f32.gmra.mrb[0].mxu0 %v2080
      %v2148 = vpop.f32.mrb[0].mxu0
      %v2149 = vadd.f32 0.0, %v2148
      %v2150 = vpop.f32.mrb[0].mxu0
      %2151 = vdwg.mxu0
      %2152 = vrot.lane.b32.xlu0 %v1979, 120
      %v2153 = vpop.permute.xlu0 %2152
      %2154 = vrot.lane.b32.xlu0 %v1979, 104
      %v2155 = vpop.permute.xlu0 %2154
      %v2156 = vsel %vm671, %v2153, 0
      %v2158 = vsel %vm671, %v2155, 0
      %2160 = vmatprep.subr.mxu0 0.0
      %2161 = vmatpush1.xpose.msra.mxu0 %v2158
      %2162 = vmatprep.subr.mxu0 0.0
      %2163 = vmatpush1.xpose.msra.mxu0 0.0
      %2164 = vmatprep.subr.mxu0 0.0
      %2165 = vmatpush1.xpose.msra.mxu0 0.0
      %2166 = vmatprep.subr.mxu0 0.0
      %2167 = vmatpush1.xpose.msra.mxu0 0.0
      %2168 = vmatprep.subr.mxu0 0.0
      %2169 = vmatpush1.xpose.msra.mxu0 0.0
      %2170 = vmatprep.subr.mxu0 0.0
      %2171 = vmatpush1.xpose.msra.mxu0 0.0
      %2172 = vmatprep.subr.mxu0 0.0
      %2173 = vmatpush1.xpose.msra.mxu0 0.0
      %2174 = vmatprep.subr.mxu0 0.0
      %2175 = vmatpush1.xpose.msra.mxu0 0.0
      %2176 = vmatprep.subr.mxu0 0.0
      %2177 = vmatpush1.xpose.msra.mxu0 0.0
      %2178 = vmatprep.subr.mxu0 0.0
      %2179 = vmatpush1.xpose.msra.mxu0 0.0
      %2180 = vmatprep.subr.mxu0 0.0
      %2181 = vmatpush1.xpose.msra.mxu0 0.0
      %2182 = vmatprep.subr.mxu0 0.0
      %2183 = vmatpush1.xpose.msra.mxu0 0.0
      %2184 = vmatprep.subr.mxu0 0.0
      %2185 = vmatpush1.xpose.msra.mxu0 0.0
      %2186 = vmatprep.subr.mxu0 0.0
      %2187 = vmatpush1.xpose.msra.mxu0 0.0
      %2188 = vmatprep.subr.mxu0 0.0
      %2189 = vmatpush1.xpose.msra.mxu0 0.0
      %2190 = vmatprep.subr.mxu0 0.0
      %2191 = vmatpush1.xpose.msra.mxu0 0.0
      %2192 = vmatprep.subr.mxu0 0.0
      %2193 = vmatpush1.xpose.msra.mxu0 0.0
      %2194 = vmatprep.subr.mxu0 0.0
      %2195 = vmatpush1.xpose.msra.mxu0 0.0
      %2196 = vmatprep.subr.mxu0 0.0
      %2197 = vmatpush1.xpose.msra.mxu0 0.0
      %2198 = vmatprep.subr.mxu0 0.0
      %2199 = vmatpush1.xpose.msra.mxu0 0.0
      %2200 = vmatprep.subr.mxu0 0.0
      %2201 = vmatpush1.xpose.msra.mxu0 0.0
      %2202 = vmatprep.subr.mxu0 0.0
      %2203 = vmatpush1.xpose.msra.mxu0 0.0
      %2204 = vmatprep.subr.mxu0 0.0
      %2205 = vmatpush1.xpose.msra.mxu0 0.0
      %2206 = vmatprep.subr.mxu0 0.0
      %2207 = vmatpush1.xpose.msra.mxu0 0.0
      %2208 = vmatprep.subr.mxu0 0.0
      %2209 = vmatpush1.xpose.msra.mxu0 0.0
      %2210 = vmatprep.subr.mxu0 0.0
      %2211 = vmatpush1.xpose.msra.mxu0 0.0
      %2212 = vmatprep.subr.mxu0 0.0
      %2213 = vmatpush1.xpose.msra.mxu0 0.0
      %2214 = vmatprep.subr.mxu0 0.0
      %2215 = vmatpush1.xpose.msra.mxu0 0.0
      %2216 = vmatprep.subr.mxu0 0.0
      %2217 = vmatpush1.xpose.msra.mxu0 0.0
      %2218 = vmatprep.subr.mxu0 0.0
      %2219 = vmatpush1.xpose.msra.mxu0 0.0
      %2220 = vmatprep.subr.mxu0 0.0
      %2221 = vmatpush1.xpose.msra.mxu0 0.0
      %2222 = vmatprep.subr.mxu0 0.0
      %2223 = vmatpush1.xpose.msra.mxu0 0.0
      %2224 = vmatprep.mubr.f32.mxu0 0.0
      %2225 = vmatmul.mubr.f32.gmra.mrb[0].mxu0 %v2156
      %v2226 = vpop.f32.mrb[0].mxu0
      %v2227 = vadd.f32 0.0, %v2226
      %v2228 = vpop.f32.mrb[0].mxu0
      %2229 = vdwg.mxu0
      %v2230 = vmul.f32 %v2227, 0.35355338
      %v2231 = vsel %vm671, %v2230, -inf
      %2232 = vmax.xlane.f32.xlu0 %v2231
      %v2233 = vpop.xlane.xlu0 %2232
      %v2234 = vsub.f32 %v2230, %v2233
      %v2235 = vmul.f32 %v2234, 1.442695
      %v2236 = vpow.pop %v2235
      %v2237 = vsel %vm671, %v2236, 0.0
      %2238 = vadd.xlane.f32.xlu0 %v2237
      %v2239 = vpop.xlane.xlu0 %2238
      %v2240 = vrcp.pop %v2239
      %v2241 = vmul.f32 %v2236, %v2240
      %2242 = vrot.lane.b32.xlu0 %v1979, 88
      %v2243 = vpop.permute.xlu0 %2242
      %v2246 = vsel %vm671, %v2241, 0
      %2248 = vmatprep.subr.mxu0 0.0
      %2249 = vmatpush1.msra.mxu0 %v2243
      %2250 = vmatprep.subr.mxu0 0.0
      %2251 = vmatpush1.msra.mxu0 0.0
      %2252 = vmatprep.subr.mxu0 0.0
      %2253 = vmatpush1.msra.mxu0 0.0
      %2254 = vmatprep.subr.mxu0 0.0
      %2255 = vmatpush1.msra.mxu0 0.0
      %2256 = vmatprep.subr.mxu0 0.0
      %2257 = vmatpush1.msra.mxu0 0.0
      %2258 = vmatprep.subr.mxu0 0.0
      %2259 = vmatpush1.msra.mxu0 0.0
      %2260 = vmatprep.subr.mxu0 0.0
      %2261 = vmatpush1.msra.mxu0 0.0
      %2262 = vmatprep.subr.mxu0 0.0
      %2263 = vmatpush1.msra.mxu0 0.0
      %2264 = vmatprep.subr.mxu0 0.0
      %2265 = vmatpush1.msra.mxu0 0.0
      %2266 = vmatprep.subr.mxu0 0.0
      %2267 = vmatpush1.msra.mxu0 0.0
      %2268 = vmatprep.subr.mxu0 0.0
      %2269 = vmatpush1.msra.mxu0 0.0
      %2270 = vmatprep.subr.mxu0 0.0
      %2271 = vmatpush1.msra.mxu0 0.0
      %2272 = vmatprep.subr.mxu0 0.0
      %2273 = vmatpush1.msra.mxu0 0.0
      %2274 = vmatprep.subr.mxu0 0.0
      %2275 = vmatpush1.msra.mxu0 0.0
      %2276 = vmatprep.subr.mxu0 0.0
      %2277 = vmatpush1.msra.mxu0 0.0
      %2278 = vmatprep.subr.mxu0 0.0
      %2279 = vmatpush1.msra.mxu0 0.0
      %2280 = vmatprep.subr.mxu0 0.0
      %2281 = vmatpush1.msra.mxu0 0.0
      %2282 = vmatprep.subr.mxu0 0.0
      %2283 = vmatpush1.msra.mxu0 0.0
      %2284 = vmatprep.subr.mxu0 0.0
      %2285 = vmatpush1.msra.mxu0 0.0
      %2286 = vmatprep.subr.mxu0 0.0
      %2287 = vmatpush1.msra.mxu0 0.0
      %2288 = vmatprep.subr.mxu0 0.0
      %2289 = vmatpush1.msra.mxu0 0.0
      %2290 = vmatprep.subr.mxu0 0.0
      %2291 = vmatpush1.msra.mxu0 0.0
      %2292 = vmatprep.subr.mxu0 0.0
      %2293 = vmatpush1.msra.mxu0 0.0
      %2294 = vmatprep.subr.mxu0 0.0
      %2295 = vmatpush1.msra.mxu0 0.0
      %2296 = vmatprep.subr.mxu0 0.0
      %2297 = vmatpush1.msra.mxu0 0.0
      %2298 = vmatprep.subr.mxu0 0.0
      %2299 = vmatpush1.msra.mxu0 0.0
      %2300 = vmatprep.subr.mxu0 0.0
      %2301 = vmatpush1.msra.mxu0 0.0
      %2302 = vmatprep.subr.mxu0 0.0
      %2303 = vmatpush1.msra.mxu0 0.0
      %2304 = vmatprep.subr.mxu0 0.0
      %2305 = vmatpush1.msra.mxu0 0.0
      %2306 = vmatprep.subr.mxu0 0.0
      %2307 = vmatpush1.msra.mxu0 0.0
      %2308 = vmatprep.subr.mxu0 0.0
      %2309 = vmatpush1.msra.mxu0 0.0
      %2310 = vmatprep.subr.mxu0 0.0
      %2311 = vmatpush1.msra.mxu0 0.0
      %2312 = vmatprep.mubr.f32.mxu0 0.0
      %2313 = vmatmul.mubr.f32.gmra.mrb[0].mxu0 %v2246
      %v2314 = vpop.f32.mrb[0].mxu0
      %v2315 = vadd.f32 0.0, %v2314
      %v2316 = vpop.f32.mrb[0].mxu0
      %2317 = vdwg.mxu0
      %v2319 = vsel %vm671, %v2315, 0
      %2321 = vmatprep.subr.mxu0 0.0
      %2322 = vmatpush1.msra.mxu0 %v1984
      %2323 = vmatprep.subr.mxu0 0.0
      %2324 = vmatpush1.msra.mxu0 0.0
      %2325 = vmatprep.subr.mxu0 0.0
      %2326 = vmatpush1.msra.mxu0 0.0
      %2327 = vmatprep.subr.mxu0 0.0
      %2328 = vmatpush1.msra.mxu0 0.0
      %2329 = vmatprep.subr.mxu0 0.0
      %2330 = vmatpush1.msra.mxu0 0.0
      %2331 = vmatprep.subr.mxu0 0.0
      %2332 = vmatpush1.msra.mxu0 0.0
      %2333 = vmatprep.subr.mxu0 0.0
      %2334 = vmatpush1.msra.mxu0 0.0
      %2335 = vmatprep.subr.mxu0 0.0
      %2336 = vmatpush1.msra.mxu0 0.0
      %2337 = vmatprep.subr.mxu0 0.0
      %2338 = vmatpush1.msra.mxu0 0.0
      %2339 = vmatprep.subr.mxu0 0.0
      %2340 = vmatpush1.msra.mxu0 0.0
      %2341 = vmatprep.subr.mxu0 0.0
      %2342 = vmatpush1.msra.mxu0 0.0
      %2343 = vmatprep.subr.mxu0 0.0
      %2344 = vmatpush1.msra.mxu0 0.0
      %2345 = vmatprep.subr.mxu0 0.0
      %2346 = vmatpush1.msra.mxu0 0.0
      %2347 = vmatprep.subr.mxu0 0.0
      %2348 = vmatpush1.msra.mxu0 0.0
      %2349 = vmatprep.subr.mxu0 0.0
      %2350 = vmatpush1.msra.mxu0 0.0
      %2351 = vmatprep.subr.mxu0 0.0
      %2352 = vmatpush1.msra.mxu0 0.0
      %2353 = vmatprep.subr.mxu0 0.0
      %2354 = vmatpush1.msra.mxu0 0.0
      %2355 = vmatprep.subr.mxu0 0.0
      %2356 = vmatpush1.msra.mxu0 0.0
      %2357 = vmatprep.subr.mxu0 0.0
      %2358 = vmatpush1.msra.mxu0 0.0
      %2359 = vmatprep.subr.mxu0 0.0
      %2360 = vmatpush1.msra.mxu0 0.0
      %2361 = vmatprep.subr.mxu0 0.0
      %2362 = vmatpush1.msra.mxu0 0.0
      %2363 = vmatprep.subr.mxu0 0.0
      %2364 = vmatpush1.msra.mxu0 0.0
      %2365 = vmatprep.subr.mxu0 0.0
      %2366 = vmatpush1.msra.mxu0 0.0
      %2367 = vmatprep.subr.mxu0 0.0
      %2368 = vmatpush1.msra.mxu0 0.0
      %2369 = vmatprep.subr.mxu0 0.0
      %2370 = vmatpush1.msra.mxu0 0.0
      %2371 = vmatprep.subr.mxu0 0.0
      %2372 = vmatpush1.msra.mxu0 0.0
      %2373 = vmatprep.subr.mxu0 0.0
      %2374 = vmatpush1.msra.mxu0 0.0
      %2375 = vmatprep.subr.mxu0 0.0
      %2376 = vmatpush1.msra.mxu0 0.0
      %2377 = vmatprep.subr.mxu0 0.0
      %2378 = vmatpush1.msra.mxu0 0.0
      %2379 = vmatprep.subr.mxu0 0.0
      %2380 = vmatpush1.msra.mxu0 0.0
      %2381 = vmatprep.subr.mxu0 0.0
      %2382 = vmatpush1.msra.mxu0 0.0
      %2383 = vmatprep.subr.mxu0 0.0
      %2384 = vmatpush1.msra.mxu0 0.0
      %2385 = vmatprep.mubr.f32.mxu0 0.0
      %2386 = vmatmul.mubr.f32.gmra.mrb[0].mxu0 %v2319
      %v2387 = vpop.f32.mrb[0].mxu0
      %v2388 = vadd.f32 0.0, %v2387
      %v2389 = vpop.f32.mrb[0].mxu0
      %2390 = vdwg.mxu0
      %v2392 = vsel %vm671, %v2149, 0
      %2394 = vmatprep.subr.mxu0 0.0
      %2395 = vmatpush1.msra.mxu0 %v1983
      %2396 = vmatprep.subr.mxu0 0.0
      %2397 = vmatpush1.msra.mxu0 0.0
      %2398 = vmatprep.subr.mxu0 0.0
      %2399 = vmatpush1.msra.mxu0 0.0
      %2400 = vmatprep.subr.mxu0 0.0
      %2401 = vmatpush1.msra.mxu0 0.0
      %2402 = vmatprep.subr.mxu0 0.0
      %2403 = vmatpush1.msra.mxu0 0.0
      %2404 = vmatprep.subr.mxu0 0.0
      %2405 = vmatpush1.msra.mxu0 0.0
      %2406 = vmatprep.subr.mxu0 0.0
      %2407 = vmatpush1.msra.mxu0 0.0
      %2408 = vmatprep.subr.mxu0 0.0
      %2409 = vmatpush1.msra.mxu0 0.0
      %2410 = vmatprep.subr.mxu0 0.0
      %2411 = vmatpush1.msra.mxu0 0.0
      %2412 = vmatprep.subr.mxu0 0.0
      %2413 = vmatpush1.msra.mxu0 0.0
      %2414 = vmatprep.subr.mxu0 0.0
      %2415 = vmatpush1.msra.mxu0 0.0
      %2416 = vmatprep.subr.mxu0 0.0
      %2417 = vmatpush1.msra.mxu0 0.0
      %2418 = vmatprep.subr.mxu0 0.0
      %2419 = vmatpush1.msra.mxu0 0.0
      %2420 = vmatprep.subr.mxu0 0.0
      %2421 = vmatpush1.msra.mxu0 0.0
      %2422 = vmatprep.subr.mxu0 0.0
      %2423 = vmatpush1.msra.mxu0 0.0
      %2424 = vmatprep.subr.mxu0 0.0
      %2425 = vmatpush1.msra.mxu0 0.0
      %2426 = vmatprep.subr.mxu0 0.0
      %2427 = vmatpush1.msra.mxu0 0.0
      %2428 = vmatprep.subr.mxu0 0.0
      %2429 = vmatpush1.msra.mxu0 0.0
      %2430 = vmatprep.subr.mxu0 0.0
      %2431 = vmatpush1.msra.mxu0 0.0
      %2432 = vmatprep.subr.mxu0 0.0
      %2433 = vmatpush1.msra.mxu0 0.0
      %2434 = vmatprep.subr.mxu0 0.0
      %2435 = vmatpush1.msra.mxu0 0.0
      %2436 = vmatprep.subr.mxu0 0.0
      %2437 = vmatpush1.msra.mxu0 0.0
      %2438 = vmatprep.subr.mxu0 0.0
      %2439 = vmatpush1.msra.mxu0 0.0
      %2440 = vmatprep.subr.mxu0 0.0
      %2441 = vmatpush1.msra.mxu0 0.0
      %2442 = vmatprep.subr.mxu0 0.0
      %2443 = vmatpush1.msra.mxu0 0.0
      %2444 = vmatprep.subr.mxu0 0.0
      %2445 = vmatpush1.msra.mxu0 0.0
      %2446 = vmatprep.subr.mxu0 0.0
      %2447 = vmatpush1.msra.mxu0 0.0
      %2448 = vmatprep.subr.mxu0 0.0
      %2449 = vmatpush1.msra.mxu0 0.0
      %2450 = vmatprep.subr.mxu0 0.0
      %2451 = vmatpush1.msra.mxu0 0.0
      %2452 = vmatprep.subr.mxu0 0.0
      %2453 = vmatpush1.msra.mxu0 0.0
      %2454 = vmatprep.subr.mxu0 0.0
      %2455 = vmatpush1.msra.mxu0 0.0
      %2456 = vmatprep.subr.mxu0 0.0
      %2457 = vmatpush1.msra.mxu0 0.0
      %2458 = vmatprep.mubr.f32.mxu0 0.0
      %2459 = vmatmul.mubr.f32.gmra.mrb[0].mxu0 %v2392
      %v2460 = vpop.f32.mrb[0].mxu0
      %v2461 = vadd.f32 %v2388, %v2460
      %v2462 = vpop.f32.mrb[0].mxu0
      %2463 = vdwg.mxu0
      %2464 = vrot.lane.b32.xlu0 %v1979, 80
      %v2465 = vpop.permute.xlu0 %2464
      %2466 = vrot.lane.b32.xlu0 %v1979, 64
      %v2467 = vpop.permute.xlu0 %2466
      %v2468 = vsel %vm671, %v2465, 0
      %v2470 = vsel %vm671, %v2467, 0
      %2472 = vmatprep.subr.mxu0 0.0
      %2473 = vmatpush1.xpose.msra.mxu0 %v2470
      %2474 = vmatprep.subr.mxu0 0.0
      %2475 = vmatpush1.xpose.msra.mxu0 0.0
      %2476 = vmatprep.subr.mxu0 0.0
      %2477 = vmatpush1.xpose.msra.mxu0 0.0
      %2478 = vmatprep.subr.mxu0 0.0
      %2479 = vmatpush1.xpose.msra.mxu0 0.0
      %2480 = vmatprep.subr.mxu0 0.0
      %2481 = vmatpush1.xpose.msra.mxu0 0.0
      %2482 = vmatprep.subr.mxu0 0.0
      %2483 = vmatpush1.xpose.msra.mxu0 0.0
      %2484 = vmatprep.subr.mxu0 0.0
      %2485 = vmatpush1.xpose.msra.mxu0 0.0
      %2486 = vmatprep.subr.mxu0 0.0
      %2487 = vmatpush1.xpose.msra.mxu0 0.0
      %2488 = vmatprep.subr.mxu0 0.0
      %2489 = vmatpush1.xpose.msra.mxu0 0.0
      %2490 = vmatprep.subr.mxu0 0.0
      %2491 = vmatpush1.xpose.msra.mxu0 0.0
      %2492 = vmatprep.subr.mxu0 0.0
      %2493 = vmatpush1.xpose.msra.mxu0 0.0
      %2494 = vmatprep.subr.mxu0 0.0
      %2495 = vmatpush1.xpose.msra.mxu0 0.0
      %2496 = vmatprep.subr.mxu0 0.0
      %2497 = vmatpush1.xpose.msra.mxu0 0.0
      %2498 = vmatprep.subr.mxu0 0.0
      %2499 = vmatpush1.xpose.msra.mxu0 0.0
      %2500 = vmatprep.subr.mxu0 0.0
      %2501 = vmatpush1.xpose.msra.mxu0 0.0
      %2502 = vmatprep.subr.mxu0 0.0
      %2503 = vmatpush1.xpose.msra.mxu0 0.0
      %2504 = vmatprep.subr.mxu0 0.0
      %2505 = vmatpush1.xpose.msra.mxu0 0.0
      %2506 = vmatprep.subr.mxu0 0.0
      %2507 = vmatpush1.xpose.msra.mxu0 0.0
      %2508 = vmatprep.subr.mxu0 0.0
      %2509 = vmatpush1.xpose.msra.mxu0 0.0
      %2510 = vmatprep.subr.mxu0 0.0
      %2511 = vmatpush1.xpose.msra.mxu0 0.0
      %2512 = vmatprep.subr.mxu0 0.0
      %2513 = vmatpush1.xpose.msra.mxu0 0.0
      %2514 = vmatprep.subr.mxu0 0.0
      %2515 = vmatpush1.xpose.msra.mxu0 0.0
      %2516 = vmatprep.subr.mxu0 0.0
      %2517 = vmatpush1.xpose.msra.mxu0 0.0
      %2518 = vmatprep.subr.mxu0 0.0
      %2519 = vmatpush1.xpose.msra.mxu0 0.0
      %2520 = vmatprep.subr.mxu0 0.0
      %2521 = vmatpush1.xpose.msra.mxu0 0.0
      %2522 = vmatprep.subr.mxu0 0.0
      %2523 = vmatpush1.xpose.msra.mxu0 0.0
      %2524 = vmatprep.subr.mxu0 0.0
      %2525 = vmatpush1.xpose.msra.mxu0 0.0
      %2526 = vmatprep.subr.mxu0 0.0
      %2527 = vmatpush1.xpose.msra.mxu0 0.0
      %2528 = vmatprep.subr.mxu0 0.0
      %2529 = vmatpush1.xpose.msra.mxu0 0.0
      %2530 = vmatprep.subr.mxu0 0.0
      %2531 = vmatpush1.xpose.msra.mxu0 0.0
      %2532 = vmatprep.subr.mxu0 0.0
      %2533 = vmatpush1.xpose.msra.mxu0 0.0
      %2534 = vmatprep.subr.mxu0 0.0
      %2535 = vmatpush1.xpose.msra.mxu0 0.0
      %2536 = vmatprep.mubr.f32.mxu0 0.0
      %2537 = vmatmul.mubr.f32.gmra.mrb[0].mxu0 %v2468
      %v2538 = vpop.f32.mrb[0].mxu0
      %v2539 = vadd.f32 0.0, %v2538
      %v2540 = vpop.f32.mrb[0].mxu0
      %2541 = vdwg.mxu0
      %v2542 = vmul.f32 %v2539, 0.35355338
      %v2543 = vsel %vm671, %v2542, -inf
      %2544 = vmax.xlane.f32.xlu0 %v2543
      %v2545 = vpop.xlane.xlu0 %2544
      %v2546 = vsub.f32 %v2542, %v2545
      %v2547 = vmul.f32 %v2546, 1.442695
      %v2548 = vpow.pop %v2547
      %v2549 = vsel %vm671, %v2548, 0.0
      %2550 = vadd.xlane.f32.xlu0 %v2549
      %v2551 = vpop.xlane.xlu0 %2550
      %v2552 = vrcp.pop %v2551
      %v2553 = vmul.f32 %v2548, %v2552
      %2554 = vrot.lane.b32.xlu0 %v1979, 48
      %v2555 = vpop.permute.xlu0 %2554
      %v2558 = vsel %vm671, %v2553, 0
      %2560 = vmatprep.subr.mxu0 0.0
      %2561 = vmatpush1.msra.mxu0 %v2555
      %2562 = vmatprep.subr.mxu0 0.0
      %2563 = vmatpush1.msra.mxu0 0.0
      %2564 = vmatprep.subr.mxu0 0.0
      %2565 = vmatpush1.msra.mxu0 0.0
      %2566 = vmatprep.subr.mxu0 0.0
      %2567 = vmatpush1.msra.mxu0 0.0
      %2568 = vmatprep.subr.mxu0 0.0
      %2569 = vmatpush1.msra.mxu0 0.0
      %2570 = vmatprep.subr.mxu0 0.0
      %2571 = vmatpush1.msra.mxu0 0.0
      %2572 = vmatprep.subr.mxu0 0.0
      %2573 = vmatpush1.msra.mxu0 0.0
      %2574 = vmatprep.subr.mxu0 0.0
      %2575 = vmatpush1.msra.mxu0 0.0
      %2576 = vmatprep.subr.mxu0 0.0
      %2577 = vmatpush1.msra.mxu0 0.0
      %2578 = vmatprep.subr.mxu0 0.0
      %2579 = vmatpush1.msra.mxu0 0.0
      %2580 = vmatprep.subr.mxu0 0.0
      %2581 = vmatpush1.msra.mxu0 0.0
      %2582 = vmatprep.subr.mxu0 0.0
      %2583 = vmatpush1.msra.mxu0 0.0
      %2584 = vmatprep.subr.mxu0 0.0
      %2585 = vmatpush1.msra.mxu0 0.0
      %2586 = vmatprep.subr.mxu0 0.0
      %2587 = vmatpush1.msra.mxu0 0.0
      %2588 = vmatprep.subr.mxu0 0.0
      %2589 = vmatpush1.msra.mxu0 0.0
      %2590 = vmatprep.subr.mxu0 0.0
      %2591 = vmatpush1.msra.mxu0 0.0
      %2592 = vmatprep.subr.mxu0 0.0
      %2593 = vmatpush1.msra.mxu0 0.0
      %2594 = vmatprep.subr.mxu0 0.0
      %2595 = vmatpush1.msra.mxu0 0.0
      %2596 = vmatprep.subr.mxu0 0.0
      %2597 = vmatpush1.msra.mxu0 0.0
      %2598 = vmatprep.subr.mxu0 0.0
      %2599 = vmatpush1.msra.mxu0 0.0
      %2600 = vmatprep.subr.mxu0 0.0
      %2601 = vmatpush1.msra.mxu0 0.0
      %2602 = vmatprep.subr.mxu0 0.0
      %2603 = vmatpush1.msra.mxu0 0.0
      %2604 = vmatprep.subr.mxu0 0.0
      %2605 = vmatpush1.msra.mxu0 0.0
      %2606 = vmatprep.subr.mxu0 0.0
      %2607 = vmatpush1.msra.mxu0 0.0
      %2608 = vmatprep.subr.mxu0 0.0
      %2609 = vmatpush1.msra.mxu0 0.0
      %2610 = vmatprep.subr.mxu0 0.0
      %2611 = vmatpush1.msra.mxu0 0.0
      %2612 = vmatprep.subr.mxu0 0.0
      %2613 = vmatpush1.msra.mxu0 0.0
      %2614 = vmatprep.subr.mxu0 0.0
      %2615 = vmatpush1.msra.mxu0 0.0
      %2616 = vmatprep.subr.mxu0 0.0
      %2617 = vmatpush1.msra.mxu0 0.0
      %2618 = vmatprep.subr.mxu0 0.0
      %2619 = vmatpush1.msra.mxu0 0.0
      %2620 = vmatprep.subr.mxu0 0.0
      %2621 = vmatpush1.msra.mxu0 0.0
      %2622 = vmatprep.subr.mxu0 0.0
      %2623 = vmatpush1.msra.mxu0 0.0
      %2624 = vmatprep.mubr.f32.mxu0 0.0
      %2625 = vmatmul.mubr.f32.gmra.mrb[0].mxu0 %v2558
      %v2626 = vpop.f32.mrb[0].mxu0
      %v2627 = vadd.f32 0.0, %v2626
      %v2628 = vpop.f32.mrb[0].mxu0
      %2629 = vdwg.mxu0
      %v2631 = vsel %vm671, %v2627, 0
      %2633 = vmatprep.subr.mxu0 0.0
      %2634 = vmatpush1.msra.mxu0 %v1985
      %2635 = vmatprep.subr.mxu0 0.0
      %2636 = vmatpush1.msra.mxu0 0.0
      %2637 = vmatprep.subr.mxu0 0.0
      %2638 = vmatpush1.msra.mxu0 0.0
      %2639 = vmatprep.subr.mxu0 0.0
      %2640 = vmatpush1.msra.mxu0 0.0
      %2641 = vmatprep.subr.mxu0 0.0
      %2642 = vmatpush1.msra.mxu0 0.0
      %2643 = vmatprep.subr.mxu0 0.0
      %2644 = vmatpush1.msra.mxu0 0.0
      %2645 = vmatprep.subr.mxu0 0.0
      %2646 = vmatpush1.msra.mxu0 0.0
      %2647 = vmatprep.subr.mxu0 0.0
      %2648 = vmatpush1.msra.mxu0 0.0
      %2649 = vmatprep.subr.mxu0 0.0
      %2650 = vmatpush1.msra.mxu0 0.0
      %2651 = vmatprep.subr.mxu0 0.0
      %2652 = vmatpush1.msra.mxu0 0.0
      %2653 = vmatprep.subr.mxu0 0.0
      %2654 = vmatpush1.msra.mxu0 0.0
      %2655 = vmatprep.subr.mxu0 0.0
      %2656 = vmatpush1.msra.mxu0 0.0
      %2657 = vmatprep.subr.mxu0 0.0
      %2658 = vmatpush1.msra.mxu0 0.0
      %2659 = vmatprep.subr.mxu0 0.0
      %2660 = vmatpush1.msra.mxu0 0.0
      %2661 = vmatprep.subr.mxu0 0.0
      %2662 = vmatpush1.msra.mxu0 0.0
      %2663 = vmatprep.subr.mxu0 0.0
      %2664 = vmatpush1.msra.mxu0 0.0
      %2665 = vmatprep.subr.mxu0 0.0
      %2666 = vmatpush1.msra.mxu0 0.0
      %2667 = vmatprep.subr.mxu0 0.0
      %2668 = vmatpush1.msra.mxu0 0.0
      %2669 = vmatprep.subr.mxu0 0.0
      %2670 = vmatpush1.msra.mxu0 0.0
      %2671 = vmatprep.subr.mxu0 0.0
      %2672 = vmatpush1.msra.mxu0 0.0
      %2673 = vmatprep.subr.mxu0 0.0
      %2674 = vmatpush1.msra.mxu0 0.0
      %2675 = vmatprep.subr.mxu0 0.0
      %2676 = vmatpush1.msra.mxu0 0.0
      %2677 = vmatprep.subr.mxu0 0.0
      %2678 = vmatpush1.msra.mxu0 0.0
      %2679 = vmatprep.subr.mxu0 0.0
      %2680 = vmatpush1.msra.mxu0 0.0
      %2681 = vmatprep.subr.mxu0 0.0
      %2682 = vmatpush1.msra.mxu0 0.0
      %2683 = vmatprep.subr.mxu0 0.0
      %2684 = vmatpush1.msra.mxu0 0.0
      %2685 = vmatprep.subr.mxu0 0.0
      %2686 = vmatpush1.msra.mxu0 0.0
      %2687 = vmatprep.subr.mxu0 0.0
      %2688 = vmatpush1.msra.mxu0 0.0
      %2689 = vmatprep.subr.mxu0 0.0
      %2690 = vmatpush1.msra.mxu0 0.0
      %2691 = vmatprep.subr.mxu0 0.0
      %2692 = vmatpush1.msra.mxu0 0.0
      %2693 = vmatprep.subr.mxu0 0.0
      %2694 = vmatpush1.msra.mxu0 0.0
      %2695 = vmatprep.subr.mxu0 0.0
      %2696 = vmatpush1.msra.mxu0 0.0
      %2697 = vmatprep.mubr.f32.mxu0 0.0
      %2698 = vmatmul.mubr.f32.gmra.mrb[0].mxu0 %v2631
      %v2699 = vpop.f32.mrb[0].mxu0
      %v2700 = vadd.f32 0.0, %v2699
      %v2701 = vpop.f32.mrb[0].mxu0
      %2702 = vdwg.mxu0
      %v2703 = vadd.f32 %v2461, %v2700
      %2704 = vrot.lane.b32.xlu0 %v1979, 72
      %v2705 = vpop.permute.xlu0 %2704
      %2706 = vrot.lane.b32.xlu0 %v1979, 56
      %v2707 = vpop.permute.xlu0 %2706
      %v2708 = vsel %vm671, %v2705, 0
      %v2710 = vsel %vm671, %v2707, 0
      %2712 = vmatprep.subr.mxu0 0.0
      %2713 = vmatpush1.xpose.msra.mxu0 %v2710
      %2714 = vmatprep.subr.mxu0 0.0
      %2715 = vmatpush1.xpose.msra.mxu0 0.0
      %2716 = vmatprep.subr.mxu0 0.0
      %2717 = vmatpush1.xpose.msra.mxu0 0.0
      %2718 = vmatprep.subr.mxu0 0.0
      %2719 = vmatpush1.xpose.msra.mxu0 0.0
      %2720 = vmatprep.subr.mxu0 0.0
      %2721 = vmatpush1.xpose.msra.mxu0 0.0
      %2722 = vmatprep.subr.mxu0 0.0
      %2723 = vmatpush1.xpose.msra.mxu0 0.0
      %2724 = vmatprep.subr.mxu0 0.0
      %2725 = vmatpush1.xpose.msra.mxu0 0.0
      %2726 = vmatprep.subr.mxu0 0.0
      %2727 = vmatpush1.xpose.msra.mxu0 0.0
      %2728 = vmatprep.subr.mxu0 0.0
      %2729 = vmatpush1.xpose.msra.mxu0 0.0
      %2730 = vmatprep.subr.mxu0 0.0
      %2731 = vmatpush1.xpose.msra.mxu0 0.0
      %2732 = vmatprep.subr.mxu0 0.0
      %2733 = vmatpush1.xpose.msra.mxu0 0.0
      %2734 = vmatprep.subr.mxu0 0.0
      %2735 = vmatpush1.xpose.msra.mxu0 0.0
      %2736 = vmatprep.subr.mxu0 0.0
      %2737 = vmatpush1.xpose.msra.mxu0 0.0
      %2738 = vmatprep.subr.mxu0 0.0
      %2739 = vmatpush1.xpose.msra.mxu0 0.0
      %2740 = vmatprep.subr.mxu0 0.0
      %2741 = vmatpush1.xpose.msra.mxu0 0.0
      %2742 = vmatprep.subr.mxu0 0.0
      %2743 = vmatpush1.xpose.msra.mxu0 0.0
      %2744 = vmatprep.subr.mxu0 0.0
      %2745 = vmatpush1.xpose.msra.mxu0 0.0
      %2746 = vmatprep.subr.mxu0 0.0
      %2747 = vmatpush1.xpose.msra.mxu0 0.0
      %2748 = vmatprep.subr.mxu0 0.0
      %2749 = vmatpush1.xpose.msra.mxu0 0.0
      %2750 = vmatprep.subr.mxu0 0.0
      %2751 = vmatpush1.xpose.msra.mxu0 0.0
      %2752 = vmatprep.subr.mxu0 0.0
      %2753 = vmatpush1.xpose.msra.mxu0 0.0
      %2754 = vmatprep.subr.mxu0 0.0
      %2755 = vmatpush1.xpose.msra.mxu0 0.0
      %2756 = vmatprep.subr.mxu0 0.0
      %2757 = vmatpush1.xpose.msra.mxu0 0.0
      %2758 = vmatprep.subr.mxu0 0.0
      %2759 = vmatpush1.xpose.msra.mxu0 0.0
      %2760 = vmatprep.subr.mxu0 0.0
      %2761 = vmatpush1.xpose.msra.mxu0 0.0
      %2762 = vmatprep.subr.mxu0 0.0
      %2763 = vmatpush1.xpose.msra.mxu0 0.0
      %2764 = vmatprep.subr.mxu0 0.0
      %2765 = vmatpush1.xpose.msra.mxu0 0.0
      %2766 = vmatprep.subr.mxu0 0.0
      %2767 = vmatpush1.xpose.msra.mxu0 0.0
      %2768 = vmatprep.subr.mxu0 0.0
      %2769 = vmatpush1.xpose.msra.mxu0 0.0
      %2770 = vmatprep.subr.mxu0 0.0
      %2771 = vmatpush1.xpose.msra.mxu0 0.0
      %2772 = vmatprep.subr.mxu0 0.0
      %2773 = vmatpush1.xpose.msra.mxu0 0.0
      %2774 = vmatprep.subr.mxu0 0.0
      %2775 = vmatpush1.xpose.msra.mxu0 0.0
      %2776 = vmatprep.mubr.f32.mxu0 0.0
      %2777 = vmatmul.mubr.f32.gmra.mrb[0].mxu0 %v2708
      %v2778 = vpop.f32.mrb[0].mxu0
      %v2779 = vadd.f32 0.0, %v2778
      %v2780 = vpop.f32.mrb[0].mxu0
      %2781 = vdwg.mxu0
      %v2782 = vmul.f32 %v2779, 0.35355338
      %v2783 = vsel %vm671, %v2782, -inf
      %2784 = vmax.xlane.f32.xlu0 %v2783
      %v2785 = vpop.xlane.xlu0 %2784
      %v2786 = vsub.f32 %v2782, %v2785
      %v2787 = vmul.f32 %v2786, 1.442695
      %v2788 = vpow.pop %v2787
      %v2789 = vsel %vm671, %v2788, 0.0
      %2790 = vadd.xlane.f32.xlu0 %v2789
      %v2791 = vpop.xlane.xlu0 %2790
      %v2792 = vrcp.pop %v2791
      %v2793 = vmul.f32 %v2788, %v2792
      %2794 = vrot.lane.b32.xlu0 %v1979, 40
      %v2795 = vpop.permute.xlu0 %2794
      %v2798 = vsel %vm671, %v2793, 0
      %2800 = vmatprep.subr.mxu0 0.0
      %2801 = vmatpush1.msra.mxu0 %v2795
      %2802 = vmatprep.subr.mxu0 0.0
      %2803 = vmatpush1.msra.mxu0 0.0
      %2804 = vmatprep.subr.mxu0 0.0
      %2805 = vmatpush1.msra.mxu0 0.0
      %2806 = vmatprep.subr.mxu0 0.0
      %2807 = vmatpush1.msra.mxu0 0.0
      %2808 = vmatprep.subr.mxu0 0.0
      %2809 = vmatpush1.msra.mxu0 0.0
      %2810 = vmatprep.subr.mxu0 0.0
      %2811 = vmatpush1.msra.mxu0 0.0
      %2812 = vmatprep.subr.mxu0 0.0
      %2813 = vmatpush1.msra.mxu0 0.0
      %2814 = vmatprep.subr.mxu0 0.0
      %2815 = vmatpush1.msra.mxu0 0.0
      %2816 = vmatprep.subr.mxu0 0.0
      %2817 = vmatpush1.msra.mxu0 0.0
      %2818 = vmatprep.subr.mxu0 0.0
      %2819 = vmatpush1.msra.mxu0 0.0
      %2820 = vmatprep.subr.mxu0 0.0
      %2821 = vmatpush1.msra.mxu0 0.0
      %2822 = vmatprep.subr.mxu0 0.0
      %2823 = vmatpush1.msra.mxu0 0.0
      %2824 = vmatprep.subr.mxu0 0.0
      %2825 = vmatpush1.msra.mxu0 0.0
      %2826 = vmatprep.subr.mxu0 0.0
      %2827 = vmatpush1.msra.mxu0 0.0
      %2828 = vmatprep.subr.mxu0 0.0
      %2829 = vmatpush1.msra.mxu0 0.0
      %2830 = vmatprep.subr.mxu0 0.0
      %2831 = vmatpush1.msra.mxu0 0.0
      %2832 = vmatprep.subr.mxu0 0.0
      %2833 = vmatpush1.msra.mxu0 0.0
      %2834 = vmatprep.subr.mxu0 0.0
      %2835 = vmatpush1.msra.mxu0 0.0
      %2836 = vmatprep.subr.mxu0 0.0
      %2837 = vmatpush1.msra.mxu0 0.0
      %2838 = vmatprep.subr.mxu0 0.0
      %2839 = vmatpush1.msra.mxu0 0.0
      %2840 = vmatprep.subr.mxu0 0.0
      %2841 = vmatpush1.msra.mxu0 0.0
      %2842 = vmatprep.subr.mxu0 0.0
      %2843 = vmatpush1.msra.mxu0 0.0
      %2844 = vmatprep.subr.mxu0 0.0
      %2845 = vmatpush1.msra.mxu0 0.0
      %2846 = vmatprep.subr.mxu0 0.0
      %2847 = vmatpush1.msra.mxu0 0.0
      %2848 = vmatprep.subr.mxu0 0.0
      %2849 = vmatpush1.msra.mxu0 0.0
      %2850 = vmatprep.subr.mxu0 0.0
      %2851 = vmatpush1.msra.mxu0 0.0
      %2852 = vmatprep.subr.mxu0 0.0
      %2853 = vmatpush1.msra.mxu0 0.0
      %2854 = vmatprep.subr.mxu0 0.0
      %2855 = vmatpush1.msra.mxu0 0.0
      %2856 = vmatprep.subr.mxu0 0.0
      %2857 = vmatpush1.msra.mxu0 0.0
      %2858 = vmatprep.subr.mxu0 0.0
      %2859 = vmatpush1.msra.mxu0 0.0
      %2860 = vmatprep.subr.mxu0 0.0
      %2861 = vmatpush1.msra.mxu0 0.0
      %2862 = vmatprep.subr.mxu0 0.0
      %2863 = vmatpush1.msra.mxu0 0.0
      %2864 = vmatprep.mubr.f32.mxu0 0.0
      %2865 = vmatmul.mubr.f32.gmra.mrb[0].mxu0 %v2798
      %v2866 = vpop.f32.mrb[0].mxu0
      %v2867 = vadd.f32 0.0, %v2866
      %v2868 = vpop.f32.mrb[0].mxu0
      %2869 = vdwg.mxu0
      %v2871 = vsel %vm671, %v2867, 0
      %2873 = vmatprep.subr.mxu0 0.0
      %2874 = vmatpush1.msra.mxu0 %v1986
      %2875 = vmatprep.subr.mxu0 0.0
      %2876 = vmatpush1.msra.mxu0 0.0
      %2877 = vmatprep.subr.mxu0 0.0
      %2878 = vmatpush1.msra.mxu0 0.0
      %2879 = vmatprep.subr.mxu0 0.0
      %2880 = vmatpush1.msra.mxu0 0.0
      %2881 = vmatprep.subr.mxu0 0.0
      %2882 = vmatpush1.msra.mxu0 0.0
      %2883 = vmatprep.subr.mxu0 0.0
      %2884 = vmatpush1.msra.mxu0 0.0
      %2885 = vmatprep.subr.mxu0 0.0
      %2886 = vmatpush1.msra.mxu0 0.0
      %2887 = vmatprep.subr.mxu0 0.0
      %2888 = vmatpush1.msra.mxu0 0.0
      %2889 = vmatprep.subr.mxu0 0.0
      %2890 = vmatpush1.msra.mxu0 0.0
      %2891 = vmatprep.subr.mxu0 0.0
      %2892 = vmatpush1.msra.mxu0 0.0
      %2893 = vmatprep.subr.mxu0 0.0
      %2894 = vmatpush1.msra.mxu0 0.0
      %2895 = vmatprep.subr.mxu0 0.0
      %2896 = vmatpush1.msra.mxu0 0.0
      %2897 = vmatprep.subr.mxu0 0.0
      %2898 = vmatpush1.msra.mxu0 0.0
      %2899 = vmatprep.subr.mxu0 0.0
      %2900 = vmatpush1.msra.mxu0 0.0
      %2901 = vmatprep.subr.mxu0 0.0
      %2902 = vmatpush1.msra.mxu0 0.0
      %2903 = vmatprep.subr.mxu0 0.0
      %2904 = vmatpush1.msra.mxu0 0.0
      %2905 = vmatprep.subr.mxu0 0.0
      %2906 = vmatpush1.msra.mxu0 0.0
      %2907 = vmatprep.subr.mxu0 0.0
      %2908 = vmatpush1.msra.mxu0 0.0
      %2909 = vmatprep.subr.mxu0 0.0
      %2910 = vmatpush1.msra.mxu0 0.0
      %2911 = vmatprep.subr.mxu0 0.0
      %2912 = vmatpush1.msra.mxu0 0.0
      %2913 = vmatprep.subr.mxu0 0.0
      %2914 = vmatpush1.msra.mxu0 0.0
      %2915 = vmatprep.subr.mxu0 0.0
      %2916 = vmatpush1.msra.mxu0 0.0
      %2917 = vmatprep.subr.mxu0 0.0
      %2918 = vmatpush1.msra.mxu0 0.0
      %2919 = vmatprep.subr.mxu0 0.0
      %2920 = vmatpush1.msra.mxu0 0.0
      %2921 = vmatprep.subr.mxu0 0.0
      %2922 = vmatpush1.msra.mxu0 0.0
      %2923 = vmatprep.subr.mxu0 0.0
      %2924 = vmatpush1.msra.mxu0 0.0
      %2925 = vmatprep.subr.mxu0 0.0
      %2926 = vmatpush1.msra.mxu0 0.0
      %2927 = vmatprep.subr.mxu0 0.0
      %2928 = vmatpush1.msra.mxu0 0.0
      %2929 = vmatprep.subr.mxu0 0.0
      %2930 = vmatpush1.msra.mxu0 0.0
      %2931 = vmatprep.subr.mxu0 0.0
      %2932 = vmatpush1.msra.mxu0 0.0
      %2933 = vmatprep.subr.mxu0 0.0
      %2934 = vmatpush1.msra.mxu0 0.0
      %2935 = vmatprep.subr.mxu0 0.0
      %2936 = vmatpush1.msra.mxu0 0.0
      %2937 = vmatprep.mubr.f32.mxu0 0.0
      %2938 = vmatmul.mubr.f32.gmra.mrb[0].mxu0 %v2871
      %v2939 = vpop.f32.mrb[0].mxu0
      %v2940 = vadd.f32 0.0, %v2939
      %v2941 = vpop.f32.mrb[0].mxu0
      %2942 = vdwg.mxu0
      %v2943 = vadd.f32 %v2703, %v2940
      %v2944 = vadd.f32 %v1895, %v2943
      %s2945 = scalar_lea.vmem %s5, 1
      %v2946 = vld [vmem:[%s2945] sm:$0x1]
      %v2948 = vlaneseq
      %v2949 = vshrl.u32 %v2948, 7
      %v2950 = vsub.s32 0, %v2949
      %v2951 = vrot.slane %v2946, %v2950
      %v2953 = vadd.f32 %v2944, %v2951
      %s2954 = scalar_lea.vmem %s10, 1
      %v2955 = vld [vmem:[%s2954] sm:$0x1]
      %s2956 = scalar_lea.vmem %s11, 1
      %v2957 = vld [vmem:[%s2956] sm:$0x1]
      %v2958 = vsel %vm578, %v2953, 0.0
      %v2959 = vsel %vm590, %v2958, 0.0
      %2960 = vadd.xlane.f32.xlu0 %v2959
      %v2961 = vpop.xlane.xlu0 %2960
      %v2962 = vsel %vm578, 0.0, %v2953
      %v2963 = vsel %vm590, %v2962, 0.0
      %2964 = vadd.xlane.f32.xlu0 %v2963
      %v2965 = vpop.xlane.xlu0 %2964
      %v2966 = vsel %vm578, %v2961, %v2965
      %v2967 = vmul.f32 %v2966, 0.0625
      %v2968 = vsub.f32 %v2953, %v2967
      %v2969 = vmul.f32 %v2968, %v2968
      %v2970 = vsel %vm578, %v2969, 0.0
      %v2971 = vsel %vm590, %v2970, 0.0
      %2972 = vadd.xlane.f32.xlu0 %v2971
      %v2973 = vpop.xlane.xlu0 %2972
      %v2974 = vsel %vm578, 0.0, %v2969
      %v2975 = vsel %vm590, %v2974, 0.0
      %2976 = vadd.xlane.f32.xlu0 %v2975
      %v2977 = vpop.xlane.xlu0 %2976
      %v2978 = vsel %vm578, %v2973, %v2977
      %v2979 = vmul.f32 %v2978, 0.0625
      %v2980 = vadd.f32 %v2979, 1e-05
      %v2981 = vrsqrt.pop %v2980
      %v2982 = vmul.f32 %v2968, %v2981
      %v2984 = vlaneseq
      %v2985 = vshrl.u32 %v2984, 7
      %v2986 = vsub.s32 0, %v2985
      %v2987 = vrot.slane %v2955, %v2986
      %v2989 = vmul.f32 %v2982, %v2987
      %v2991 = vlaneseq
      %v2992 = vshrl.u32 %v2991, 7
      %v2993 = vsub.s32 0, %v2992
      %v2994 = vrot.slane %v2957, %v2993
      %v2996 = vadd.f32 %v2989, %v2994
      %s2997 = scalar_lea.vmem %s6, 32
      %v2998 = vld [vmem:[%s2997] sm:$0xff]
      %v2999 = vld [vmem:[%s2997 + $0x8] sm:$0xff]
      %v3000 = vld [vmem:[%s2997 + $0x10] sm:$0xff]
      %v3001 = vld [vmem:[%s2997 + $0x18] sm:$0xff]
      %s3002 = scalar_lea.vmem %s7, 1
      %v3003 = vld [vmem:[%s3002] sm:$0x1]
      %v3005 = vlaneseq
      %v3006 = vshrl.u32 %v3005, 7
      %v3007 = vsub.s32 0, %v3006
      %v3008 = vrot.slane %v3003, %v3007
      %v3011 = vsel %vm590, %v2996, 0
      %3013 = vmatprep.subr.mxu0 0.0
      %3014 = vmatpush1.msra.mxu0 %v2998
      %3015 = vmatprep.subr.mxu0 0.0
      %3016 = vmatpush1.msra.mxu0 %v2999
      %3017 = vmatprep.subr.mxu0 0.0
      %3018 = vmatpush1.msra.mxu0 %v3000
      %3019 = vmatprep.subr.mxu0 0.0
      %3020 = vmatpush1.msra.mxu0 %v3001
      %3021 = vmatprep.subr.mxu0 0.0
      %3022 = vmatpush1.msra.mxu0 0.0
      %3023 = vmatprep.subr.mxu0 0.0
      %3024 = vmatpush1.msra.mxu0 0.0
      %3025 = vmatprep.subr.mxu0 0.0
      %3026 = vmatpush1.msra.mxu0 0.0
      %3027 = vmatprep.subr.mxu0 0.0
      %3028 = vmatpush1.msra.mxu0 0.0
      %3029 = vmatprep.subr.mxu0 0.0
      %3030 = vmatpush1.msra.mxu0 0.0
      %3031 = vmatprep.subr.mxu0 0.0
      %3032 = vmatpush1.msra.mxu0 0.0
      %3033 = vmatprep.subr.mxu0 0.0
      %3034 = vmatpush1.msra.mxu0 0.0
      %3035 = vmatprep.subr.mxu0 0.0
      %3036 = vmatpush1.msra.mxu0 0.0
      %3037 = vmatprep.subr.mxu0 0.0
      %3038 = vmatpush1.msra.mxu0 0.0
      %3039 = vmatprep.subr.mxu0 0.0
      %3040 = vmatpush1.msra.mxu0 0.0
      %3041 = vmatprep.subr.mxu0 0.0
      %3042 = vmatpush1.msra.mxu0 0.0
      %3043 = vmatprep.subr.mxu0 0.0
      %3044 = vmatpush1.msra.mxu0 0.0
      %3045 = vmatprep.subr.mxu0 0.0
      %3046 = vmatpush1.msra.mxu0 0.0
      %3047 = vmatprep.subr.mxu0 0.0
      %3048 = vmatpush1.msra.mxu0 0.0
      %3049 = vmatprep.subr.mxu0 0.0
      %3050 = vmatpush1.msra.mxu0 0.0
      %3051 = vmatprep.subr.mxu0 0.0
      %3052 = vmatpush1.msra.mxu0 0.0
      %3053 = vmatprep.subr.mxu0 0.0
      %3054 = vmatpush1.msra.mxu0 0.0
      %3055 = vmatprep.subr.mxu0 0.0
      %3056 = vmatpush1.msra.mxu0 0.0
      %3057 = vmatprep.subr.mxu0 0.0
      %3058 = vmatpush1.msra.mxu0 0.0
      %3059 = vmatprep.subr.mxu0 0.0
      %3060 = vmatpush1.msra.mxu0 0.0
      %3061 = vmatprep.subr.mxu0 0.0
      %3062 = vmatpush1.msra.mxu0 0.0
      %3063 = vmatprep.subr.mxu0 0.0
      %3064 = vmatpush1.msra.mxu0 0.0
      %3065 = vmatprep.subr.mxu0 0.0
      %3066 = vmatpush1.msra.mxu0 0.0
      %3067 = vmatprep.subr.mxu0 0.0
      %3068 = vmatpush1.msra.mxu0 0.0
      %3069 = vmatprep.subr.mxu0 0.0
      %3070 = vmatpush1.msra.mxu0 0.0
      %3071 = vmatprep.subr.mxu0 0.0
      %3072 = vmatpush1.msra.mxu0 0.0
      %3073 = vmatprep.subr.mxu0 0.0
      %3074 = vmatpush1.msra.mxu0 0.0
      %3075 = vmatprep.subr.mxu0 0.0
      %3076 = vmatpush1.msra.mxu0 0.0
      %3077 = vmatprep.mubr.f32.mxu0 0.0
      %3078 = vmatmul.mubr.f32.gmra.mrb[0].mxu0 %v3011
      %v3079 = vpop.f32.mrb[0].mxu0
      %v3080 = vadd.f32 %v3008, %v3079
      %v3081 = vpop.f32.mrb[0].mxu0
      %3082 = vdwg.mxu0
      %v3083 = vmax.f32 %v3080, 0.0
      %s3084 = scalar_lea.vmem %s8, 128
      %v3085 = vld [vmem:[%s3084] sm:$0xff]
      %v3086 = vld [vmem:[%s3084 + $0x8] sm:$0xff]
      %v3087 = vld [vmem:[%s3084 + $0x10] sm:$0xff]
      %v3088 = vld [vmem:[%s3084 + $0x18] sm:$0xff]
      %v3089 = vld [vmem:[%s3084 + $0x20] sm:$0xff]
      %v3090 = vld [vmem:[%s3084 + $0x28] sm:$0xff]
      %v3091 = vld [vmem:[%s3084 + $0x30] sm:$0xff]
      %v3092 = vld [vmem:[%s3084 + $0x38] sm:$0xff]
      %v3093 = vld [vmem:[%s3084 + $0x40] sm:$0xff]
      %v3094 = vld [vmem:[%s3084 + $0x48] sm:$0xff]
      %v3095 = vld [vmem:[%s3084 + $0x50] sm:$0xff]
      %v3096 = vld [vmem:[%s3084 + $0x58] sm:$0xff]
      %v3097 = vld [vmem:[%s3084 + $0x60] sm:$0xff]
      %v3098 = vld [vmem:[%s3084 + $0x68] sm:$0xff]
      %v3099 = vld [vmem:[%s3084 + $0x70] sm:$0xff]
      %v3100 = vld [vmem:[%s3084 + $0x78] sm:$0xff]
      %s3101 = scalar_lea.vmem %s9, 1
      %v3102 = vld [vmem:[%s3101] sm:$0x1]
      %v3104 = vlaneseq
      %v3105 = vshrl.u32 %v3104, 7
      %v3106 = vsub.s32 0, %v3105
      %v3107 = vrot.slane %v3102, %v3106
      %3109 = vmatprep.subr.mxu0 0.0
      %3110 = vmatpush1.msra.mxu0 %v3085
      %3111 = vmatprep.subr.mxu0 0.0
      %3112 = vmatpush1.msra.mxu0 %v3086
      %3113 = vmatprep.subr.mxu0 0.0
      %3114 = vmatpush1.msra.mxu0 %v3087
      %3115 = vmatprep.subr.mxu0 0.0
      %3116 = vmatpush1.msra.mxu0 %v3088
      %3117 = vmatprep.subr.mxu0 0.0
      %3118 = vmatpush1.msra.mxu0 %v3089
      %3119 = vmatprep.subr.mxu0 0.0
      %3120 = vmatpush1.msra.mxu0 %v3090
      %3121 = vmatprep.subr.mxu0 0.0
      %3122 = vmatpush1.msra.mxu0 %v3091
      %3123 = vmatprep.subr.mxu0 0.0
      %3124 = vmatpush1.msra.mxu0 %v3092
      %3125 = vmatprep.subr.mxu0 0.0
      %3126 = vmatpush1.msra.mxu0 %v3093
      %3127 = vmatprep.subr.mxu0 0.0
      %3128 = vmatpush1.msra.mxu0 %v3094
      %3129 = vmatprep.subr.mxu0 0.0
      %3130 = vmatpush1.msra.mxu0 %v3095
      %3131 = vmatprep.subr.mxu0 0.0
      %3132 = vmatpush1.msra.mxu0 %v3096
      %3133 = vmatprep.subr.mxu0 0.0
      %3134 = vmatpush1.msra.mxu0 %v3097
      %3135 = vmatprep.subr.mxu0 0.0
      %3136 = vmatpush1.msra.mxu0 %v3098
      %3137 = vmatprep.subr.mxu0 0.0
      %3138 = vmatpush1.msra.mxu0 %v3099
      %3139 = vmatprep.subr.mxu0 0.0
      %3140 = vmatpush1.msra.mxu0 %v3100
      %3141 = vmatprep.subr.mxu0 0.0
      %3142 = vmatpush1.msra.mxu0 0.0
      %3143 = vmatprep.subr.mxu0 0.0
      %3144 = vmatpush1.msra.mxu0 0.0
      %3145 = vmatprep.subr.mxu0 0.0
      %3146 = vmatpush1.msra.mxu0 0.0
      %3147 = vmatprep.subr.mxu0 0.0
      %3148 = vmatpush1.msra.mxu0 0.0
      %3149 = vmatprep.subr.mxu0 0.0
      %3150 = vmatpush1.msra.mxu0 0.0
      %3151 = vmatprep.subr.mxu0 0.0
      %3152 = vmatpush1.msra.mxu0 0.0
      %3153 = vmatprep.subr.mxu0 0.0
      %3154 = vmatpush1.msra.mxu0 0.0
      %3155 = vmatprep.subr.mxu0 0.0
      %3156 = vmatpush1.msra.mxu0 0.0
      %3157 = vmatprep.subr.mxu0 0.0
      %3158 = vmatpush1.msra.mxu0 0.0
      %3159 = vmatprep.subr.mxu0 0.0
      %3160 = vmatpush1.msra.mxu0 0.0
      %3161 = vmatprep.subr.mxu0 0.0
      %3162 = vmatpush1.msra.mxu0 0.0
      %3163 = vmatprep.subr.mxu0 0.0
      %3164 = vmatpush1.msra.mxu0 0.0
      %3165 = vmatprep.subr.mxu0 0.0
      %3166 = vmatpush1.msra.mxu0 0.0
      %3167 = vmatprep.subr.mxu0 0.0
      %3168 = vmatpush1.msra.mxu0 0.0
      %3169 = vmatprep.subr.mxu0 0.0
      %3170 = vmatpush1.msra.mxu0 0.0
      %3171 = vmatprep.subr.mxu0 0.0
      %3172 = vmatpush1.msra.mxu0 0.0
      %3173 = vmatprep.mubr.f32.mxu0 0.0
      %3174 = vmatmul.mubr.f32.gmra.mrb[0].mxu0 %v3083
      %v3175 = vpop.f32.mrb[0].mxu0
      %v3176 = vadd.f32 %v3107, %v3175
      %v3177 = vpop.f32.mrb[0].mxu0
      %3178 = vdwg.mxu0
      %v3179 = vadd.f32 %v2996, %v3176
      %s3180 = scalar_lea.vmem %s12, 1
      %v3181 = vld [vmem:[%s3180] sm:$0x1]
      %s3182 = scalar_lea.vmem %s13, 1
      %v3183 = vld [vmem:[%s3182] sm:$0x1]
      %v3184 = vsel %vm578, %v3179, 0.0
      %v3185 = vsel %vm590, %v3184, 0.0
      %3186 = vadd.xlane.f32.xlu0 %v3185
      %v3187 = vpop.xlane.xlu0 %3186
      %v3188 = vsel %vm578, 0.0, %v3179
      %v3189 = vsel %vm590, %v3188, 0.0
      %3190 = vadd.xlane.f32.xlu0 %v3189
      %v3191 = vpop.xlane.xlu0 %3190
      %v3192 = vsel %vm578, %v3187, %v3191
      %v3193 = vmul.f32 %v3192, 0.0625
      %v3194 = vsub.f32 %v3179, %v3193
      %v3195 = vmul.f32 %v3194, %v3194
      %v3196 = vsel %vm578, %v3195, 0.0
      %v3197 = vsel %vm590, %v3196, 0.0
      %3198 = vadd.xlane.f32.xlu0 %v3197
      %v3199 = vpop.xlane.xlu0 %3198
      %v3200 = vsel %vm578, 0.0, %v3195
      %v3201 = vsel %vm590, %v3200, 0.0
      %3202 = vadd.xlane.f32.xlu0 %v3201
      %v3203 = vpop.xlane.xlu0 %3202
      %v3204 = vsel %vm578, %v3199, %v3203
      %v3205 = vmul.f32 %v3204, 0.0625
      %v3206 = vadd.f32 %v3205, 1e-05
      %v3207 = vrsqrt.pop %v3206
      %v3208 = vmul.f32 %v3194, %v3207
      %v3210 = vlaneseq
      %v3211 = vshrl.u32 %v3210, 7
      %v3212 = vsub.s32 0, %v3211
      %v3213 = vrot.slane %v3181, %v3212
      %v3215 = vmul.f32 %v3208, %v3213
      %v3217 = vlaneseq
      %v3218 = vshrl.u32 %v3217, 7
      %v3219 = vsub.s32 0, %v3218
      %v3220 = vrot.slane %v3183, %v3219
      %v3222 = vadd.f32 %v3215, %v3220
      %v3223 = vld [vmem:[%s14] sm:$0xff]
      %v3224 = vld [vmem:[%s14 + $0x8] sm:$0xff]
      %v3225 = vld [vmem:[%s14 + $0x10] sm:$0xff]
      %v3226 = vld [vmem:[%s14 + $0x18] sm:$0xff]
      %v3227 = vld [vmem:[%s15] sm:$0x1]
      %v3229 = vlaneseq
      %v3230 = vshrl.u32 %v3229, 7
      %v3231 = vsub.s32 0, %v3230
      %v3232 = vrot.slane %v3227, %v3231
      %v3235 = vsel %vm590, %v3222, 0
      %3237 = vmatprep.subr.mxu0 0.0
      %3238 = vmatpush1.msra.mxu0 %v3223
      %3239 = vmatprep.subr.mxu0 0.0
      %3240 = vmatpush1.msra.mxu0 %v3224
      %3241 = vmatprep.subr.mxu0 0.0
      %3242 = vmatpush1.msra.mxu0 %v3225
      %3243 = vmatprep.subr.mxu0 0.0
      %3244 = vmatpush1.msra.mxu0 %v3226
      %3245 = vmatprep.subr.mxu0 0.0
      %3246 = vmatpush1.msra.mxu0 0.0
      %3247 = vmatprep.subr.mxu0 0.0
      %3248 = vmatpush1.msra.mxu0 0.0
      %3249 = vmatprep.subr.mxu0 0.0
      %3250 = vmatpush1.msra.mxu0 0.0
      %3251 = vmatprep.subr.mxu0 0.0
      %3252 = vmatpush1.msra.mxu0 0.0
      %3253 = vmatprep.subr.mxu0 0.0
      %3254 = vmatpush1.msra.mxu0 0.0
      %3255 = vmatprep.subr.mxu0 0.0
      %3256 = vmatpush1.msra.mxu0 0.0
      %3257 = vmatprep.subr.mxu0 0.0
      %3258 = vmatpush1.msra.mxu0 0.0
      %3259 = vmatprep.subr.mxu0 0.0
      %3260 = vmatpush1.msra.mxu0 0.0
      %3261 = vmatprep.subr.mxu0 0.0
      %3262 = vmatpush1.msra.mxu0 0.0
      %3263 = vmatprep.subr.mxu0 0.0
      %3264 = vmatpush1.msra.mxu0 0.0
      %3265 = vmatprep.subr.mxu0 0.0
      %3266 = vmatpush1.msra.mxu0 0.0
      %3267 = vmatprep.subr.mxu0 0.0
      %3268 = vmatpush1.msra.mxu0 0.0
      %3269 = vmatprep.subr.mxu0 0.0
      %3270 = vmatpush1.msra.mxu0 0.0
      %3271 = vmatprep.subr.mxu0 0.0
      %3272 = vmatpush1.msra.mxu0 0.0
      %3273 = vmatprep.subr.mxu0 0.0
      %3274 = vmatpush1.msra.mxu0 0.0
      %3275 = vmatprep.subr.mxu0 0.0
      %3276 = vmatpush1.msra.mxu0 0.0
      %3277 = vmatprep.subr.mxu0 0.0
      %3278 = vmatpush1.msra.mxu0 0.0
      %3279 = vmatprep.subr.mxu0 0.0
      %3280 = vmatpush1.msra.mxu0 0.0
      %3281 = vmatprep.subr.mxu0 0.0
      %3282 = vmatpush1.msra.mxu0 0.0
      %3283 = vmatprep.subr.mxu0 0.0
      %3284 = vmatpush1.msra.mxu0 0.0
      %3285 = vmatprep.subr.mxu0 0.0
      %3286 = vmatpush1.msra.mxu0 0.0
      %3287 = vmatprep.subr.mxu0 0.0
      %3288 = vmatpush1.msra.mxu0 0.0
      %3289 = vmatprep.subr.mxu0 0.0
      %3290 = vmatpush1.msra.mxu0 0.0
      %3291 = vmatprep.subr.mxu0 0.0
      %3292 = vmatpush1.msra.mxu0 0.0
      %3293 = vmatprep.subr.mxu0 0.0
      %3294 = vmatpush1.msra.mxu0 0.0
      %3295 = vmatprep.subr.mxu0 0.0
      %3296 = vmatpush1.msra.mxu0 0.0
      %3297 = vmatprep.subr.mxu0 0.0
      %3298 = vmatpush1.msra.mxu0 0.0
      %3299 = vmatprep.subr.mxu0 0.0
      %3300 = vmatpush1.msra.mxu0 0.0
      %3301 = vmatprep.mubr.f32.mxu0 0.0
      %3302 = vmatmul.mubr.f32.gmra.mrb[0].mxu0 %v3235
      %v3303 = vpop.f32.mrb[0].mxu0
      %v3304 = vadd.f32 %v3232, %v3303
      %v3305 = vpop.f32.mrb[0].mxu0
      %3306 = vdwg.mxu0
      %v3307 = vmax.f32 %v3304, 0.0
      %v3308 = vld [vmem:[%s16] sm:$0xff]
      %v3309 = vld [vmem:[%s16 + $0x8] sm:$0xff]
      %v3310 = vld [vmem:[#allocation2] sm:$0x1]
      %v3312 = vlaneseq
      %v3313 = vshrl.u32 %v3312, 7
      %v3314 = vsub.s32 0, %v3313
      %v3315 = vrot.slane %v3310, %v3314
      %vm3317 = vcmask 130048
      %v3319 = vsel %vm3317, %v3307, 0
      %3321 = vmatprep.subr.mxu0 0.0
      %3322 = vmatpush1.msra.mxu0 %v3308
      %3323 = vmatprep.subr.mxu0 0.0
      %3324 = vmatpush1.msra.mxu0 %v3309
      %3325 = vmatprep.subr.mxu0 0.0
      %3326 = vmatpush1.msra.mxu0 0.0
      %3327 = vmatprep.subr.mxu0 0.0
      %3328 = vmatpush1.msra.mxu0 0.0
      %3329 = vmatprep.subr.mxu0 0.0
      %3330 = vmatpush1.msra.mxu0 0.0
      %3331 = vmatprep.subr.mxu0 0.0
      %3332 = vmatpush1.msra.mxu0 0.0
      %3333 = vmatprep.subr.mxu0 0.0
      %3334 = vmatpush1.msra.mxu0 0.0
      %3335 = vmatprep.subr.mxu0 0.0
      %3336 = vmatpush1.msra.mxu0 0.0
      %3337 = vmatprep.subr.mxu0 0.0
      %3338 = vmatpush1.msra.mxu0 0.0
      %3339 = vmatprep.subr.mxu0 0.0
      %3340 = vmatpush1.msra.mxu0 0.0
      %3341 = vmatprep.subr.mxu0 0.0
      %3342 = vmatpush1.msra.mxu0 0.0
      %3343 = vmatprep.subr.mxu0 0.0
      %3344 = vmatpush1.msra.mxu0 0.0
      %3345 = vmatprep.subr.mxu0 0.0
      %3346 = vmatpush1.msra.mxu0 0.0
      %3347 = vmatprep.subr.mxu0 0.0
      %3348 = vmatpush1.msra.mxu0 0.0
      %3349 = vmatprep.subr.mxu0 0.0
      %3350 = vmatpush1.msra.mxu0 0.0
      %3351 = vmatprep.subr.mxu0 0.0
      %3352 = vmatpush1.msra.mxu0 0.0
      %3353 = vmatprep.subr.mxu0 0.0
      %3354 = vmatpush1.msra.mxu0 0.0
      %3355 = vmatprep.subr.mxu0 0.0
      %3356 = vmatpush1.msra.mxu0 0.0
      %3357 = vmatprep.subr.mxu0 0.0
      %3358 = vmatpush1.msra.mxu0 0.0
      %3359 = vmatprep.subr.mxu0 0.0
      %3360 = vmatpush1.msra.mxu0 0.0
      %3361 = vmatprep.subr.mxu0 0.0
      %3362 = vmatpush1.msra.mxu0 0.0
      %3363 = vmatprep.subr.mxu0 0.0
      %3364 = vmatpush1.msra.mxu0 0.0
      %3365 = vmatprep.subr.mxu0 0.0
      %3366 = vmatpush1.msra.mxu0 0.0
      %3367 = vmatprep.subr.mxu0 0.0
      %3368 = vmatpush1.msra.mxu0 0.0
      %3369 = vmatprep.subr.mxu0 0.0
      %3370 = vmatpush1.msra.mxu0 0.0
      %3371 = vmatprep.subr.mxu0 0.0
      %3372 = vmatpush1.msra.mxu0 0.0
      %3373 = vmatprep.subr.mxu0 0.0
      %3374 = vmatpush1.msra.mxu0 0.0
      %3375 = vmatprep.subr.mxu0 0.0
      %3376 = vmatpush1.msra.mxu0 0.0
      %3377 = vmatprep.subr.mxu0 0.0
      %3378 = vmatpush1.msra.mxu0 0.0
      %3379 = vmatprep.subr.mxu0 0.0
      %3380 = vmatpush1.msra.mxu0 0.0
      %3381 = vmatprep.subr.mxu0 0.0
      %3382 = vmatpush1.msra.mxu0 0.0
      %3383 = vmatprep.subr.mxu0 0.0
      %3384 = vmatpush1.msra.mxu0 0.0
      %3385 = vmatprep.mubr.f32.mxu0 0.0
      %3386 = vmatmul.mubr.f32.gmra.mrb[0].mxu0 %v3319
      %v3387 = vpop.f32.mrb[0].mxu0
      %v3388 = vadd.f32 %v3315, %v3387
      %v3389 = vpop.f32.mrb[0].mxu0
      %3390 = vdwg.mxu0
      %vm3391 = vcmask 7168
      %3392 = vst.msk [vmem:[%s572] sm:$0xff] %vm3391, %v3388
      %p3393 = scmp.lt.s32.totalorder %s31, 1
      %s3394 = scalar_select %p3393, %s31, 1
      %s3395 = smul.addr %s3394, 8
      %s3396 = scalar_lea.vmem %s18, %s3395
      // Predicated region
      $region93: #{multibert_forward.1} parent=91 // pred_check
        %p3397 = pneg %p432
      $region94: #{multibert_forward.1} parent=91 // pred_check_branch
        %3399 = sbr.rel (%p3397) target = $region96
      $region95: #{multibert_forward.1} parent=91 // pred_region
        _
      $region96: #{multibert_forward.1} parent=91 // pred_fallthru
        _
    $region92: #{multibert_forward.1} parent=5 // pred_fallthru
      _
    %p3400 = scmp.le.s32.totalorder 2, %s26
    // Predicated region
    $region97: #{multibert_forward.1} parent=5 // pred_check
      %p3401 = pneg %p3400
    $region98: #{multibert_forward.1} parent=5 // pred_check_branch
      %3403 = sbr.rel (%p3401) target = $region100
    $region99: #{multibert_forward.1} parent=5 // pred_region
      %s3404 = ssub.s32 %s26, 2
      // Predicated region
      $region101: #{multibert_forward.1} parent=99 // pred_check
        %p3405 = pneg %p438
      $region102: #{multibert_forward.1} parent=99 // pred_check_branch
        %3407 = sbr.rel (%p3405) target = $region104
      $region103: #{multibert_forward.1} parent=99 // pred_region
        %p3408 = scmp.lt.s32.totalorder %s32, 1
        %s3409 = scalar_select %p3408, %s32, 1
        %s3410 = smul.addr %s3409, 8
        %s3411 = scalar_lea.vmem %s18, %s3410
      $region104: #{multibert_forward.1} parent=99 // pred_fallthru
        _
    $region100: #{multibert_forward.1} parent=5 // pred_fallthru
      _
  $region6: #{multibert_forward.1} parent=0 // loop_footer
    %s30 = sadd.s32 1, %s26
  $region7: #{multibert_forward.1} parent=0 // loop_footer_branch
    %25 = sbr.rel target = $region3
  $region8: #{multibert_forward.1} parent=0 // loop_exit
    _

</llo_original>
